<compile_context>
chip_gen: v5e
topology: v5e:2x2
jax: 0.10.0
libtpu: 0.0.40
codegen_flags: <defaults>
</compile_context>

<pallas_src>
import functools

import jax
import jax.numpy as jnp
from jax import lax
from jax.experimental import pallas as pl
from jax.experimental.pallas import tpu as pltpu

N_NODES = 5
N_OPS = 2                                    # [none, skip_connect]
N_EDGES = N_NODES * (N_NODES + 1) // 2       # 15 edges (single input state per cell)


def _cell_coeffs(w_ref):
    """Scalar node coefficients of a DARTS cell with ops [none, skip_connect].

    With this op set, node_k = coeff_k * s0 where
      coeff_k = w[e_k0, 1] + sum_{j<k} w[e_kj, 1] * coeff_j
    ('none' contributes zero, so only the skip weight w[:, 1] appears.)
    Pure SMEM scalar math, unrolled at trace time.
    """
    coeffs = []
    e = 0
    for k in range(N_NODES):
        acc = w_ref[e, 1]
        e += 1
        for j in range(k):
            acc = acc + w_ref[e, 1] * coeffs[j]
            e += 1
        coeffs.append(acc)
    return coeffs


def _search_cnn_kernel(wn_ref, wr_ref, x_ref, w1_ref, w2_ref, out_ref,
                       xpad_ref, hpad_ref, *, H, W, C, C_mid):
    # ---- cells: collapse to 5 scalar coefficients ---------------------------
    # normal cell:  node_k = alpha_k * x,  n_out = (sum_k alpha_k) * x = beta * x
    alphas = _cell_coeffs(wn_ref)
    beta = alphas[0]
    for k in range(1, N_NODES):
        beta = beta + alphas[k]
    # reduce cell:  node_k = gamma_k * n_out  ->  concat slice k = (gamma_k*beta) * x
    gammas = _cell_coeffs(wr_ref)
    c = [gammas[k] * beta for k in range(N_NODES)]

    # ---- stage zero-padded x once for the 3x3 windows ------------------------
    x = x_ref[0].astype(jnp.float32)                       # (H, W, C)
    xpad_ref[...] = jnp.zeros_like(xpad_ref)
    xpad_ref[1:H + 1, 1:W + 1, :] = x

    # ---- conv_1: 3x3, pad 1, 5*C -> C_mid, no bias ---------------------------
    # conv_1(concat_k(c_k * x)) == sum_t window_t(x) @ (sum_k c_k * w1[t, k]),
    # so the cell coefficients are folded into the weight (f32 fold, bf16 MXU).
    acc = jnp.zeros((H * W, C_mid), jnp.float32)
    for t in range(9):
        dh, dw = divmod(t, 3)
        w_eff = c[0] * w1_ref[t, 0]
        for k in range(1, N_NODES):
            w_eff = w_eff + c[k] * w1_ref[t, k]            # (C, C_mid) f32
        win = xpad_ref[dh:dh + H, dw:dw + W, :].reshape(H * W, C)
        acc = acc + jnp.dot(win.astype(jnp.bfloat16), w_eff.astype(jnp.bfloat16),
                            preferred_element_type=jnp.float32)

    # ---- conv_2: 3x3, pad 1, C_mid -> 1, no bias (VPU + lane reduce) ---------
    hpad_ref[...] = jnp.zeros_like(hpad_ref)
    hpad_ref[1:H + 1, 1:W + 1, :] = acc.reshape(H, W, C_mid)
    conv2 = jnp.zeros((H, W), jnp.float32)
    for t in range(9):
        dh, dw = divmod(t, 3)
        hwin = hpad_ref[dh:dh + H, dw:dw + W, :]           # (H, W, C_mid)
        conv2 = conv2 + jnp.sum(hwin * w2_ref[t], axis=-1)

    # ---- residual: out = conv_2(...) + x (broadcast over channels) -----------
    out_ref[0] = (x + conv2[:, :, None]).astype(out_ref.dtype)


def search_cnn_forward(x, weights_normal, weights_reduce, conv1_w, conv2_w):
    """x: (N, H, W, C) NHWC; conv1_w: HWIO (3,3,5*C,128); conv2_w: HWIO (3,3,128,1)."""
    N, H, W, C = x.shape
    C_in1, C_mid = conv1_w.shape[2], conv1_w.shape[3]
    assert C_in1 == N_NODES * C and conv2_w.shape[2] == C_mid

    # (3,3,5*C,C_mid) -> (9, 5, C, C_mid): per-tap, per-node weight slices (f32; folded in-kernel).
    w1 = conv1_w.reshape(9, N_NODES, C, C_mid).astype(jnp.float32)
    # (3,3,C_mid,1) -> (9, 1, 1, C_mid): per-tap broadcastable vector for the VPU path.
    w2 = conv2_w.reshape(9, C_mid)[:, None, None, :].astype(jnp.float32)

    kernel = functools.partial(_search_cnn_kernel, H=H, W=W, C=C, C_mid=C_mid)
    return pl.pallas_call(
        kernel,
        out_shape=jax.ShapeDtypeStruct((N, H, W, C), x.dtype),
        grid_spec=pltpu.PrefetchScalarGridSpec(
            num_scalar_prefetch=0,
            grid=(N,),
            in_specs=[
                pl.BlockSpec(memory_space=pltpu.MemorySpace.SMEM),        # weights_normal
                pl.BlockSpec(memory_space=pltpu.MemorySpace.SMEM),        # weights_reduce
                pl.BlockSpec((1, H, W, C), lambda n: (n, 0, 0, 0)),       # x (per batch)
                pl.BlockSpec((9, N_NODES, C, C_mid), lambda n: (0, 0, 0, 0)),  # conv_1 w
                pl.BlockSpec((9, 1, 1, C_mid), lambda n: (0, 0, 0, 0)),   # conv_2 w
            ],
            out_specs=pl.BlockSpec((1, H, W, C), lambda n: (n, 0, 0, 0)),
            scratch_shapes=[
                pltpu.VMEM((H + 2, W + 2, C), jnp.float32),               # zero-padded x
                pltpu.VMEM((H + 2, W + 2, C_mid), jnp.float32),           # zero-padded conv_1 out
            ],
        ),
        compiler_params=pltpu.CompilerParams(dimension_semantics=("parallel",)),
    )(weights_normal, weights_reduce, x, w1, w2)


def _reference_forward(x, weights_normal, weights_reduce, conv1_w, conv2_w):
    """Pure-JAX f32 reference of the same (inferred) forward pass (literal cell math)."""
    def cell_nodes(w, s0):
        nodes, e = [], 0
        for k in range(N_NODES):
            acc = w[e, 1] * s0
            e += 1
            for j in range(k):
                acc = acc + w[e, 1] * nodes[j]
                e += 1
            nodes.append(acc)
        return nodes

    n_nodes = cell_nodes(weights_normal, x)
    n_out = n_nodes[0]
    for k in range(1, N_NODES):
        n_out = n_out + n_nodes[k]
    r_nodes = cell_nodes(weights_reduce, n_out)
    s1 = jnp.concatenate(r_nodes, axis=-1)                  # (N, H, W, 5*C)

    dn = ('NHWC', 'HWIO', 'NHWC')
    y = lax.conv_general_dilated(s1, conv1_w, (1, 1), 'SAME', dimension_numbers=dn,
                                 precision=lax.Precision.HIGHEST)
    y = lax.conv_general_dilated(y, conv2_w, (1, 1), 'SAME', dimension_numbers=dn,
                                 precision=lax.Precision.HIGHEST)
    return y + x                                            # broadcast over channels


if __name__ == "__main__":
    key = jax.random.PRNGKey(0)
    k1, k2, k3, k4, k5 = jax.random.split(key, 5)

    N, H, W = 2, 8, 8
    C = 64      # reduce-cell concat of 5 nodes -> 320 = conv_1 Cin
    C_MID = 128

    x = jax.random.normal(k1, (N, H, W, C), dtype=jnp.float32)
    weights_normal = jax.nn.softmax(
        jax.random.normal(k2, (N_EDGES, N_OPS), dtype=jnp.float32), axis=-1)
    weights_reduce = jax.nn.softmax(
        jax.random.normal(k3, (N_EDGES, N_OPS), dtype=jnp.float32), axis=-1)

    # deterministic conv parameters in HWIO layout
    conv1_w = jax.random.normal(k4, (3, 3, N_NODES * C, C_MID), dtype=jnp.float32) * 0.02
    conv2_w = jax.random.normal(k5, (3, 3, C_MID, 1), dtype=jnp.float32) * 0.02

    out = search_cnn_forward(x, weights_normal, weights_reduce, conv1_w, conv2_w)
    out = jax.block_until_ready(out)

    assert out.shape == (N, H, W, C), out.shape
    assert bool(jnp.all(jnp.isfinite(out)))

    # Correctness vs. f32 reference (only deviation: bf16 MXU operands in conv_1).
    ref = _reference_forward(x, weights_normal, weights_reduce, conv1_w, conv2_w)
    rel_err = float(jnp.max(jnp.abs(out - ref)) / (jnp.max(jnp.abs(ref)) + 1e-6))
    assert rel_err < 2e-2, f"relative error vs f32 reference too large: {rel_err}"

    print("KERNEL_OK")
</pallas_src>

<mosaic_0001>
module attributes {stable_mosaic.version = 11 : i64} {
  func.func @_search_cnn_kernel(%arg0: i32, %arg1: memref<15x2xf32, #tpu.memory_space<smem>>, %arg2: memref<15x2xf32, #tpu.memory_space<smem>>, %arg3: memref<1x8x8x64xf32, #tpu.memory_space<vmem>>, %arg4: memref<9x5x64x128xf32, #tpu.memory_space<vmem>>, %arg5: memref<9x1x1x128xf32, #tpu.memory_space<vmem>>, %arg6: memref<1x8x8x64xf32, #tpu.memory_space<vmem>>, %arg7: memref<10x10x64xf32, #tpu.memory_space<vmem>>, %arg8: memref<10x10x128xf32, #tpu.memory_space<vmem>>) attributes {dimension_semantics = [#tpu.dimension_semantics<parallel>], iteration_bounds = array<i64: 2>, scalar_prefetch = 0 : i64, scratch_operands = 2 : i64, tpu.core_type = #tpu.core_type<tc>, window_params = [{transform_indices = @transform_0, window_bounds = array<i64: 15, 2>}, {transform_indices = @transform_1, window_bounds = array<i64: 15, 2>}, {transform_indices = @transform_2, window_bounds = array<i64: 1, 8, 8, 64>}, {pipeline_mode = #tpu.pipeline_mode<synchronous>, transform_indices = @transform_3, window_bounds = array<i64: 9, 5, 64, 128>}, {pipeline_mode = #tpu.pipeline_mode<synchronous>, transform_indices = @transform_4, window_bounds = array<i64: 9, 1, 1, 128>}, {transform_indices = @transform_5, window_bounds = array<i64: 1, 8, 8, 64>}]} {
    %c0 = arith.constant 0 : index
    %c1 = arith.constant 1 : index
    %0 = memref.load %arg1[%c0, %c1] : memref<15x2xf32, #tpu.memory_space<smem>>
    %c1_0 = arith.constant 1 : index
    %c1_1 = arith.constant 1 : index
    %1 = memref.load %arg1[%c1_0, %c1_1] : memref<15x2xf32, #tpu.memory_space<smem>>
    %c2 = arith.constant 2 : index
    %c1_2 = arith.constant 1 : index
    %2 = memref.load %arg1[%c2, %c1_2] : memref<15x2xf32, #tpu.memory_space<smem>>
    %3 = arith.mulf %2, %0 : f32
    %4 = arith.addf %1, %3 : f32
    %c3 = arith.constant 3 : index
    %c1_3 = arith.constant 1 : index
    %5 = memref.load %arg1[%c3, %c1_3] : memref<15x2xf32, #tpu.memory_space<smem>>
    %c4 = arith.constant 4 : index
    %c1_4 = arith.constant 1 : index
    %6 = memref.load %arg1[%c4, %c1_4] : memref<15x2xf32, #tpu.memory_space<smem>>
    %7 = arith.mulf %6, %0 : f32
    %8 = arith.addf %5, %7 : f32
    %c5 = arith.constant 5 : index
    %c1_5 = arith.constant 1 : index
    %9 = memref.load %arg1[%c5, %c1_5] : memref<15x2xf32, #tpu.memory_space<smem>>
    %10 = arith.mulf %9, %4 : f32
    %11 = arith.addf %8, %10 : f32
    %c6 = arith.constant 6 : index
    %c1_6 = arith.constant 1 : index
    %12 = memref.load %arg1[%c6, %c1_6] : memref<15x2xf32, #tpu.memory_space<smem>>
    %c7 = arith.constant 7 : index
    %c1_7 = arith.constant 1 : index
    %13 = memref.load %arg1[%c7, %c1_7] : memref<15x2xf32, #tpu.memory_space<smem>>
    %14 = arith.mulf %13, %0 : f32
    %15 = arith.addf %12, %14 : f32
    %c8 = arith.constant 8 : index
    %c1_8 = arith.constant 1 : index
    %16 = memref.load %arg1[%c8, %c1_8] : memref<15x2xf32, #tpu.memory_space<smem>>
    %17 = arith.mulf %16, %4 : f32
    %18 = arith.addf %15, %17 : f32
    %c9 = arith.constant 9 : index
    %c1_9 = arith.constant 1 : index
    %19 = memref.load %arg1[%c9, %c1_9] : memref<15x2xf32, #tpu.memory_space<smem>>
    %20 = arith.mulf %19, %11 : f32
    %21 = arith.addf %18, %20 : f32
    %c10 = arith.constant 10 : index
    %c1_10 = arith.constant 1 : index
    %22 = memref.load %arg1[%c10, %c1_10] : memref<15x2xf32, #tpu.memory_space<smem>>
    %c11 = arith.constant 11 : index
    %c1_11 = arith.constant 1 : index
    %23 = memref.load %arg1[%c11, %c1_11] : memref<15x2xf32, #tpu.memory_space<smem>>
    %24 = arith.mulf %23, %0 : f32
    %25 = arith.addf %22, %24 : f32
    %c12 = arith.constant 12 : index
    %c1_12 = arith.constant 1 : index
    %26 = memref.load %arg1[%c12, %c1_12] : memref<15x2xf32, #tpu.memory_space<smem>>
    %27 = arith.mulf %26, %4 : f32
    %28 = arith.addf %25, %27 : f32
    %c13 = arith.constant 13 : index
    %c1_13 = arith.constant 1 : index
    %29 = memref.load %arg1[%c13, %c1_13] : memref<15x2xf32, #tpu.memory_space<smem>>
    %30 = arith.mulf %29, %11 : f32
    %31 = arith.addf %28, %30 : f32
    %c14 = arith.constant 14 : index
    %c1_14 = arith.constant 1 : index
    %32 = memref.load %arg1[%c14, %c1_14] : memref<15x2xf32, #tpu.memory_space<smem>>
    %33 = arith.mulf %32, %21 : f32
    %34 = arith.addf %31, %33 : f32
    %35 = arith.addf %0, %4 : f32
    %36 = arith.addf %35, %11 : f32
    %37 = arith.addf %36, %21 : f32
    %38 = arith.addf %37, %34 : f32
    %c0_15 = arith.constant 0 : index
    %c1_16 = arith.constant 1 : index
    %39 = memref.load %arg2[%c0_15, %c1_16] : memref<15x2xf32, #tpu.memory_space<smem>>
    %c1_17 = arith.constant 1 : index
    %c1_18 = arith.constant 1 : index
    %40 = memref.load %arg2[%c1_17, %c1_18] : memref<15x2xf32, #tpu.memory_space<smem>>
    %c2_19 = arith.constant 2 : index
    %c1_20 = arith.constant 1 : index
    %41 = memref.load %arg2[%c2_19, %c1_20] : memref<15x2xf32, #tpu.memory_space<smem>>
    %42 = arith.mulf %41, %39 : f32
    %43 = arith.addf %40, %42 : f32
    %c3_21 = arith.constant 3 : index
    %c1_22 = arith.constant 1 : index
    %44 = memref.load %arg2[%c3_21, %c1_22] : memref<15x2xf32, #tpu.memory_space<smem>>
    %c4_23 = arith.constant 4 : index
    %c1_24 = arith.constant 1 : index
    %45 = memref.load %arg2[%c4_23, %c1_24] : memref<15x2xf32, #tpu.memory_space<smem>>
    %46 = arith.mulf %45, %39 : f32
    %47 = arith.addf %44, %46 : f32
    %c5_25 = arith.constant 5 : index
    %c1_26 = arith.constant 1 : index
    %48 = memref.load %arg2[%c5_25, %c1_26] : memref<15x2xf32, #tpu.memory_space<smem>>
    %49 = arith.mulf %48, %43 : f32
    %50 = arith.addf %47, %49 : f32
    %c6_27 = arith.constant 6 : index
    %c1_28 = arith.constant 1 : index
    %51 = memref.load %arg2[%c6_27, %c1_28] : memref<15x2xf32, #tpu.memory_space<smem>>
    %c7_29 = arith.constant 7 : index
    %c1_30 = arith.constant 1 : index
    %52 = memref.load %arg2[%c7_29, %c1_30] : memref<15x2xf32, #tpu.memory_space<smem>>
    %53 = arith.mulf %52, %39 : f32
    %54 = arith.addf %51, %53 : f32
    %c8_31 = arith.constant 8 : index
    %c1_32 = arith.constant 1 : index
    %55 = memref.load %arg2[%c8_31, %c1_32] : memref<15x2xf32, #tpu.memory_space<smem>>
    %56 = arith.mulf %55, %43 : f32
    %57 = arith.addf %54, %56 : f32
    %c9_33 = arith.constant 9 : index
    %c1_34 = arith.constant 1 : index
    %58 = memref.load %arg2[%c9_33, %c1_34] : memref<15x2xf32, #tpu.memory_space<smem>>
    %59 = arith.mulf %58, %50 : f32
    %60 = arith.addf %57, %59 : f32
    %c10_35 = arith.constant 10 : index
    %c1_36 = arith.constant 1 : index
    %61 = memref.load %arg2[%c10_35, %c1_36] : memref<15x2xf32, #tpu.memory_space<smem>>
    %c11_37 = arith.constant 11 : index
    %c1_38 = arith.constant 1 : index
    %62 = memref.load %arg2[%c11_37, %c1_38] : memref<15x2xf32, #tpu.memory_space<smem>>
    %63 = arith.mulf %62, %39 : f32
    %64 = arith.addf %61, %63 : f32
    %c12_39 = arith.constant 12 : index
    %c1_40 = arith.constant 1 : index
    %65 = memref.load %arg2[%c12_39, %c1_40] : memref<15x2xf32, #tpu.memory_space<smem>>
    %66 = arith.mulf %65, %43 : f32
    %67 = arith.addf %64, %66 : f32
    %c13_41 = arith.constant 13 : index
    %c1_42 = arith.constant 1 : index
    %68 = memref.load %arg2[%c13_41, %c1_42] : memref<15x2xf32, #tpu.memory_space<smem>>
    %69 = arith.mulf %68, %50 : f32
    %70 = arith.addf %67, %69 : f32
    %c14_43 = arith.constant 14 : index
    %c1_44 = arith.constant 1 : index
    %71 = memref.load %arg2[%c14_43, %c1_44] : memref<15x2xf32, #tpu.memory_space<smem>>
    %72 = arith.mulf %71, %60 : f32
    %73 = arith.addf %70, %72 : f32
    %74 = arith.mulf %39, %38 : f32
    %75 = arith.mulf %43, %38 : f32
    %76 = arith.mulf %50, %38 : f32
    %77 = arith.mulf %60, %38 : f32
    %78 = arith.mulf %73, %38 : f32
    %c0_45 = arith.constant 0 : index
    %c0_46 = arith.constant 0 : index
    %c0_47 = arith.constant 0 : index
    %c0_48 = arith.constant 0 : index
    %79 = vector.load %arg3[%c0_45, %c0_46, %c0_47, %c0_48] : memref<1x8x8x64xf32, #tpu.memory_space<vmem>>, vector<1x8x8x64xf32>
    %80 = vector.shape_cast %79 : vector<1x8x8x64xf32> to vector<8x8x64xf32>
    %cst = arith.constant 0.000000e+00 : f32
    %81 = vector.broadcast %cst : f32 to vector<10x10x64xf32>
    %c0_49 = arith.constant 0 : index
    %c0_50 = arith.constant 0 : index
    %c0_51 = arith.constant 0 : index
    %82 = vector.load %arg7[%c0_49, %c0_50, %c0_51] : memref<10x10x64xf32, #tpu.memory_space<vmem>>, vector<10x10x64xf32>
    tpu.vector_store %arg7[%c0_49, %c0_50, %c0_51], %81 {strides = array<i32>} : memref<10x10x64xf32, #tpu.memory_space<vmem>>, vector<10x10x64xf32>,
    %c1_52 = arith.constant 1 : index
    %c1_53 = arith.constant 1 : index
    %c0_54 = arith.constant 0 : index
    %83 = vector.load %arg7[%c1_52, %c1_53, %c0_54] : memref<10x10x64xf32, #tpu.memory_space<vmem>>, vector<8x8x64xf32>
    tpu.vector_store %arg7[%c1_52, %c1_53, %c0_54], %80 {strides = array<i32>} : memref<10x10x64xf32, #tpu.memory_space<vmem>>, vector<8x8x64xf32>,
    %cst_55 = arith.constant 0.000000e+00 : f32
    %84 = vector.broadcast %cst_55 : f32 to vector<64x128xf32>
    %c0_56 = arith.constant 0 : index
    %c0_57 = arith.constant 0 : index
    %c0_58 = arith.constant 0 : index
    %c0_59 = arith.constant 0 : index
    %85 = vector.load %arg4[%c0_56, %c0_57, %c0_58, %c0_59] : memref<9x5x64x128xf32, #tpu.memory_space<vmem>>, vector<1x1x64x128xf32>
    %86 = vector.shape_cast %85 : vector<1x1x64x128xf32> to vector<64x128xf32>
    %87 = vector.broadcast %74 : f32 to vector<64x128xf32>
    %88 = arith.mulf %87, %86 : vector<64x128xf32>
    %c0_60 = arith.constant 0 : index
    %c1_61 = arith.constant 1 : index
    %c0_62 = arith.constant 0 : index
    %c0_63 = arith.constant 0 : index
    %89 = vector.load %arg4[%c0_60, %c1_61, %c0_62, %c0_63] : memref<9x5x64x128xf32, #tpu.memory_space<vmem>>, vector<1x1x64x128xf32>
    %90 = vector.shape_cast %89 : vector<1x1x64x128xf32> to vector<64x128xf32>
    %91 = vector.broadcast %75 : f32 to vector<64x128xf32>
    %92 = arith.mulf %91, %90 : vector<64x128xf32>
    %93 = arith.addf %88, %92 : vector<64x128xf32>
    %c0_64 = arith.constant 0 : index
    %c2_65 = arith.constant 2 : index
    %c0_66 = arith.constant 0 : index
    %c0_67 = arith.constant 0 : index
    %94 = vector.load %arg4[%c0_64, %c2_65, %c0_66, %c0_67] : memref<9x5x64x128xf32, #tpu.memory_space<vmem>>, vector<1x1x64x128xf32>
    %95 = vector.shape_cast %94 : vector<1x1x64x128xf32> to vector<64x128xf32>
    %96 = vector.broadcast %76 : f32 to vector<64x128xf32>
    %97 = arith.mulf %96, %95 : vector<64x128xf32>
    %98 = arith.addf %93, %97 : vector<64x128xf32>
    %c0_68 = arith.constant 0 : index
    %c3_69 = arith.constant 3 : index
    %c0_70 = arith.constant 0 : index
    %c0_71 = arith.constant 0 : index
    %99 = vector.load %arg4[%c0_68, %c3_69, %c0_70, %c0_71] : memref<9x5x64x128xf32, #tpu.memory_space<vmem>>, vector<1x1x64x128xf32>
    %100 = vector.shape_cast %99 : vector<1x1x64x128xf32> to vector<64x128xf32>
    %101 = vector.broadcast %77 : f32 to vector<64x128xf32>
    %102 = arith.mulf %101, %100 : vector<64x128xf32>
    %103 = arith.addf %98, %102 : vector<64x128xf32>
    %c0_72 = arith.constant 0 : index
    %c4_73 = arith.constant 4 : index
    %c0_74 = arith.constant 0 : index
    %c0_75 = arith.constant 0 : index
    %104 = vector.load %arg4[%c0_72, %c4_73, %c0_74, %c0_75] : memref<9x5x64x128xf32, #tpu.memory_space<vmem>>, vector<1x1x64x128xf32>
    %105 = vector.shape_cast %104 : vector<1x1x64x128xf32> to vector<64x128xf32>
    %106 = vector.broadcast %78 : f32 to vector<64x128xf32>
    %107 = arith.mulf %106, %105 : vector<64x128xf32>
    %108 = arith.addf %103, %107 : vector<64x128xf32>
    %c0_76 = arith.constant 0 : index
    %c0_77 = arith.constant 0 : index
    %c0_78 = arith.constant 0 : index
    %109 = vector.load %arg7[%c0_76, %c0_77, %c0_78] : memref<10x10x64xf32, #tpu.memory_space<vmem>>, vector<8x8x64xf32>
    %110 = vector.shape_cast %109 : vector<8x8x64xf32> to vector<64x64xf32>
    %111 = arith.truncf %110 : vector<64x64xf32> to vector<64x64xbf16>
    %112 = arith.truncf %108 : vector<64x128xf32> to vector<64x128xbf16>
    %cst_79 = arith.constant dense<0.000000e+00> : vector<64x128xf32>
    %113 = tpu.matmul %111, %112, %cst_79 {dimension_numbers = #tpu.dot_dimension_numbers<[1], [0], [0], [1], [0, 0, 1, 1], [], []>} : vector<64x64xbf16>, vector<64x128xbf16>, vector<64x128xf32> -> vector<64x128xf32>
    %114 = arith.addf %84, %113 : vector<64x128xf32>
    %c1_80 = arith.constant 1 : index
    %c0_81 = arith.constant 0 : index
    %c0_82 = arith.constant 0 : index
    %c0_83 = arith.constant 0 : index
    %115 = vector.load %arg4[%c1_80, %c0_81, %c0_82, %c0_83] : memref<9x5x64x128xf32, #tpu.memory_space<vmem>>, vector<1x1x64x128xf32>
    %116 = vector.shape_cast %115 : vector<1x1x64x128xf32> to vector<64x128xf32>
    %117 = vector.broadcast %74 : f32 to vector<64x128xf32>
    %118 = arith.mulf %117, %116 : vector<64x128xf32>
    %c1_84 = arith.constant 1 : index
    %c1_85 = arith.constant 1 : index
    %c0_86 = arith.constant 0 : index
    %c0_87 = arith.constant 0 : index
    %119 = vector.load %arg4[%c1_84, %c1_85, %c0_86, %c0_87] : memref<9x5x64x128xf32, #tpu.memory_space<vmem>>, vector<1x1x64x128xf32>
    %120 = vector.shape_cast %119 : vector<1x1x64x128xf32> to vector<64x128xf32>
    %121 = vector.broadcast %75 : f32 to vector<64x128xf32>
    %122 = arith.mulf %121, %120 : vector<64x128xf32>
    %123 = arith.addf %118, %122 : vector<64x128xf32>
    %c1_88 = arith.constant 1 : index
    %c2_89 = arith.constant 2 : index
    %c0_90 = arith.constant 0 : index
    %c0_91 = arith.constant 0 : index
    %124 = vector.load %arg4[%c1_88, %c2_89, %c0_90, %c0_91] : memref<9x5x64x128xf32, #tpu.memory_space<vmem>>, vector<1x1x64x128xf32>
    %125 = vector.shape_cast %124 : vector<1x1x64x128xf32> to vector<64x128xf32>
    %126 = vector.broadcast %76 : f32 to vector<64x128xf32>
    %127 = arith.mulf %126, %125 : vector<64x128xf32>
    %128 = arith.addf %123, %127 : vector<64x128xf32>
    %c1_92 = arith.constant 1 : index
    %c3_93 = arith.constant 3 : index
    %c0_94 = arith.constant 0 : index
    %c0_95 = arith.constant 0 : index
    %129 = vector.load %arg4[%c1_92, %c3_93, %c0_94, %c0_95] : memref<9x5x64x128xf32, #tpu.memory_space<vmem>>, vector<1x1x64x128xf32>
    %130 = vector.shape_cast %129 : vector<1x1x64x128xf32> to vector<64x128xf32>
    %131 = vector.broadcast %77 : f32 to vector<64x128xf32>
    %132 = arith.mulf %131, %130 : vector<64x128xf32>
    %133 = arith.addf %128, %132 : vector<64x128xf32>
    %c1_96 = arith.constant 1 : index
    %c4_97 = arith.constant 4 : index
    %c0_98 = arith.constant 0 : index
    %c0_99 = arith.constant 0 : index
    %134 = vector.load %arg4[%c1_96, %c4_97, %c0_98, %c0_99] : memref<9x5x64x128xf32, #tpu.memory_space<vmem>>, vector<1x1x64x128xf32>
    %135 = vector.shape_cast %134 : vector<1x1x64x128xf32> to vector<64x128xf32>
    %136 = vector.broadcast %78 : f32 to vector<64x128xf32>
    %137 = arith.mulf %136, %135 : vector<64x128xf32>
    %138 = arith.addf %133, %137 : vector<64x128xf32>
    %c0_100 = arith.constant 0 : index
    %c1_101 = arith.constant 1 : index
    %c0_102 = arith.constant 0 : index
    %139 = vector.load %arg7[%c0_100, %c1_101, %c0_102] : memref<10x10x64xf32, #tpu.memory_space<vmem>>, vector<8x8x64xf32>
    %140 = vector.shape_cast %139 : vector<8x8x64xf32> to vector<64x64xf32>
    %141 = arith.truncf %140 : vector<64x64xf32> to vector<64x64xbf16>
    %142 = arith.truncf %138 : vector<64x128xf32> to vector<64x128xbf16>
    %cst_103 = arith.constant dense<0.000000e+00> : vector<64x128xf32>
    %143 = tpu.matmul %141, %142, %cst_103 {dimension_numbers = #tpu.dot_dimension_numbers<[1], [0], [0], [1], [0, 0, 1, 1], [], []>} : vector<64x64xbf16>, vector<64x128xbf16>, vector<64x128xf32> -> vector<64x128xf32>
    %144 = arith.addf %114, %143 : vector<64x128xf32>
    %c2_104 = arith.constant 2 : index
    %c0_105 = arith.constant 0 : index
    %c0_106 = arith.constant 0 : index
    %c0_107 = arith.constant 0 : index
    %145 = vector.load %arg4[%c2_104, %c0_105, %c0_106, %c0_107] : memref<9x5x64x128xf32, #tpu.memory_space<vmem>>, vector<1x1x64x128xf32>
    %146 = vector.shape_cast %145 : vector<1x1x64x128xf32> to vector<64x128xf32>
    %147 = vector.broadcast %74 : f32 to vector<64x128xf32>
    %148 = arith.mulf %147, %146 : vector<64x128xf32>
    %c2_108 = arith.constant 2 : index
    %c1_109 = arith.constant 1 : index
    %c0_110 = arith.constant 0 : index
    %c0_111 = arith.constant 0 : index
    %149 = vector.load %arg4[%c2_108, %c1_109, %c0_110, %c0_111] : memref<9x5x64x128xf32, #tpu.memory_space<vmem>>, vector<1x1x64x128xf32>
    %150 = vector.shape_cast %149 : vector<1x1x64x128xf32> to vector<64x128xf32>
    %151 = vector.broadcast %75 : f32 to vector<64x128xf32>
    %152 = arith.mulf %151, %150 : vector<64x128xf32>
    %153 = arith.addf %148, %152 : vector<64x128xf32>
    %c2_112 = arith.constant 2 : index
    %c2_113 = arith.constant 2 : index
    %c0_114 = arith.constant 0 : index
    %c0_115 = arith.constant 0 : index
    %154 = vector.load %arg4[%c2_112, %c2_113, %c0_114, %c0_115] : memref<9x5x64x128xf32, #tpu.memory_space<vmem>>, vector<1x1x64x128xf32>
    %155 = vector.shape_cast %154 : vector<1x1x64x128xf32> to vector<64x128xf32>
    %156 = vector.broadcast %76 : f32 to vector<64x128xf32>
    %157 = arith.mulf %156, %155 : vector<64x128xf32>
    %158 = arith.addf %153, %157 : vector<64x128xf32>
    %c2_116 = arith.constant 2 : index
    %c3_117 = arith.constant 3 : index
    %c0_118 = arith.constant 0 : index
    %c0_119 = arith.constant 0 : index
    %159 = vector.load %arg4[%c2_116, %c3_117, %c0_118, %c0_119] : memref<9x5x64x128xf32, #tpu.memory_space<vmem>>, vector<1x1x64x128xf32>
    %160 = vector.shape_cast %159 : vector<1x1x64x128xf32> to vector<64x128xf32>
    %161 = vector.broadcast %77 : f32 to vector<64x128xf32>
    %162 = arith.mulf %161, %160 : vector<64x128xf32>
    %163 = arith.addf %158, %162 : vector<64x128xf32>
    %c2_120 = arith.constant 2 : index
    %c4_121 = arith.constant 4 : index
    %c0_122 = arith.constant 0 : index
    %c0_123 = arith.constant 0 : index
    %164 = vector.load %arg4[%c2_120, %c4_121, %c0_122, %c0_123] : memref<9x5x64x128xf32, #tpu.memory_space<vmem>>, vector<1x1x64x128xf32>
    %165 = vector.shape_cast %164 : vector<1x1x64x128xf32> to vector<64x128xf32>
    %166 = vector.broadcast %78 : f32 to vector<64x128xf32>
    %167 = arith.mulf %166, %165 : vector<64x128xf32>
    %168 = arith.addf %163, %167 : vector<64x128xf32>
    %c0_124 = arith.constant 0 : index
    %c2_125 = arith.constant 2 : index
    %c0_126 = arith.constant 0 : index
    %169 = vector.load %arg7[%c0_124, %c2_125, %c0_126] : memref<10x10x64xf32, #tpu.memory_space<vmem>>, vector<8x8x64xf32>
    %170 = vector.shape_cast %169 : vector<8x8x64xf32> to vector<64x64xf32>
    %171 = arith.truncf %170 : vector<64x64xf32> to vector<64x64xbf16>
    %172 = arith.truncf %168 : vector<64x128xf32> to vector<64x128xbf16>
    %cst_127 = arith.constant dense<0.000000e+00> : vector<64x128xf32>
    %173 = tpu.matmul %171, %172, %cst_127 {dimension_numbers = #tpu.dot_dimension_numbers<[1], [0], [0], [1], [0, 0, 1, 1], [], []>} : vector<64x64xbf16>, vector<64x128xbf16>, vector<64x128xf32> -> vector<64x128xf32>
    %174 = arith.addf %144, %173 : vector<64x128xf32>
    %c3_128 = arith.constant 3 : index
    %c0_129 = arith.constant 0 : index
    %c0_130 = arith.constant 0 : index
    %c0_131 = arith.constant 0 : index
    %175 = vector.load %arg4[%c3_128, %c0_129, %c0_130, %c0_131] : memref<9x5x64x128xf32, #tpu.memory_space<vmem>>, vector<1x1x64x128xf32>
    %176 = vector.shape_cast %175 : vector<1x1x64x128xf32> to vector<64x128xf32>
    %177 = vector.broadcast %74 : f32 to vector<64x128xf32>
    %178 = arith.mulf %177, %176 : vector<64x128xf32>
    %c3_132 = arith.constant 3 : index
    %c1_133 = arith.constant 1 : index
    %c0_134 = arith.constant 0 : index
    %c0_135 = arith.constant 0 : index
    %179 = vector.load %arg4[%c3_132, %c1_133, %c0_134, %c0_135] : memref<9x5x64x128xf32, #tpu.memory_space<vmem>>, vector<1x1x64x128xf32>
    %180 = vector.shape_cast %179 : vector<1x1x64x128xf32> to vector<64x128xf32>
    %181 = vector.broadcast %75 : f32 to vector<64x128xf32>
    %182 = arith.mulf %181, %180 : vector<64x128xf32>
    %183 = arith.addf %178, %182 : vector<64x128xf32>
    %c3_136 = arith.constant 3 : index
    %c2_137 = arith.constant 2 : index
    %c0_138 = arith.constant 0 : index
    %c0_139 = arith.constant 0 : index
    %184 = vector.load %arg4[%c3_136, %c2_137, %c0_138, %c0_139] : memref<9x5x64x128xf32, #tpu.memory_space<vmem>>, vector<1x1x64x128xf32>
    %185 = vector.shape_cast %184 : vector<1x1x64x128xf32> to vector<64x128xf32>
    %186 = vector.broadcast %76 : f32 to vector<64x128xf32>
    %187 = arith.mulf %186, %185 : vector<64x128xf32>
    %188 = arith.addf %183, %187 : vector<64x128xf32>
    %c3_140 = arith.constant 3 : index
    %c3_141 = arith.constant 3 : index
    %c0_142 = arith.constant 0 : index
    %c0_143 = arith.constant 0 : index
    %189 = vector.load %arg4[%c3_140, %c3_141, %c0_142, %c0_143] : memref<9x5x64x128xf32, #tpu.memory_space<vmem>>, vector<1x1x64x128xf32>
    %190 = vector.shape_cast %189 : vector<1x1x64x128xf32> to vector<64x128xf32>
    %191 = vector.broadcast %77 : f32 to vector<64x128xf32>
    %192 = arith.mulf %191, %190 : vector<64x128xf32>
    %193 = arith.addf %188, %192 : vector<64x128xf32>
    %c3_144 = arith.constant 3 : index
    %c4_145 = arith.constant 4 : index
    %c0_146 = arith.constant 0 : index
    %c0_147 = arith.constant 0 : index
    %194 = vector.load %arg4[%c3_144, %c4_145, %c0_146, %c0_147] : memref<9x5x64x128xf32, #tpu.memory_space<vmem>>, vector<1x1x64x128xf32>
    %195 = vector.shape_cast %194 : vector<1x1x64x128xf32> to vector<64x128xf32>
    %196 = vector.broadcast %78 : f32 to vector<64x128xf32>
    %197 = arith.mulf %196, %195 : vector<64x128xf32>
    %198 = arith.addf %193, %197 : vector<64x128xf32>
    %c1_148 = arith.constant 1 : index
    %c0_149 = arith.constant 0 : index
    %c0_150 = arith.constant 0 : index
    %199 = vector.load %arg7[%c1_148, %c0_149, %c0_150] : memref<10x10x64xf32, #tpu.memory_space<vmem>>, vector<8x8x64xf32>
    %200 = vector.shape_cast %199 : vector<8x8x64xf32> to vector<64x64xf32>
    %201 = arith.truncf %200 : vector<64x64xf32> to vector<64x64xbf16>
    %202 = arith.truncf %198 : vector<64x128xf32> to vector<64x128xbf16>
    %cst_151 = arith.constant dense<0.000000e+00> : vector<64x128xf32>
    %203 = tpu.matmul %201, %202, %cst_151 {dimension_numbers = #tpu.dot_dimension_numbers<[1], [0], [0], [1], [0, 0, 1, 1], [], []>} : vector<64x64xbf16>, vector<64x128xbf16>, vector<64x128xf32> -> vector<64x128xf32>
    %204 = arith.addf %174, %203 : vector<64x128xf32>
    %c4_152 = arith.constant 4 : index
    %c0_153 = arith.constant 0 : index
    %c0_154 = arith.constant 0 : index
    %c0_155 = arith.constant 0 : index
    %205 = vector.load %arg4[%c4_152, %c0_153, %c0_154, %c0_155] : memref<9x5x64x128xf32, #tpu.memory_space<vmem>>, vector<1x1x64x128xf32>
    %206 = vector.shape_cast %205 : vector<1x1x64x128xf32> to vector<64x128xf32>
    %207 = vector.broadcast %74 : f32 to vector<64x128xf32>
    %208 = arith.mulf %207, %206 : vector<64x128xf32>
    %c4_156 = arith.constant 4 : index
    %c1_157 = arith.constant 1 : index
    %c0_158 = arith.constant 0 : index
    %c0_159 = arith.constant 0 : index
    %209 = vector.load %arg4[%c4_156, %c1_157, %c0_158, %c0_159] : memref<9x5x64x128xf32, #tpu.memory_space<vmem>>, vector<1x1x64x128xf32>
    %210 = vector.shape_cast %209 : vector<1x1x64x128xf32> to vector<64x128xf32>
    %211 = vector.broadcast %75 : f32 to vector<64x128xf32>
    %212 = arith.mulf %211, %210 : vector<64x128xf32>
    %213 = arith.addf %208, %212 : vector<64x128xf32>
    %c4_160 = arith.constant 4 : index
    %c2_161 = arith.constant 2 : index
    %c0_162 = arith.constant 0 : index
    %c0_163 = arith.constant 0 : index
    %214 = vector.load %arg4[%c4_160, %c2_161, %c0_162, %c0_163] : memref<9x5x64x128xf32, #tpu.memory_space<vmem>>, vector<1x1x64x128xf32>
    %215 = vector.shape_cast %214 : vector<1x1x64x128xf32> to vector<64x128xf32>
    %216 = vector.broadcast %76 : f32 to vector<64x128xf32>
    %217 = arith.mulf %216, %215 : vector<64x128xf32>
    %218 = arith.addf %213, %217 : vector<64x128xf32>
    %c4_164 = arith.constant 4 : index
    %c3_165 = arith.constant 3 : index
    %c0_166 = arith.constant 0 : index
    %c0_167 = arith.constant 0 : index
    %219 = vector.load %arg4[%c4_164, %c3_165, %c0_166, %c0_167] : memref<9x5x64x128xf32, #tpu.memory_space<vmem>>, vector<1x1x64x128xf32>
    %220 = vector.shape_cast %219 : vector<1x1x64x128xf32> to vector<64x128xf32>
    %221 = vector.broadcast %77 : f32 to vector<64x128xf32>
    %222 = arith.mulf %221, %220 : vector<64x128xf32>
    %223 = arith.addf %218, %222 : vector<64x128xf32>
    %c4_168 = arith.constant 4 : index
    %c4_169 = arith.constant 4 : index
    %c0_170 = arith.constant 0 : index
    %c0_171 = arith.constant 0 : index
    %224 = vector.load %arg4[%c4_168, %c4_169, %c0_170, %c0_171] : memref<9x5x64x128xf32, #tpu.memory_space<vmem>>, vector<1x1x64x128xf32>
    %225 = vector.shape_cast %224 : vector<1x1x64x128xf32> to vector<64x128xf32>
    %226 = vector.broadcast %78 : f32 to vector<64x128xf32>
    %227 = arith.mulf %226, %225 : vector<64x128xf32>
    %228 = arith.addf %223, %227 : vector<64x128xf32>
    %c1_172 = arith.constant 1 : index
    %c1_173 = arith.constant 1 : index
    %c0_174 = arith.constant 0 : index
    %229 = vector.load %arg7[%c1_172, %c1_173, %c0_174] : memref<10x10x64xf32, #tpu.memory_space<vmem>>, vector<8x8x64xf32>
    %230 = vector.shape_cast %229 : vector<8x8x64xf32> to vector<64x64xf32>
    %231 = arith.truncf %230 : vector<64x64xf32> to vector<64x64xbf16>
    %232 = arith.truncf %228 : vector<64x128xf32> to vector<64x128xbf16>
    %cst_175 = arith.constant dense<0.000000e+00> : vector<64x128xf32>
    %233 = tpu.matmul %231, %232, %cst_175 {dimension_numbers = #tpu.dot_dimension_numbers<[1], [0], [0], [1], [0, 0, 1, 1], [], []>} : vector<64x64xbf16>, vector<64x128xbf16>, vector<64x128xf32> -> vector<64x128xf32>
    %234 = arith.addf %204, %233 : vector<64x128xf32>
    %c5_176 = arith.constant 5 : index
    %c0_177 = arith.constant 0 : index
    %c0_178 = arith.constant 0 : index
    %c0_179 = arith.constant 0 : index
    %235 = vector.load %arg4[%c5_176, %c0_177, %c0_178, %c0_179] : memref<9x5x64x128xf32, #tpu.memory_space<vmem>>, vector<1x1x64x128xf32>
    %236 = vector.shape_cast %235 : vector<1x1x64x128xf32> to vector<64x128xf32>
    %237 = vector.broadcast %74 : f32 to vector<64x128xf32>
    %238 = arith.mulf %237, %236 : vector<64x128xf32>
    %c5_180 = arith.constant 5 : index
    %c1_181 = arith.constant 1 : index
    %c0_182 = arith.constant 0 : index
    %c0_183 = arith.constant 0 : index
    %239 = vector.load %arg4[%c5_180, %c1_181, %c0_182, %c0_183] : memref<9x5x64x128xf32, #tpu.memory_space<vmem>>, vector<1x1x64x128xf32>
    %240 = vector.shape_cast %239 : vector<1x1x64x128xf32> to vector<64x128xf32>
    %241 = vector.broadcast %75 : f32 to vector<64x128xf32>
    %242 = arith.mulf %241, %240 : vector<64x128xf32>
    %243 = arith.addf %238, %242 : vector<64x128xf32>
    %c5_184 = arith.constant 5 : index
    %c2_185 = arith.constant 2 : index
    %c0_186 = arith.constant 0 : index
    %c0_187 = arith.constant 0 : index
    %244 = vector.load %arg4[%c5_184, %c2_185, %c0_186, %c0_187] : memref<9x5x64x128xf32, #tpu.memory_space<vmem>>, vector<1x1x64x128xf32>
    %245 = vector.shape_cast %244 : vector<1x1x64x128xf32> to vector<64x128xf32>
    %246 = vector.broadcast %76 : f32 to vector<64x128xf32>
    %247 = arith.mulf %246, %245 : vector<64x128xf32>
    %248 = arith.addf %243, %247 : vector<64x128xf32>
    %c5_188 = arith.constant 5 : index
    %c3_189 = arith.constant 3 : index
    %c0_190 = arith.constant 0 : index
    %c0_191 = arith.constant 0 : index
    %249 = vector.load %arg4[%c5_188, %c3_189, %c0_190, %c0_191] : memref<9x5x64x128xf32, #tpu.memory_space<vmem>>, vector<1x1x64x128xf32>
    %250 = vector.shape_cast %249 : vector<1x1x64x128xf32> to vector<64x128xf32>
    %251 = vector.broadcast %77 : f32 to vector<64x128xf32>
    %252 = arith.mulf %251, %250 : vector<64x128xf32>
    %253 = arith.addf %248, %252 : vector<64x128xf32>
    %c5_192 = arith.constant 5 : index
    %c4_193 = arith.constant 4 : index
    %c0_194 = arith.constant 0 : index
    %c0_195 = arith.constant 0 : index
    %254 = vector.load %arg4[%c5_192, %c4_193, %c0_194, %c0_195] : memref<9x5x64x128xf32, #tpu.memory_space<vmem>>, vector<1x1x64x128xf32>
    %255 = vector.shape_cast %254 : vector<1x1x64x128xf32> to vector<64x128xf32>
    %256 = vector.broadcast %78 : f32 to vector<64x128xf32>
    %257 = arith.mulf %256, %255 : vector<64x128xf32>
    %258 = arith.addf %253, %257 : vector<64x128xf32>
    %c1_196 = arith.constant 1 : index
    %c2_197 = arith.constant 2 : index
    %c0_198 = arith.constant 0 : index
    %259 = vector.load %arg7[%c1_196, %c2_197, %c0_198] : memref<10x10x64xf32, #tpu.memory_space<vmem>>, vector<8x8x64xf32>
    %260 = vector.shape_cast %259 : vector<8x8x64xf32> to vector<64x64xf32>
    %261 = arith.truncf %260 : vector<64x64xf32> to vector<64x64xbf16>
    %262 = arith.truncf %258 : vector<64x128xf32> to vector<64x128xbf16>
    %cst_199 = arith.constant dense<0.000000e+00> : vector<64x128xf32>
    %263 = tpu.matmul %261, %262, %cst_199 {dimension_numbers = #tpu.dot_dimension_numbers<[1], [0], [0], [1], [0, 0, 1, 1], [], []>} : vector<64x64xbf16>, vector<64x128xbf16>, vector<64x128xf32> -> vector<64x128xf32>
    %264 = arith.addf %234, %263 : vector<64x128xf32>
    %c6_200 = arith.constant 6 : index
    %c0_201 = arith.constant 0 : index
    %c0_202 = arith.constant 0 : index
    %c0_203 = arith.constant 0 : index
    %265 = vector.load %arg4[%c6_200, %c0_201, %c0_202, %c0_203] : memref<9x5x64x128xf32, #tpu.memory_space<vmem>>, vector<1x1x64x128xf32>
    %266 = vector.shape_cast %265 : vector<1x1x64x128xf32> to vector<64x128xf32>
    %267 = vector.broadcast %74 : f32 to vector<64x128xf32>
    %268 = arith.mulf %267, %266 : vector<64x128xf32>
    %c6_204 = arith.constant 6 : index
    %c1_205 = arith.constant 1 : index
    %c0_206 = arith.constant 0 : index
    %c0_207 = arith.constant 0 : index
    %269 = vector.load %arg4[%c6_204, %c1_205, %c0_206, %c0_207] : memref<9x5x64x128xf32, #tpu.memory_space<vmem>>, vector<1x1x64x128xf32>
    %270 = vector.shape_cast %269 : vector<1x1x64x128xf32> to vector<64x128xf32>
    %271 = vector.broadcast %75 : f32 to vector<64x128xf32>
    %272 = arith.mulf %271, %270 : vector<64x128xf32>
    %273 = arith.addf %268, %272 : vector<64x128xf32>
    %c6_208 = arith.constant 6 : index
    %c2_209 = arith.constant 2 : index
    %c0_210 = arith.constant 0 : index
    %c0_211 = arith.constant 0 : index
    %274 = vector.load %arg4[%c6_208, %c2_209, %c0_210, %c0_211] : memref<9x5x64x128xf32, #tpu.memory_space<vmem>>, vector<1x1x64x128xf32>
    %275 = vector.shape_cast %274 : vector<1x1x64x128xf32> to vector<64x128xf32>
    %276 = vector.broadcast %76 : f32 to vector<64x128xf32>
    %277 = arith.mulf %276, %275 : vector<64x128xf32>
    %278 = arith.addf %273, %277 : vector<64x128xf32>
    %c6_212 = arith.constant 6 : index
    %c3_213 = arith.constant 3 : index
    %c0_214 = arith.constant 0 : index
    %c0_215 = arith.constant 0 : index
    %279 = vector.load %arg4[%c6_212, %c3_213, %c0_214, %c0_215] : memref<9x5x64x128xf32, #tpu.memory_space<vmem>>, vector<1x1x64x128xf32>
    %280 = vector.shape_cast %279 : vector<1x1x64x128xf32> to vector<64x128xf32>
    %281 = vector.broadcast %77 : f32 to vector<64x128xf32>
    %282 = arith.mulf %281, %280 : vector<64x128xf32>
    %283 = arith.addf %278, %282 : vector<64x128xf32>
    %c6_216 = arith.constant 6 : index
    %c4_217 = arith.constant 4 : index
    %c0_218 = arith.constant 0 : index
    %c0_219 = arith.constant 0 : index
    %284 = vector.load %arg4[%c6_216, %c4_217, %c0_218, %c0_219] : memref<9x5x64x128xf32, #tpu.memory_space<vmem>>, vector<1x1x64x128xf32>
    %285 = vector.shape_cast %284 : vector<1x1x64x128xf32> to vector<64x128xf32>
    %286 = vector.broadcast %78 : f32 to vector<64x128xf32>
    %287 = arith.mulf %286, %285 : vector<64x128xf32>
    %288 = arith.addf %283, %287 : vector<64x128xf32>
    %c2_220 = arith.constant 2 : index
    %c0_221 = arith.constant 0 : index
    %c0_222 = arith.constant 0 : index
    %289 = vector.load %arg7[%c2_220, %c0_221, %c0_222] : memref<10x10x64xf32, #tpu.memory_space<vmem>>, vector<8x8x64xf32>
    %290 = vector.shape_cast %289 : vector<8x8x64xf32> to vector<64x64xf32>
    %291 = arith.truncf %290 : vector<64x64xf32> to vector<64x64xbf16>
    %292 = arith.truncf %288 : vector<64x128xf32> to vector<64x128xbf16>
    %cst_223 = arith.constant dense<0.000000e+00> : vector<64x128xf32>
    %293 = tpu.matmul %291, %292, %cst_223 {dimension_numbers = #tpu.dot_dimension_numbers<[1], [0], [0], [1], [0, 0, 1, 1], [], []>} : vector<64x64xbf16>, vector<64x128xbf16>, vector<64x128xf32> -> vector<64x128xf32>
    %294 = arith.addf %264, %293 : vector<64x128xf32>
    %c7_224 = arith.constant 7 : index
    %c0_225 = arith.constant 0 : index
    %c0_226 = arith.constant 0 : index
    %c0_227 = arith.constant 0 : index
    %295 = vector.load %arg4[%c7_224, %c0_225, %c0_226, %c0_227] : memref<9x5x64x128xf32, #tpu.memory_space<vmem>>, vector<1x1x64x128xf32>
    %296 = vector.shape_cast %295 : vector<1x1x64x128xf32> to vector<64x128xf32>
    %297 = vector.broadcast %74 : f32 to vector<64x128xf32>
    %298 = arith.mulf %297, %296 : vector<64x128xf32>
    %c7_228 = arith.constant 7 : index
    %c1_229 = arith.constant 1 : index
    %c0_230 = arith.constant 0 : index
    %c0_231 = arith.constant 0 : index
    %299 = vector.load %arg4[%c7_228, %c1_229, %c0_230, %c0_231] : memref<9x5x64x128xf32, #tpu.memory_space<vmem>>, vector<1x1x64x128xf32>
    %300 = vector.shape_cast %299 : vector<1x1x64x128xf32> to vector<64x128xf32>
    %301 = vector.broadcast %75 : f32 to vector<64x128xf32>
    %302 = arith.mulf %301, %300 : vector<64x128xf32>
    %303 = arith.addf %298, %302 : vector<64x128xf32>
    %c7_232 = arith.constant 7 : index
    %c2_233 = arith.constant 2 : index
    %c0_234 = arith.constant 0 : index
    %c0_235 = arith.constant 0 : index
    %304 = vector.load %arg4[%c7_232, %c2_233, %c0_234, %c0_235] : memref<9x5x64x128xf32, #tpu.memory_space<vmem>>, vector<1x1x64x128xf32>
    %305 = vector.shape_cast %304 : vector<1x1x64x128xf32> to vector<64x128xf32>
    %306 = vector.broadcast %76 : f32 to vector<64x128xf32>
    %307 = arith.mulf %306, %305 : vector<64x128xf32>
    %308 = arith.addf %303, %307 : vector<64x128xf32>
    %c7_236 = arith.constant 7 : index
    %c3_237 = arith.constant 3 : index
    %c0_238 = arith.constant 0 : index
    %c0_239 = arith.constant 0 : index
    %309 = vector.load %arg4[%c7_236, %c3_237, %c0_238, %c0_239] : memref<9x5x64x128xf32, #tpu.memory_space<vmem>>, vector<1x1x64x128xf32>
    %310 = vector.shape_cast %309 : vector<1x1x64x128xf32> to vector<64x128xf32>
    %311 = vector.broadcast %77 : f32 to vector<64x128xf32>
    %312 = arith.mulf %311, %310 : vector<64x128xf32>
    %313 = arith.addf %308, %312 : vector<64x128xf32>
    %c7_240 = arith.constant 7 : index
    %c4_241 = arith.constant 4 : index
    %c0_242 = arith.constant 0 : index
    %c0_243 = arith.constant 0 : index
    %314 = vector.load %arg4[%c7_240, %c4_241, %c0_242, %c0_243] : memref<9x5x64x128xf32, #tpu.memory_space<vmem>>, vector<1x1x64x128xf32>
    %315 = vector.shape_cast %314 : vector<1x1x64x128xf32> to vector<64x128xf32>
    %316 = vector.broadcast %78 : f32 to vector<64x128xf32>
    %317 = arith.mulf %316, %315 : vector<64x128xf32>
    %318 = arith.addf %313, %317 : vector<64x128xf32>
    %c2_244 = arith.constant 2 : index
    %c1_245 = arith.constant 1 : index
    %c0_246 = arith.constant 0 : index
    %319 = vector.load %arg7[%c2_244, %c1_245, %c0_246] : memref<10x10x64xf32, #tpu.memory_space<vmem>>, vector<8x8x64xf32>
    %320 = vector.shape_cast %319 : vector<8x8x64xf32> to vector<64x64xf32>
    %321 = arith.truncf %320 : vector<64x64xf32> to vector<64x64xbf16>
    %322 = arith.truncf %318 : vector<64x128xf32> to vector<64x128xbf16>
    %cst_247 = arith.constant dense<0.000000e+00> : vector<64x128xf32>
    %323 = tpu.matmul %321, %322, %cst_247 {dimension_numbers = #tpu.dot_dimension_numbers<[1], [0], [0], [1], [0, 0, 1, 1], [], []>} : vector<64x64xbf16>, vector<64x128xbf16>, vector<64x128xf32> -> vector<64x128xf32>
    %324 = arith.addf %294, %323 : vector<64x128xf32>
    %c8_248 = arith.constant 8 : index
    %c0_249 = arith.constant 0 : index
    %c0_250 = arith.constant 0 : index
    %c0_251 = arith.constant 0 : index
    %325 = vector.load %arg4[%c8_248, %c0_249, %c0_250, %c0_251] : memref<9x5x64x128xf32, #tpu.memory_space<vmem>>, vector<1x1x64x128xf32>
    %326 = vector.shape_cast %325 : vector<1x1x64x128xf32> to vector<64x128xf32>
    %327 = vector.broadcast %74 : f32 to vector<64x128xf32>
    %328 = arith.mulf %327, %326 : vector<64x128xf32>
    %c8_252 = arith.constant 8 : index
    %c1_253 = arith.constant 1 : index
    %c0_254 = arith.constant 0 : index
    %c0_255 = arith.constant 0 : index
    %329 = vector.load %arg4[%c8_252, %c1_253, %c0_254, %c0_255] : memref<9x5x64x128xf32, #tpu.memory_space<vmem>>, vector<1x1x64x128xf32>
    %330 = vector.shape_cast %329 : vector<1x1x64x128xf32> to vector<64x128xf32>
    %331 = vector.broadcast %75 : f32 to vector<64x128xf32>
    %332 = arith.mulf %331, %330 : vector<64x128xf32>
    %333 = arith.addf %328, %332 : vector<64x128xf32>
    %c8_256 = arith.constant 8 : index
    %c2_257 = arith.constant 2 : index
    %c0_258 = arith.constant 0 : index
    %c0_259 = arith.constant 0 : index
    %334 = vector.load %arg4[%c8_256, %c2_257, %c0_258, %c0_259] : memref<9x5x64x128xf32, #tpu.memory_space<vmem>>, vector<1x1x64x128xf32>
    %335 = vector.shape_cast %334 : vector<1x1x64x128xf32> to vector<64x128xf32>
    %336 = vector.broadcast %76 : f32 to vector<64x128xf32>
    %337 = arith.mulf %336, %335 : vector<64x128xf32>
    %338 = arith.addf %333, %337 : vector<64x128xf32>
    %c8_260 = arith.constant 8 : index
    %c3_261 = arith.constant 3 : index
    %c0_262 = arith.constant 0 : index
    %c0_263 = arith.constant 0 : index
    %339 = vector.load %arg4[%c8_260, %c3_261, %c0_262, %c0_263] : memref<9x5x64x128xf32, #tpu.memory_space<vmem>>, vector<1x1x64x128xf32>
    %340 = vector.shape_cast %339 : vector<1x1x64x128xf32> to vector<64x128xf32>
    %341 = vector.broadcast %77 : f32 to vector<64x128xf32>
    %342 = arith.mulf %341, %340 : vector<64x128xf32>
    %343 = arith.addf %338, %342 : vector<64x128xf32>
    %c8_264 = arith.constant 8 : index
    %c4_265 = arith.constant 4 : index
    %c0_266 = arith.constant 0 : index
    %c0_267 = arith.constant 0 : index
    %344 = vector.load %arg4[%c8_264, %c4_265, %c0_266, %c0_267] : memref<9x5x64x128xf32, #tpu.memory_space<vmem>>, vector<1x1x64x128xf32>
    %345 = vector.shape_cast %344 : vector<1x1x64x128xf32> to vector<64x128xf32>
    %346 = vector.broadcast %78 : f32 to vector<64x128xf32>
    %347 = arith.mulf %346, %345 : vector<64x128xf32>
    %348 = arith.addf %343, %347 : vector<64x128xf32>
    %c2_268 = arith.constant 2 : index
    %c2_269 = arith.constant 2 : index
    %c0_270 = arith.constant 0 : index
    %349 = vector.load %arg7[%c2_268, %c2_269, %c0_270] : memref<10x10x64xf32, #tpu.memory_space<vmem>>, vector<8x8x64xf32>
    %350 = vector.shape_cast %349 : vector<8x8x64xf32> to vector<64x64xf32>
    %351 = arith.truncf %350 : vector<64x64xf32> to vector<64x64xbf16>
    %352 = arith.truncf %348 : vector<64x128xf32> to vector<64x128xbf16>
    %cst_271 = arith.constant dense<0.000000e+00> : vector<64x128xf32>
    %353 = tpu.matmul %351, %352, %cst_271 {dimension_numbers = #tpu.dot_dimension_numbers<[1], [0], [0], [1], [0, 0, 1, 1], [], []>} : vector<64x64xbf16>, vector<64x128xbf16>, vector<64x128xf32> -> vector<64x128xf32>
    %354 = arith.addf %324, %353 : vector<64x128xf32>
    %cst_272 = arith.constant 0.000000e+00 : f32
    %355 = vector.broadcast %cst_272 : f32 to vector<10x10x128xf32>
    %c0_273 = arith.constant 0 : index
    %c0_274 = arith.constant 0 : index
    %c0_275 = arith.constant 0 : index
    %356 = vector.load %arg8[%c0_273, %c0_274, %c0_275] : memref<10x10x128xf32, #tpu.memory_space<vmem>>, vector<10x10x128xf32>
    tpu.vector_store %arg8[%c0_273, %c0_274, %c0_275], %355 {strides = array<i32>} : memref<10x10x128xf32, #tpu.memory_space<vmem>>, vector<10x10x128xf32>,
    %357 = vector.shape_cast %354 : vector<64x128xf32> to vector<8x8x128xf32>
    %c1_276 = arith.constant 1 : index
    %c1_277 = arith.constant 1 : index
    %c0_278 = arith.constant 0 : index
    %358 = vector.load %arg8[%c1_276, %c1_277, %c0_278] : memref<10x10x128xf32, #tpu.memory_space<vmem>>, vector<8x8x128xf32>
    tpu.vector_store %arg8[%c1_276, %c1_277, %c0_278], %357 {strides = array<i32>} : memref<10x10x128xf32, #tpu.memory_space<vmem>>, vector<8x8x128xf32>,
    %cst_279 = arith.constant 0.000000e+00 : f32
    %359 = vector.broadcast %cst_279 : f32 to vector<8x8xf32>
    %c0_280 = arith.constant 0 : index
    %c0_281 = arith.constant 0 : index
    %c0_282 = arith.constant 0 : index
    %360 = vector.load %arg8[%c0_280, %c0_281, %c0_282] : memref<10x10x128xf32, #tpu.memory_space<vmem>>, vector<8x8x128xf32>
    %c0_283 = arith.constant 0 : index
    %c0_284 = arith.constant 0 : index
    %c0_285 = arith.constant 0 : index
    %c0_286 = arith.constant 0 : index
    %361 = vector.load %arg5[%c0_283, %c0_284, %c0_285, %c0_286] : memref<9x1x1x128xf32, #tpu.memory_space<vmem>>, vector<1x1x1x128xf32>
    %362 = vector.shape_cast %361 : vector<1x1x1x128xf32> to vector<1x1x128xf32>
    %363 = vector.broadcast %362 : vector<1x1x128xf32> to vector<8x8x128xf32>
    %364 = arith.mulf %360, %363 : vector<8x8x128xf32>
    %cst_287 = arith.constant dense<0.000000e+00> : vector<8x8xf32>
    %365 = vector.multi_reduction <add>, %364, %cst_287 [2] : vector<8x8x128xf32> to vector<8x8xf32>
    %366 = arith.addf %359, %365 : vector<8x8xf32>
    %c0_288 = arith.constant 0 : index
    %c1_289 = arith.constant 1 : index
    %c0_290 = arith.constant 0 : index
    %367 = vector.load %arg8[%c0_288, %c1_289, %c0_290] : memref<10x10x128xf32, #tpu.memory_space<vmem>>, vector<8x8x128xf32>
    %c1_291 = arith.constant 1 : index
    %c0_292 = arith.constant 0 : index
    %c0_293 = arith.constant 0 : index
    %c0_294 = arith.constant 0 : index
    %368 = vector.load %arg5[%c1_291, %c0_292, %c0_293, %c0_294] : memref<9x1x1x128xf32, #tpu.memory_space<vmem>>, vector<1x1x1x128xf32>
    %369 = vector.shape_cast %368 : vector<1x1x1x128xf32> to vector<1x1x128xf32>
    %370 = vector.broadcast %369 : vector<1x1x128xf32> to vector<8x8x128xf32>
    %371 = arith.mulf %367, %370 : vector<8x8x128xf32>
    %cst_295 = arith.constant dense<0.000000e+00> : vector<8x8xf32>
    %372 = vector.multi_reduction <add>, %371, %cst_295 [2] : vector<8x8x128xf32> to vector<8x8xf32>
    %373 = arith.addf %366, %372 : vector<8x8xf32>
    %c0_296 = arith.constant 0 : index
    %c2_297 = arith.constant 2 : index
    %c0_298 = arith.constant 0 : index
    %374 = vector.load %arg8[%c0_296, %c2_297, %c0_298] : memref<10x10x128xf32, #tpu.memory_space<vmem>>, vector<8x8x128xf32>
    %c2_299 = arith.constant 2 : index
    %c0_300 = arith.constant 0 : index
    %c0_301 = arith.constant 0 : index
    %c0_302 = arith.constant 0 : index
    %375 = vector.load %arg5[%c2_299, %c0_300, %c0_301, %c0_302] : memref<9x1x1x128xf32, #tpu.memory_space<vmem>>, vector<1x1x1x128xf32>
    %376 = vector.shape_cast %375 : vector<1x1x1x128xf32> to vector<1x1x128xf32>
    %377 = vector.broadcast %376 : vector<1x1x128xf32> to vector<8x8x128xf32>
    %378 = arith.mulf %374, %377 : vector<8x8x128xf32>
    %cst_303 = arith.constant dense<0.000000e+00> : vector<8x8xf32>
    %379 = vector.multi_reduction <add>, %378, %cst_303 [2] : vector<8x8x128xf32> to vector<8x8xf32>
    %380 = arith.addf %373, %379 : vector<8x8xf32>
    %c1_304 = arith.constant 1 : index
    %c0_305 = arith.constant 0 : index
    %c0_306 = arith.constant 0 : index
    %381 = vector.load %arg8[%c1_304, %c0_305, %c0_306] : memref<10x10x128xf32, #tpu.memory_space<vmem>>, vector<8x8x128xf32>
    %c3_307 = arith.constant 3 : index
    %c0_308 = arith.constant 0 : index
    %c0_309 = arith.constant 0 : index
    %c0_310 = arith.constant 0 : index
    %382 = vector.load %arg5[%c3_307, %c0_308, %c0_309, %c0_310] : memref<9x1x1x128xf32, #tpu.memory_space<vmem>>, vector<1x1x1x128xf32>
    %383 = vector.shape_cast %382 : vector<1x1x1x128xf32> to vector<1x1x128xf32>
    %384 = vector.broadcast %383 : vector<1x1x128xf32> to vector<8x8x128xf32>
    %385 = arith.mulf %381, %384 : vector<8x8x128xf32>
    %cst_311 = arith.constant dense<0.000000e+00> : vector<8x8xf32>
    %386 = vector.multi_reduction <add>, %385, %cst_311 [2] : vector<8x8x128xf32> to vector<8x8xf32>
    %387 = arith.addf %380, %386 : vector<8x8xf32>
    %c1_312 = arith.constant 1 : index
    %c1_313 = arith.constant 1 : index
    %c0_314 = arith.constant 0 : index
    %388 = vector.load %arg8[%c1_312, %c1_313, %c0_314] : memref<10x10x128xf32, #tpu.memory_space<vmem>>, vector<8x8x128xf32>
    %c4_315 = arith.constant 4 : index
    %c0_316 = arith.constant 0 : index
    %c0_317 = arith.constant 0 : index
    %c0_318 = arith.constant 0 : index
    %389 = vector.load %arg5[%c4_315, %c0_316, %c0_317, %c0_318] : memref<9x1x1x128xf32, #tpu.memory_space<vmem>>, vector<1x1x1x128xf32>
    %390 = vector.shape_cast %389 : vector<1x1x1x128xf32> to vector<1x1x128xf32>
    %391 = vector.broadcast %390 : vector<1x1x128xf32> to vector<8x8x128xf32>
    %392 = arith.mulf %388, %391 : vector<8x8x128xf32>
    %cst_319 = arith.constant dense<0.000000e+00> : vector<8x8xf32>
    %393 = vector.multi_reduction <add>, %392, %cst_319 [2] : vector<8x8x128xf32> to vector<8x8xf32>
    %394 = arith.addf %387, %393 : vector<8x8xf32>
    %c1_320 = arith.constant 1 : index
    %c2_321 = arith.constant 2 : index
    %c0_322 = arith.constant 0 : index
    %395 = vector.load %arg8[%c1_320, %c2_321, %c0_322] : memref<10x10x128xf32, #tpu.memory_space<vmem>>, vector<8x8x128xf32>
    %c5_323 = arith.constant 5 : index
    %c0_324 = arith.constant 0 : index
    %c0_325 = arith.constant 0 : index
    %c0_326 = arith.constant 0 : index
    %396 = vector.load %arg5[%c5_323, %c0_324, %c0_325, %c0_326] : memref<9x1x1x128xf32, #tpu.memory_space<vmem>>, vector<1x1x1x128xf32>
    %397 = vector.shape_cast %396 : vector<1x1x1x128xf32> to vector<1x1x128xf32>
    %398 = vector.broadcast %397 : vector<1x1x128xf32> to vector<8x8x128xf32>
    %399 = arith.mulf %395, %398 : vector<8x8x128xf32>
    %cst_327 = arith.constant dense<0.000000e+00> : vector<8x8xf32>
    %400 = vector.multi_reduction <add>, %399, %cst_327 [2] : vector<8x8x128xf32> to vector<8x8xf32>
    %401 = arith.addf %394, %400 : vector<8x8xf32>
    %c2_328 = arith.constant 2 : index
    %c0_329 = arith.constant 0 : index
    %c0_330 = arith.constant 0 : index
    %402 = vector.load %arg8[%c2_328, %c0_329, %c0_330] : memref<10x10x128xf32, #tpu.memory_space<vmem>>, vector<8x8x128xf32>
    %c6_331 = arith.constant 6 : index
    %c0_332 = arith.constant 0 : index
    %c0_333 = arith.constant 0 : index
    %c0_334 = arith.constant 0 : index
    %403 = vector.load %arg5[%c6_331, %c0_332, %c0_333, %c0_334] : memref<9x1x1x128xf32, #tpu.memory_space<vmem>>, vector<1x1x1x128xf32>
    %404 = vector.shape_cast %403 : vector<1x1x1x128xf32> to vector<1x1x128xf32>
    %405 = vector.broadcast %404 : vector<1x1x128xf32> to vector<8x8x128xf32>
    %406 = arith.mulf %402, %405 : vector<8x8x128xf32>
    %cst_335 = arith.constant dense<0.000000e+00> : vector<8x8xf32>
    %407 = vector.multi_reduction <add>, %406, %cst_335 [2] : vector<8x8x128xf32> to vector<8x8xf32>
    %408 = arith.addf %401, %407 : vector<8x8xf32>
    %c2_336 = arith.constant 2 : index
    %c1_337 = arith.constant 1 : index
    %c0_338 = arith.constant 0 : index
    %409 = vector.load %arg8[%c2_336, %c1_337, %c0_338] : memref<10x10x128xf32, #tpu.memory_space<vmem>>, vector<8x8x128xf32>
    %c7_339 = arith.constant 7 : index
    %c0_340 = arith.constant 0 : index
    %c0_341 = arith.constant 0 : index
    %c0_342 = arith.constant 0 : index
    %410 = vector.load %arg5[%c7_339, %c0_340, %c0_341, %c0_342] : memref<9x1x1x128xf32, #tpu.memory_space<vmem>>, vector<1x1x1x128xf32>
    %411 = vector.shape_cast %410 : vector<1x1x1x128xf32> to vector<1x1x128xf32>
    %412 = vector.broadcast %411 : vector<1x1x128xf32> to vector<8x8x128xf32>
    %413 = arith.mulf %409, %412 : vector<8x8x128xf32>
    %cst_343 = arith.constant dense<0.000000e+00> : vector<8x8xf32>
    %414 = vector.multi_reduction <add>, %413, %cst_343 [2] : vector<8x8x128xf32> to vector<8x8xf32>
    %415 = arith.addf %408, %414 : vector<8x8xf32>
    %c2_344 = arith.constant 2 : index
    %c2_345 = arith.constant 2 : index
    %c0_346 = arith.constant 0 : index
    %416 = vector.load %arg8[%c2_344, %c2_345, %c0_346] : memref<10x10x128xf32, #tpu.memory_space<vmem>>, vector<8x8x128xf32>
    %c8_347 = arith.constant 8 : index
    %c0_348 = arith.constant 0 : index
    %c0_349 = arith.constant 0 : index
    %c0_350 = arith.constant 0 : index
    %417 = vector.load %arg5[%c8_347, %c0_348, %c0_349, %c0_350] : memref<9x1x1x128xf32, #tpu.memory_space<vmem>>, vector<1x1x1x128xf32>
    %418 = vector.shape_cast %417 : vector<1x1x1x128xf32> to vector<1x1x128xf32>
    %419 = vector.broadcast %418 : vector<1x1x128xf32> to vector<8x8x128xf32>
    %420 = arith.mulf %416, %419 : vector<8x8x128xf32>
    %cst_351 = arith.constant dense<0.000000e+00> : vector<8x8xf32>
    %421 = vector.multi_reduction <add>, %420, %cst_351 [2] : vector<8x8x128xf32> to vector<8x8xf32>
    %422 = arith.addf %415, %421 : vector<8x8xf32>
    %423 = vector.shape_cast %422 : vector<8x8xf32> to vector<8x8x1xf32>
    %424 = vector.broadcast %423 : vector<8x8x1xf32> to vector<8x8x64xf32>
    %425 = arith.addf %80, %424 : vector<8x8x64xf32>
    %c0_352 = arith.constant 0 : index
    %c0_353 = arith.constant 0 : index
    %c0_354 = arith.constant 0 : index
    %c0_355 = arith.constant 0 : index
    %426 = vector.load %arg6[%c0_352, %c0_353, %c0_354, %c0_355] : memref<1x8x8x64xf32, #tpu.memory_space<vmem>>, vector<1x8x8x64xf32>
    %427 = vector.shape_cast %426 : vector<1x8x8x64xf32> to vector<8x8x64xf32>
    %428 = vector.shape_cast %425 : vector<8x8x64xf32> to vector<1x8x8x64xf32>
    tpu.vector_store %arg6[%c0_352, %c0_353, %c0_354, %c0_355], %428 {strides = array<i32>} : memref<1x8x8x64xf32, #tpu.memory_space<vmem>>, vector<1x8x8x64xf32>,
    return
  }
  func.func @transform_0(%arg0: i32) -> (i32, i32) {
    %c0_i32 = arith.constant 0 : i32
    %c0_i32_0 = arith.constant 0 : i32
    %c0_i32_1 = arith.constant 0 : i32
    return %c0_i32, %c0_i32_0 : i32, i32
  }
  func.func @transform_1(%arg0: i32) -> (i32, i32) {
    %c0_i32 = arith.constant 0 : i32
    %c0_i32_0 = arith.constant 0 : i32
    %c0_i32_1 = arith.constant 0 : i32
    return %c0_i32, %c0_i32_0 : i32, i32
  }
  func.func @transform_2(%arg0: i32) -> (i32, i32, i32, i32) {
    %c0_i32 = arith.constant 0 : i32
    %c0_i32_0 = arith.constant 0 : i32
    %c0_i32_1 = arith.constant 0 : i32
    %c0_i32_2 = arith.constant 0 : i32
    return %arg0, %c0_i32, %c0_i32_0, %c0_i32_1 : i32, i32, i32, i32
  }
  func.func @transform_3(%arg0: i32) -> (i32, i32, i32, i32) {
    %c0_i32 = arith.constant 0 : i32
    %c0_i32_0 = arith.constant 0 : i32
    %c0_i32_1 = arith.constant 0 : i32
    %c0_i32_2 = arith.constant 0 : i32
    %c0_i32_3 = arith.constant 0 : i32
    return %c0_i32, %c0_i32_0, %c0_i32_1, %c0_i32_2 : i32, i32, i32, i32
  }
  func.func @transform_4(%arg0: i32) -> (i32, i32, i32, i32) {
    %c0_i32 = arith.constant 0 : i32
    %c0_i32_0 = arith.constant 0 : i32
    %c0_i32_1 = arith.constant 0 : i32
    %c0_i32_2 = arith.constant 0 : i32
    %c0_i32_3 = arith.constant 0 : i32
    return %c0_i32, %c0_i32_0, %c0_i32_1, %c0_i32_2 : i32, i32, i32, i32
  }
  func.func @transform_5(%arg0: i32) -> (i32, i32, i32, i32) {
    %c0_i32 = arith.constant 0 : i32
    %c0_i32_0 = arith.constant 0 : i32
    %c0_i32_1 = arith.constant 0 : i32
    %c0_i32_2 = arith.constant 0 : i32
    return %arg0, %c0_i32, %c0_i32_0, %c0_i32_1 : i32, i32, i32, i32
  }
}

</mosaic_0001>

<llo_original>
// kernel: tpu_custom_call.1
$region0: #{tpu_custom_call.1}
  #allocation0 [shape = 'u32[]', space=smem, size = 0x4, offset = 0x4, fixed_abs, tag = 'smem constant byte address 0x4 - core index']
  #allocation1 [shape = 'u32[72,128]{1,0:T(1,128)}', space=vmem, size = 0x9000, scoped, tag = 'internal scratch']
  #allocation2 [shape = 'f32[10,10,64]{2,1,0:T(8,128)}', space=vmem, size = 0x14000, scoped, tag = 'scratch operand']
  #allocation3 [shape = 'f32[10,10,128]{2,1,0:T(8,128)}', space=vmem, size = 0x14000, scoped, tag = 'scratch operand']
  %s0 = inlined_call_operand.vmem [shape: f32[15,2], index: 0, kind: input, shape index: {}]
  %s1 = inlined_call_operand.vmem [shape: f32[15,2], index: 1, kind: input, shape index: {}]
  %s2 = inlined_call_operand.hbm [shape: f32[2,8,8,64], index: 2, kind: input, shape index: {}]
  %s3 = inlined_call_operand.hbm [shape: f32[9,5,64,128], index: 3, kind: input, shape index: {}]
  %s4 = inlined_call_operand.hbm [shape: f32[9,1,1,128], index: 4, kind: input, shape index: {}]
  %s5 = inlined_call_operand.hbm [shape: f32[2,8,8,64], index: 5, kind: output, shape index: {}]
  %s6 = sld [smem:[#allocation0]]
  $region73: #{tpu_custom_call.1} parent=0
    _
  %s8 = ssub.s32 1, %s6
  %s9 = scalar_select 0, %s8, %s6
  $region1: #{tpu_custom_call.1} parent=0
    #allocation4 [shape = 'u8[8192]{0}', space=smem, size = 0x2000, scoped, tag = 'input window, operand 0, single buffered']
    #allocation5 [shape = 's32[2]{0}', space=sflag, size = 0x8, scoped, tag = 'scoped memory for tpu_custom_call.1']
    #allocation6 [shape = 's32[2]{0}', space=sflag, size = 0x8, scoped, tag = 'scoped memory for tpu_custom_call.1']
    #allocation7 [shape = 's32[2]{0}', space=sflag, size = 0x8, scoped, tag = 'scoped memory for tpu_custom_call.1']
    #allocation8 [shape = 'u8[8192]{0}', space=smem, size = 0x2000, scoped, tag = 'input window, operand 1, single buffered']
    #allocation9 [shape = 's32[1]{0}', space=sflag, size = 0x4, scoped, tag = 'scoped memory for tpu_custom_call.1']
    #allocation10 [shape = 'u8[65536]{0}', space=vmem, size = 0x10000, scoped, tag = 'input window, operand 2']
    #allocation11 [shape = 'u8[1474560]{0}', space=vmem, size = 0x168000, scoped, tag = 'input window, operand 3, single buffered']
    #allocation12 [shape = 's32[1]{0}', space=sflag, size = 0x4, scoped, tag = 'scoped memory for tpu_custom_call.1']
    #allocation13 [shape = 'u8[4608]{0}', space=vmem, size = 0x1400, scoped, tag = 'input window, operand 4, single buffered']
    #allocation14 [shape = 'u8[65536]{0}', space=vmem, size = 0x10000, scoped, tag = 'output window, operand 0']
    %10 = vsyncpa [#allocation7], 0
    %11 = vsyncpa [#allocation9], 0
    %12 = vsyncpa [#allocation5], 0
    %s13 = scalar_lea.sflag [#allocation5], 1
    %14 = vsyncpa %s13, 0
    %15 = vsyncpa [#allocation12], 0
    %16 = vsyncpa [#allocation6], 0
    %s17 = scalar_lea.sflag [#allocation6], 1
    %18 = vsyncpa %s17, 0
    loop: start=0, step=1, limit=4
    $region2: #{tpu_custom_call.1} parent=1 // loop_pre_header
      _
    $region3: #{tpu_custom_call.1} parent=1 // loop_header
      %s20 = sphi 0, %s24
      %p21 = scmp.ge.s32.totalorder %s20, 4
      %s28 = sphi 0, %s28
      %s30 = sphi 0, %s28
      %s31 = sphi 0, %s30
      %s45 = sphi 0, %s31
      %s49 = sphi 0, %s49
      %s51 = sphi 0, %s49
      %s52 = sphi 0, %s51
      %s66 = sphi 0, %s52
      %s72 = sphi 0, %s74
      %s75 = sphi 0, %s72
      %s76 = sphi 0, %s75
      %s92 = sphi 0, %s76
      %s96 = sphi 0, %s96
      %s98 = sphi 0, %s96
      %s99 = sphi 0, %s98
      %s113 = sphi 0, %s99
      %s117 = sphi 0, %s117
      %s119 = sphi 0, %s117
      %s120 = sphi 0, %s119
      %s134 = sphi 0, %s120
      %s140 = sphi 0, %s142
      %s143 = sphi 0, %s140
      %s144 = sphi 0, %s143
      %s160 = sphi 0, %s144
    $region4: #{tpu_custom_call.1} parent=1 // loop_header_branch
      %23 = sbr.rel (%p21) target = $region8
    $region5: #{tpu_custom_call.1} parent=1 // loop_body
      %s25 = ssub.s32 %s20, 1
      %s26 = ssub.s32 %s20, 2
      %s27 = sadd.s32 %s20, 1
      %s29 = sadd.s32 %s28, 1
      %p32 = scmp.eq.s32.totalorder %s20, 1
      %p33 = scmp.ne.s32.totalorder %s28, %s30
      %p34 = scmp.eq.s32.totalorder %s20, 0
      %p35 = por %p33, %p34
      %p36 = scmp.ne.s32.totalorder %s28, %s30
      %p37 = scmp.eq.s32.totalorder %s25, 1
      %p38 = por %p36, %p37
      %p39 = scmp.ne.s32.totalorder %s30, %s31
      %p40 = scmp.eq.s32.totalorder %s25, 0
      %p41 = por %p39, %p40
      %p42 = scmp.ne.s32.totalorder %s30, %s31
      %p43 = scmp.eq.s32.totalorder %s26, 1
      %p44 = por %p42, %p43
      %p46 = scmp.ne.s32.totalorder %s31, %s45
      %p47 = scmp.eq.s32.totalorder %s26, 0
      %p48 = por %p46, %p47
      %s50 = sadd.s32 %s49, 1
      %p53 = scmp.eq.s32.totalorder %s20, 1
      %p54 = scmp.ne.s32.totalorder %s49, %s51
      %p55 = scmp.eq.s32.totalorder %s20, 0
      %p56 = por %p54, %p55
      %p57 = scmp.ne.s32.totalorder %s49, %s51
      %p58 = scmp.eq.s32.totalorder %s25, 1
      %p59 = por %p57, %p58
      %p60 = scmp.ne.s32.totalorder %s51, %s52
      %p61 = scmp.eq.s32.totalorder %s25, 0
      %p62 = por %p60, %p61
      %p63 = scmp.ne.s32.totalorder %s51, %s52
      %p64 = scmp.eq.s32.totalorder %s26, 1
      %p65 = por %p63, %p64
      %p67 = scmp.ne.s32.totalorder %s52, %s66
      %p68 = scmp.eq.s32.totalorder %s26, 0
      %p69 = por %p67, %p68
      %s70 = ssub.s32 %s20, %s27
      %p71 = scmp.eq.s32.totalorder %s70, 0
      %s73 = sadd.s32 %s72, 1
      %s74 = scalar_select %p71, %s72, %s73
      %p77 = pneg %p71
      %p78 = scmp.eq.s32.totalorder %s20, 1
      %p79 = por %p77, %p78
      %p80 = scmp.ne.s32.totalorder %s72, %s75
      %p81 = scmp.eq.s32.totalorder %s20, 0
      %p82 = por %p80, %p81
      %p83 = scmp.ne.s32.totalorder %s72, %s75
      %p84 = scmp.eq.s32.totalorder %s25, 1
      %p85 = por %p83, %p84
      %p86 = scmp.ne.s32.totalorder %s75, %s76
      %p87 = scmp.eq.s32.totalorder %s25, 0
      %p88 = por %p86, %p87
      %p89 = scmp.ne.s32.totalorder %s75, %s76
      %p90 = scmp.eq.s32.totalorder %s26, 1
      %p91 = por %p89, %p90
      %p93 = scmp.ne.s32.totalorder %s76, %s92
      %p94 = scmp.eq.s32.totalorder %s26, 0
      %p95 = por %p93, %p94
      %s97 = sadd.s32 %s96, 1
      %p100 = scmp.eq.s32.totalorder %s20, 1
      %p101 = scmp.ne.s32.totalorder %s96, %s98
      %p102 = scmp.eq.s32.totalorder %s20, 0
      %p103 = por %p101, %p102
      %p104 = scmp.ne.s32.totalorder %s96, %s98
      %p105 = scmp.eq.s32.totalorder %s25, 1
      %p106 = por %p104, %p105
      %p107 = scmp.ne.s32.totalorder %s98, %s99
      %p108 = scmp.eq.s32.totalorder %s25, 0
      %p109 = por %p107, %p108
      %p110 = scmp.ne.s32.totalorder %s98, %s99
      %p111 = scmp.eq.s32.totalorder %s26, 1
      %p112 = por %p110, %p111
      %p114 = scmp.ne.s32.totalorder %s99, %s113
      %p115 = scmp.eq.s32.totalorder %s26, 0
      %p116 = por %p114, %p115
      %s118 = sadd.s32 %s117, 1
      %p121 = scmp.eq.s32.totalorder %s20, 1
      %p122 = scmp.ne.s32.totalorder %s117, %s119
      %p123 = scmp.eq.s32.totalorder %s20, 0
      %p124 = por %p122, %p123
      %p125 = scmp.ne.s32.totalorder %s117, %s119
      %p126 = scmp.eq.s32.totalorder %s25, 1
      %p127 = por %p125, %p126
      %p128 = scmp.ne.s32.totalorder %s119, %s120
      %p129 = scmp.eq.s32.totalorder %s25, 0
      %p130 = por %p128, %p129
      %p131 = scmp.ne.s32.totalorder %s119, %s120
      %p132 = scmp.eq.s32.totalorder %s26, 1
      %p133 = por %p131, %p132
      %p135 = scmp.ne.s32.totalorder %s120, %s134
      %p136 = scmp.eq.s32.totalorder %s26, 0
      %p137 = por %p135, %p136
      %s138 = ssub.s32 %s20, %s27
      %p139 = scmp.eq.s32.totalorder %s138, 0
      %s141 = sadd.s32 %s140, 1
      %s142 = scalar_select %p139, %s140, %s141
      %p145 = pneg %p139
      %p146 = scmp.eq.s32.totalorder %s20, 1
      %p147 = por %p145, %p146
      %p148 = scmp.ne.s32.totalorder %s140, %s143
      %p149 = scmp.eq.s32.totalorder %s20, 0
      %p150 = por %p148, %p149
      %p151 = scmp.ne.s32.totalorder %s140, %s143
      %p152 = scmp.eq.s32.totalorder %s25, 1
      %p153 = por %p151, %p152
      %p154 = scmp.ne.s32.totalorder %s143, %s144
      %p155 = scmp.eq.s32.totalorder %s25, 0
      %p156 = por %p154, %p155
      %p157 = scmp.ne.s32.totalorder %s143, %s144
      %p158 = scmp.eq.s32.totalorder %s26, 1
      %p159 = por %p157, %p158
      %p161 = scmp.ne.s32.totalorder %s144, %s160
      %p162 = scmp.eq.s32.totalorder %s26, 0
      %p163 = por %p161, %p162
      %p164 = scmp.le.s32.totalorder 1, %s20
      %p165 = scmp.lt.s32.totalorder %s20, 3
      %p166 = pnand %p164, %p165
      %p167 = pneg %p166
      // Predicated region
      $region9: #{tpu_custom_call.1} parent=5 // pred_check
        _
      $region10: #{tpu_custom_call.1} parent=5 // pred_check_branch
        %169 = sbr.rel (%p166) target = $region12
      $region11: #{tpu_custom_call.1} parent=5 // pred_region
        %s170 = ssub.s32 %s20, 1
        // Predicated region
        $region13: #{tpu_custom_call.1} parent=11 // pred_check
          %p171 = pneg %p41
        $region14: #{tpu_custom_call.1} parent=11 // pred_check_branch
          %173 = sbr.rel (%p171) target = $region16
        $region15: #{tpu_custom_call.1} parent=11 // pred_region
          %175 = vsyncadd [#allocation7], 0
          %s176 = sshll.u32 %s0, 4
          %s177 = int_to_ptr.vmem [resolvable:$true] %s176
          %182 = dma.vmem_to_smem %s177, 256, [#allocation4], [#allocation7], 128, 128, 8
        $region16: #{tpu_custom_call.1} parent=11 // pred_fallthru
          _
        // Predicated region
        $region17: #{tpu_custom_call.1} parent=11 // pred_check
          %p183 = pneg %p62
        $region18: #{tpu_custom_call.1} parent=11 // pred_check_branch
          %185 = sbr.rel (%p183) target = $region20
        $region19: #{tpu_custom_call.1} parent=11 // pred_region
          %187 = vsyncadd [#allocation9], 0
          %s188 = sshll.u32 %s1, 4
          %s189 = int_to_ptr.vmem [resolvable:$true] %s188
          %194 = dma.vmem_to_smem %s189, 256, [#allocation8], [#allocation9], 128, 128, 8
        $region20: #{tpu_custom_call.1} parent=11 // pred_fallthru
          _
        // Predicated region
        $region21: #{tpu_custom_call.1} parent=11 // pred_check
          %p195 = pneg %p109
        $region22: #{tpu_custom_call.1} parent=11 // pred_check_branch
          %197 = sbr.rel (%p195) target = $region24
        $region23: #{tpu_custom_call.1} parent=11 // pred_region
          %199 = vsyncadd [#allocation12], 0
          %s200 = sshll.u32 %s3, 4
          %s201 = int_to_ptr.hbm [resolvable:$true] %s200
          %s202 = sshll.u32 [#allocation11], 4
          %s203 = int_to_ptr.vmem [resolvable:$true] %s202
          %208 = dma.hbm_to_vmem [thread:$0]  %s201, 46080, %s203, [#allocation12], 128, 128, 8
        $region24: #{tpu_custom_call.1} parent=11 // pred_fallthru
          _
        // Predicated region
        $region25: #{tpu_custom_call.1} parent=11 // pred_check
          %p209 = pneg %p130
        $region26: #{tpu_custom_call.1} parent=11 // pred_check_branch
          %211 = sbr.rel (%p209) target = $region28
        $region27: #{tpu_custom_call.1} parent=11 // pred_region
          %213 = vsyncadd [#allocation12], 0
          %s214 = sshll.u32 %s4, 4
          %s215 = int_to_ptr.hbm [resolvable:$true] %s214
          %s216 = sshll.u32 [#allocation13], 4
          %s217 = int_to_ptr.vmem [resolvable:$true] %s216
          %222 = dma.hbm_to_vmem [thread:$0]  %s215, 144, %s217, [#allocation12], 16, 16, 1
        $region28: #{tpu_custom_call.1} parent=11 // pred_fallthru
          _
      $region12: #{tpu_custom_call.1} parent=5 // pred_fallthru
        _
      %p223 = scmp.lt.s32.totalorder %s20, 2
      // Predicated region
      $region29: #{tpu_custom_call.1} parent=5 // pred_check
        %p224 = pneg %p223
      $region30: #{tpu_custom_call.1} parent=5 // pred_check_branch
        %226 = sbr.rel (%p224) target = $region32
      $region31: #{tpu_custom_call.1} parent=5 // pred_region
        // Predicated region
        $region33: #{tpu_custom_call.1} parent=31 // pred_check
          %p227 = pneg %p82
        $region34: #{tpu_custom_call.1} parent=31 // pred_check_branch
          %229 = sbr.rel (%p227) target = $region36
        $region35: #{tpu_custom_call.1} parent=31 // pred_region
          %s230 = sand.u32 %s72, 1
          %s231 = scalar_lea.sflag [#allocation5], %s230
          %s232 = sand.u32 %s72, 1
          %s233 = smul.addr %s232, 64
          %s234 = scalar_lea.vmem [#allocation10], %s233
          %236 = vsyncadd %s231, 0
          %s237 = smul.addr %s20, 8
          %s238 = smul.addr %s237, 8
          %s239 = scalar_lea.hbm %s2, %s238
          %s240 = sshll.u32 %s239, 4
          %s241 = int_to_ptr.hbm [resolvable:$true] %s240
          %s242 = sshll.u32 %s234, 4
          %s243 = int_to_ptr.vmem [resolvable:$true] %s242
          %248 = dma.hbm_to_vmem [thread:$0]  %s241, 1024, %s243, %s231, 128, 128, 8
        $region36: #{tpu_custom_call.1} parent=31 // pred_fallthru
          _
      $region32: #{tpu_custom_call.1} parent=5 // pred_fallthru
        _
      %p249 = scmp.le.s32.totalorder 1, %s20
      %p250 = scmp.lt.s32.totalorder %s20, 3
      %p251 = pnand %p249, %p250
      %p252 = pneg %p251
      // Predicated region
      $region37: #{tpu_custom_call.1} parent=5 // pred_check
        _
      $region38: #{tpu_custom_call.1} parent=5 // pred_check_branch
        %254 = sbr.rel (%p251) target = $region40
      $region39: #{tpu_custom_call.1} parent=5 // pred_region
        %s255 = ssub.s32 %s20, 1
        // Predicated region
        $region41: #{tpu_custom_call.1} parent=39 // pred_check
          %p256 = pneg %p41
        $region42: #{tpu_custom_call.1} parent=39 // pred_check_branch
          %258 = sbr.rel (%p256) target = $region44
        $region43: #{tpu_custom_call.1} parent=39 // pred_region
          %260 = dma.done [#allocation7], 256
        $region44: #{tpu_custom_call.1} parent=39 // pred_fallthru
          _
        // Predicated region
        $region45: #{tpu_custom_call.1} parent=39 // pred_check
          %p261 = pneg %p62
        $region46: #{tpu_custom_call.1} parent=39 // pred_check_branch
          %263 = sbr.rel (%p261) target = $region48
        $region47: #{tpu_custom_call.1} parent=39 // pred_region
          %265 = dma.done [#allocation9], 256
        $region48: #{tpu_custom_call.1} parent=39 // pred_fallthru
          _
        %s266 = sand.u32 %s75, 1
        %s267 = scalar_lea.sflag [#allocation5], %s266
        %s268 = sand.u32 %s75, 1
        %s269 = smul.addr %s268, 64
        %s270 = scalar_lea.vmem [#allocation10], %s269
        // Predicated region
        $region49: #{tpu_custom_call.1} parent=39 // pred_check
          %p271 = pneg %p88
        $region50: #{tpu_custom_call.1} parent=39 // pred_check_branch
          %273 = sbr.rel (%p271) target = $region52
        $region51: #{tpu_custom_call.1} parent=39 // pred_region
          %275 = dma.done %s267, 1024
        $region52: #{tpu_custom_call.1} parent=39 // pred_fallthru
          _
        // Predicated region
        $region53: #{tpu_custom_call.1} parent=39 // pred_check
          %p276 = pneg %p109
        $region54: #{tpu_custom_call.1} parent=39 // pred_check_branch
          %278 = sbr.rel (%p276) target = $region56
        $region55: #{tpu_custom_call.1} parent=39 // pred_region
          %280 = dma.done [#allocation12], 46080
        $region56: #{tpu_custom_call.1} parent=39 // pred_fallthru
          _
        // Predicated region
        $region57: #{tpu_custom_call.1} parent=39 // pred_check
          %p281 = pneg %p130
        $region58: #{tpu_custom_call.1} parent=39 // pred_check_branch
          %283 = sbr.rel (%p281) target = $region60
        $region59: #{tpu_custom_call.1} parent=39 // pred_region
          %285 = dma.done [#allocation12], 144
        $region60: #{tpu_custom_call.1} parent=39 // pred_fallthru
          _
        %286 = sfence
        %p287 = pneg %p41
        %p288 = pneg %p38
        %p289 = pneg %p62
        %p290 = pneg %p59
        %s291 = sand.u32 %s75, 1
        %s292 = scalar_lea.sflag [#allocation5], %s291
        %s293 = sand.u32 %s75, 1
        %s294 = smul.addr %s293, 64
        %s295 = scalar_lea.vmem [#allocation10], %s294
        %p296 = pneg %p88
        %p297 = pneg %p85
        %p298 = pneg %p109
        %p299 = pneg %p106
        %p300 = pneg %p130
        %p301 = pneg %p127
        %p302 = pneg %p156
        %p303 = pneg %p153
        %s304 = sand.u32 %s143, 1
        %s305 = scalar_lea.sflag [#allocation6], %s304
        %s306 = sand.u32 %s143, 1
        %s307 = smul.addr %s306, 64
        %s308 = scalar_lea.vmem [#allocation14], %s307
        %s310 = sld [smem:[#allocation4 + $0x1]]
        %s311 = sld [smem:[#allocation4 + $0x81]]
        %s312 = sld [smem:[#allocation4 + $0x101]]
        %s313 = smul.f32 %s312, %s310
        %s314 = sadd.f32 %s311, %s313
        %s315 = sld [smem:[#allocation4 + $0x181]]
        %s316 = sld [smem:[#allocation4 + $0x201]]
        %s317 = smul.f32 %s316, %s310
        %s318 = sadd.f32 %s315, %s317
        %s319 = sld [smem:[#allocation4 + $0x281]]
        %s320 = smul.f32 %s319, %s314
        %s321 = sadd.f32 %s318, %s320
        %s322 = sld [smem:[#allocation4 + $0x301]]
        %s323 = sld [smem:[#allocation4 + $0x381]]
        %s324 = smul.f32 %s323, %s310
        %s325 = sadd.f32 %s322, %s324
        %s326 = sld [smem:[#allocation4 + $0x401]]
        %s327 = smul.f32 %s326, %s314
        %s328 = sadd.f32 %s325, %s327
        %s329 = sld [smem:[#allocation4 + $0x481]]
        %s330 = smul.f32 %s329, %s321
        %s331 = sadd.f32 %s328, %s330
        %s332 = sld [smem:[#allocation4 + $0x501]]
        %s333 = sld [smem:[#allocation4 + $0x581]]
        %s334 = smul.f32 %s333, %s310
        %s335 = sadd.f32 %s332, %s334
        %s336 = sld [smem:[#allocation4 + $0x601]]
        %s337 = smul.f32 %s336, %s314
        %s338 = sadd.f32 %s335, %s337
        %s339 = sld [smem:[#allocation4 + $0x681]]
        %s340 = smul.f32 %s339, %s321
        %s341 = sadd.f32 %s338, %s340
        %s342 = sld [smem:[#allocation4 + $0x701]]
        %s343 = smul.f32 %s342, %s331
        %s344 = sadd.f32 %s341, %s343
        %s345 = sadd.f32 %s310, %s314
        %s346 = sadd.f32 %s345, %s321
        %s347 = sadd.f32 %s346, %s331
        %s348 = sadd.f32 %s347, %s344
        %s349 = sld [smem:[#allocation8 + $0x1]]
        %s350 = sld [smem:[#allocation8 + $0x81]]
        %s351 = sld [smem:[#allocation8 + $0x101]]
        %s352 = smul.f32 %s351, %s349
        %s353 = sadd.f32 %s350, %s352
        %s354 = sld [smem:[#allocation8 + $0x181]]
        %s355 = sld [smem:[#allocation8 + $0x201]]
        %s356 = smul.f32 %s355, %s349
        %s357 = sadd.f32 %s354, %s356
        %s358 = sld [smem:[#allocation8 + $0x281]]
        %s359 = smul.f32 %s358, %s353
        %s360 = sadd.f32 %s357, %s359
        %s361 = sld [smem:[#allocation8 + $0x301]]
        %s362 = sld [smem:[#allocation8 + $0x381]]
        %s363 = smul.f32 %s362, %s349
        %s364 = sadd.f32 %s361, %s363
        %s365 = sld [smem:[#allocation8 + $0x401]]
        %s366 = smul.f32 %s365, %s353
        %s367 = sadd.f32 %s364, %s366
        %s368 = sld [smem:[#allocation8 + $0x481]]
        %s369 = smul.f32 %s368, %s360
        %s370 = sadd.f32 %s367, %s369
        %s371 = sld [smem:[#allocation8 + $0x501]]
        %s372 = sld [smem:[#allocation8 + $0x581]]
        %s373 = smul.f32 %s372, %s349
        %s374 = sadd.f32 %s371, %s373
        %s375 = sld [smem:[#allocation8 + $0x601]]
        %s376 = smul.f32 %s375, %s353
        %s377 = sadd.f32 %s374, %s376
        %s378 = sld [smem:[#allocation8 + $0x681]]
        %s379 = smul.f32 %s378, %s360
        %s380 = sadd.f32 %s377, %s379
        %s381 = sld [smem:[#allocation8 + $0x701]]
        %s382 = smul.f32 %s381, %s370
        %s383 = sadd.f32 %s380, %s382
        %s384 = smul.f32 %s349, %s348
        %s385 = smul.f32 %s353, %s348
        %s386 = smul.f32 %s360, %s348
        %s387 = smul.f32 %s370, %s348
        %s388 = smul.f32 %s383, %s348
        %v389 = vld [vmem:[%s270] sm:$0xff]
        %v390 = vld [vmem:[%s270 + $0x8] sm:$0xff]
        %v391 = vld [vmem:[%s270 + $0x10] sm:$0xff]
        %v392 = vld [vmem:[%s270 + $0x18] sm:$0xff]
        %v393 = vld [vmem:[%s270 + $0x20] sm:$0xff]
        %v394 = vld [vmem:[%s270 + $0x28] sm:$0xff]
        %v395 = vld [vmem:[%s270 + $0x30] sm:$0xff]
        %v396 = vld [vmem:[%s270 + $0x38] sm:$0xff]
        %vm397 = vcmask 523264
        %398 = vst.msk [vmem:[#allocation2] sm:$0xff] %vm397, 0.0
        %vm399 = vcmask 517120
        %400 = vst.msk [vmem:[#allocation2 + $0x8] sm:$0x3] %vm399, 0.0
        %401 = vst.msk [vmem:[#allocation2 + $0x10] sm:$0xff] %vm397, 0.0
        %402 = vst.msk [vmem:[#allocation2 + $0x18] sm:$0x3] %vm399, 0.0
        %403 = vst.msk [vmem:[#allocation2 + $0x20] sm:$0xff] %vm397, 0.0
        %404 = vst.msk [vmem:[#allocation2 + $0x28] sm:$0x3] %vm399, 0.0
        %405 = vst.msk [vmem:[#allocation2 + $0x30] sm:$0xff] %vm397, 0.0
        %406 = vst.msk [vmem:[#allocation2 + $0x38] sm:$0x3] %vm399, 0.0
        %407 = vst.msk [vmem:[#allocation2 + $0x40] sm:$0xff] %vm397, 0.0
        %408 = vst.msk [vmem:[#allocation2 + $0x48] sm:$0x3] %vm399, 0.0
        %409 = vst.msk [vmem:[#allocation2 + $0x50] sm:$0xff] %vm397, 0.0
        %410 = vst.msk [vmem:[#allocation2 + $0x58] sm:$0x3] %vm399, 0.0
        %411 = vst.msk [vmem:[#allocation2 + $0x60] sm:$0xff] %vm397, 0.0
        %412 = vst.msk [vmem:[#allocation2 + $0x68] sm:$0x3] %vm399, 0.0
        %413 = vst.msk [vmem:[#allocation2 + $0x70] sm:$0xff] %vm397, 0.0
        %414 = vst.msk [vmem:[#allocation2 + $0x78] sm:$0x3] %vm399, 0.0
        %415 = vst.msk [vmem:[#allocation2 + $0x80] sm:$0xff] %vm397, 0.0
        %416 = vst.msk [vmem:[#allocation2 + $0x88] sm:$0x3] %vm399, 0.0
        %417 = vst.msk [vmem:[#allocation2 + $0x90] sm:$0xff] %vm397, 0.0
        %418 = vst.msk [vmem:[#allocation2 + $0x98] sm:$0x3] %vm399, 0.0
        %s419 = scalar_lea.vmem [#allocation2], 16
        %420 = vst.msk [vmem:[%s419 + $0x1] sm:$0xff] %vm397, %v389
        %421 = vst.msk [vmem:[%s419 + $0x11] sm:$0xff] %vm397, %v390
        %422 = vst.msk [vmem:[%s419 + $0x21] sm:$0xff] %vm397, %v391
        %423 = vst.msk [vmem:[%s419 + $0x31] sm:$0xff] %vm397, %v392
        %424 = vst.msk [vmem:[%s419 + $0x41] sm:$0xff] %vm397, %v393
        %425 = vst.msk [vmem:[%s419 + $0x51] sm:$0xff] %vm397, %v394
        %426 = vst.msk [vmem:[%s419 + $0x61] sm:$0xff] %vm397, %v395
        %427 = vst.msk [vmem:[%s419 + $0x71] sm:$0xff] %vm397, %v396
        %v428 = vld [vmem:[#allocation11] sm:$0xff]
        %v429 = vld [vmem:[#allocation11 + $0x8] sm:$0xff]
        %v430 = vld [vmem:[#allocation11 + $0x10] sm:$0xff]
        %v431 = vld [vmem:[#allocation11 + $0x18] sm:$0xff]
        %v432 = vld [vmem:[#allocation11 + $0x20] sm:$0xff]
        %v433 = vld [vmem:[#allocation11 + $0x28] sm:$0xff]
        %v434 = vld [vmem:[#allocation11 + $0x30] sm:$0xff]
        %v435 = vld [vmem:[#allocation11 + $0x38] sm:$0xff]
        %v436 = vstv %s384
        %v437 = vmul.f32 %v436, %v428
        %v438 = vmul.f32 %v436, %v429
        %v439 = vmul.f32 %v436, %v430
        %v440 = vmul.f32 %v436, %v431
        %v441 = vmul.f32 %v436, %v432
        %v442 = vmul.f32 %v436, %v433
        %v443 = vmul.f32 %v436, %v434
        %v444 = vmul.f32 %v436, %v435
        %s445 = scalar_lea.vmem [#allocation11], 64
        %v446 = vld [vmem:[%s445] sm:$0xff]
        %v447 = vld [vmem:[%s445 + $0x8] sm:$0xff]
        %v448 = vld [vmem:[%s445 + $0x10] sm:$0xff]
        %v449 = vld [vmem:[%s445 + $0x18] sm:$0xff]
        %v450 = vld [vmem:[%s445 + $0x20] sm:$0xff]
        %v451 = vld [vmem:[%s445 + $0x28] sm:$0xff]
        %v452 = vld [vmem:[%s445 + $0x30] sm:$0xff]
        %v453 = vld [vmem:[%s445 + $0x38] sm:$0xff]
        %v454 = vstv %s385
        %v455 = vmul.f32 %v454, %v446
        %v456 = vmul.f32 %v454, %v447
        %v457 = vmul.f32 %v454, %v448
        %v458 = vmul.f32 %v454, %v449
        %v459 = vmul.f32 %v454, %v450
        %v460 = vmul.f32 %v454, %v451
        %v461 = vmul.f32 %v454, %v452
        %v462 = vmul.f32 %v454, %v453
        %v463 = vadd.f32 %v437, %v455
        %v464 = vadd.f32 %v438, %v456
        %v465 = vadd.f32 %v439, %v457
        %v466 = vadd.f32 %v440, %v458
        %v467 = vadd.f32 %v441, %v459
        %v468 = vadd.f32 %v442, %v460
        %v469 = vadd.f32 %v443, %v461
        %v470 = vadd.f32 %v444, %v462
        %s471 = scalar_lea.vmem [#allocation11], 128
        %v472 = vld [vmem:[%s471] sm:$0xff]
        %v473 = vld [vmem:[%s471 + $0x8] sm:$0xff]
        %v474 = vld [vmem:[%s471 + $0x10] sm:$0xff]
        %v475 = vld [vmem:[%s471 + $0x18] sm:$0xff]
        %v476 = vld [vmem:[%s471 + $0x20] sm:$0xff]
        %v477 = vld [vmem:[%s471 + $0x28] sm:$0xff]
        %v478 = vld [vmem:[%s471 + $0x30] sm:$0xff]
        %v479 = vld [vmem:[%s471 + $0x38] sm:$0xff]
        %v480 = vstv %s386
        %v481 = vmul.f32 %v480, %v472
        %v482 = vmul.f32 %v480, %v473
        %v483 = vmul.f32 %v480, %v474
        %v484 = vmul.f32 %v480, %v475
        %v485 = vmul.f32 %v480, %v476
        %v486 = vmul.f32 %v480, %v477
        %v487 = vmul.f32 %v480, %v478
        %v488 = vmul.f32 %v480, %v479
        %v489 = vadd.f32 %v463, %v481
        %v490 = vadd.f32 %v464, %v482
        %v491 = vadd.f32 %v465, %v483
        %v492 = vadd.f32 %v466, %v484
        %v493 = vadd.f32 %v467, %v485
        %v494 = vadd.f32 %v468, %v486
        %v495 = vadd.f32 %v469, %v487
        %v496 = vadd.f32 %v470, %v488
        %s497 = scalar_lea.vmem [#allocation11], 192
        %v498 = vld [vmem:[%s497] sm:$0xff]
        %v499 = vld [vmem:[%s497 + $0x8] sm:$0xff]
        %v500 = vld [vmem:[%s497 + $0x10] sm:$0xff]
        %v501 = vld [vmem:[%s497 + $0x18] sm:$0xff]
        %v502 = vld [vmem:[%s497 + $0x20] sm:$0xff]
        %v503 = vld [vmem:[%s497 + $0x28] sm:$0xff]
        %v504 = vld [vmem:[%s497 + $0x30] sm:$0xff]
        %v505 = vld [vmem:[%s497 + $0x38] sm:$0xff]
        %v506 = vstv %s387
        %v507 = vmul.f32 %v506, %v498
        %v508 = vmul.f32 %v506, %v499
        %v509 = vmul.f32 %v506, %v500
        %v510 = vmul.f32 %v506, %v501
        %v511 = vmul.f32 %v506, %v502
        %v512 = vmul.f32 %v506, %v503
        %v513 = vmul.f32 %v506, %v504
        %v514 = vmul.f32 %v506, %v505
        %v515 = vadd.f32 %v489, %v507
        %v516 = vadd.f32 %v490, %v508
        %v517 = vadd.f32 %v491, %v509
        %v518 = vadd.f32 %v492, %v510
        %v519 = vadd.f32 %v493, %v511
        %v520 = vadd.f32 %v494, %v512
        %v521 = vadd.f32 %v495, %v513
        %v522 = vadd.f32 %v496, %v514
        %s523 = scalar_lea.vmem [#allocation11], 256
        %v524 = vld [vmem:[%s523] sm:$0xff]
        %v525 = vld [vmem:[%s523 + $0x8] sm:$0xff]
        %v526 = vld [vmem:[%s523 + $0x10] sm:$0xff]
        %v527 = vld [vmem:[%s523 + $0x18] sm:$0xff]
        %v528 = vld [vmem:[%s523 + $0x20] sm:$0xff]
        %v529 = vld [vmem:[%s523 + $0x28] sm:$0xff]
        %v530 = vld [vmem:[%s523 + $0x30] sm:$0xff]
        %v531 = vld [vmem:[%s523 + $0x38] sm:$0xff]
        %v532 = vstv %s388
        %v533 = vmul.f32 %v532, %v524
        %v534 = vmul.f32 %v532, %v525
        %v535 = vmul.f32 %v532, %v526
        %v536 = vmul.f32 %v532, %v527
        %v537 = vmul.f32 %v532, %v528
        %v538 = vmul.f32 %v532, %v529
        %v539 = vmul.f32 %v532, %v530
        %v540 = vmul.f32 %v532, %v531
        %v541 = vadd.f32 %v515, %v533
        %v542 = vadd.f32 %v516, %v534
        %v543 = vadd.f32 %v517, %v535
        %v544 = vadd.f32 %v518, %v536
        %v545 = vadd.f32 %v519, %v537
        %v546 = vadd.f32 %v520, %v538
        %v547 = vadd.f32 %v521, %v539
        %v548 = vadd.f32 %v522, %v540
        %v549 = vld [vmem:[#allocation2] sm:$0xff]
        %v550 = vld [vmem:[#allocation2 + $0x10] sm:$0xff]
        %v551 = vld [vmem:[#allocation2 + $0x20] sm:$0xff]
        %v552 = vld [vmem:[#allocation2 + $0x30] sm:$0xff]
        %v553 = vld [vmem:[#allocation2 + $0x40] sm:$0xff]
        %v554 = vld [vmem:[#allocation2 + $0x50] sm:$0xff]
        %v555 = vld [vmem:[#allocation2 + $0x60] sm:$0xff]
        %v556 = vld [vmem:[#allocation2 + $0x70] sm:$0xff]
        %v557 = vpack.c.bf16 %v550, %v549
        %v558 = vpack.c.bf16 %v552, %v551
        %v559 = vpack.c.bf16 %v554, %v553
        %v560 = vpack.c.bf16 %v556, %v555
        %v561 = vpack.c.bf16 %v542, %v541
        %v562 = vpack.c.bf16 %v544, %v543
        %v563 = vpack.c.bf16 %v546, %v545
        %v564 = vpack.c.bf16 %v548, %v547
        %s565 = scalar_lea.vmem [#allocation11], 320
        %v566 = vld [vmem:[%s565] sm:$0xff]
        %v567 = vld [vmem:[%s565 + $0x8] sm:$0xff]
        %v568 = vld [vmem:[%s565 + $0x10] sm:$0xff]
        %v569 = vld [vmem:[%s565 + $0x18] sm:$0xff]
        %v570 = vld [vmem:[%s565 + $0x20] sm:$0xff]
        %v571 = vld [vmem:[%s565 + $0x28] sm:$0xff]
        %v572 = vld [vmem:[%s565 + $0x30] sm:$0xff]
        %v573 = vld [vmem:[%s565 + $0x38] sm:$0xff]
        %v574 = vmul.f32 %v436, %v566
        %v575 = vmul.f32 %v436, %v567
        %v576 = vmul.f32 %v436, %v568
        %v577 = vmul.f32 %v436, %v569
        %v578 = vmul.f32 %v436, %v570
        %v579 = vmul.f32 %v436, %v571
        %v580 = vmul.f32 %v436, %v572
        %v581 = vmul.f32 %v436, %v573
        %s582 = scalar_lea.vmem [#allocation11], 384
        %v583 = vld [vmem:[%s582] sm:$0xff]
        %v584 = vld [vmem:[%s582 + $0x8] sm:$0xff]
        %v585 = vld [vmem:[%s582 + $0x10] sm:$0xff]
        %v586 = vld [vmem:[%s582 + $0x18] sm:$0xff]
        %v587 = vld [vmem:[%s582 + $0x20] sm:$0xff]
        %v588 = vld [vmem:[%s582 + $0x28] sm:$0xff]
        %v589 = vld [vmem:[%s582 + $0x30] sm:$0xff]
        %v590 = vld [vmem:[%s582 + $0x38] sm:$0xff]
        %v591 = vmul.f32 %v454, %v583
        %v592 = vmul.f32 %v454, %v584
        %v593 = vmul.f32 %v454, %v585
        %v594 = vmul.f32 %v454, %v586
        %v595 = vmul.f32 %v454, %v587
        %v596 = vmul.f32 %v454, %v588
        %v597 = vmul.f32 %v454, %v589
        %v598 = vmul.f32 %v454, %v590
        %v599 = vadd.f32 %v574, %v591
        %v600 = vadd.f32 %v575, %v592
        %v601 = vadd.f32 %v576, %v593
        %v602 = vadd.f32 %v577, %v594
        %v603 = vadd.f32 %v578, %v595
        %v604 = vadd.f32 %v579, %v596
        %v605 = vadd.f32 %v580, %v597
        %v606 = vadd.f32 %v581, %v598
        %s607 = scalar_lea.vmem [#allocation11], 448
        %v608 = vld [vmem:[%s607] sm:$0xff]
        %v609 = vld [vmem:[%s607 + $0x8] sm:$0xff]
        %v610 = vld [vmem:[%s607 + $0x10] sm:$0xff]
        %v611 = vld [vmem:[%s607 + $0x18] sm:$0xff]
        %v612 = vld [vmem:[%s607 + $0x20] sm:$0xff]
        %v613 = vld [vmem:[%s607 + $0x28] sm:$0xff]
        %v614 = vld [vmem:[%s607 + $0x30] sm:$0xff]
        %v615 = vld [vmem:[%s607 + $0x38] sm:$0xff]
        %v616 = vmul.f32 %v480, %v608
        %v617 = vmul.f32 %v480, %v609
        %v618 = vmul.f32 %v480, %v610
        %v619 = vmul.f32 %v480, %v611
        %v620 = vmul.f32 %v480, %v612
        %v621 = vmul.f32 %v480, %v613
        %v622 = vmul.f32 %v480, %v614
        %v623 = vmul.f32 %v480, %v615
        %v624 = vadd.f32 %v599, %v616
        %v625 = vadd.f32 %v600, %v617
        %v626 = vadd.f32 %v601, %v618
        %v627 = vadd.f32 %v602, %v619
        %v628 = vadd.f32 %v603, %v620
        %v629 = vadd.f32 %v604, %v621
        %v630 = vadd.f32 %v605, %v622
        %v631 = vadd.f32 %v606, %v623
        %s632 = scalar_lea.vmem [#allocation11], 512
        %v633 = vld [vmem:[%s632] sm:$0xff]
        %v634 = vld [vmem:[%s632 + $0x8] sm:$0xff]
        %v635 = vld [vmem:[%s632 + $0x10] sm:$0xff]
        %v636 = vld [vmem:[%s632 + $0x18] sm:$0xff]
        %v637 = vld [vmem:[%s632 + $0x20] sm:$0xff]
        %v638 = vld [vmem:[%s632 + $0x28] sm:$0xff]
        %v639 = vld [vmem:[%s632 + $0x30] sm:$0xff]
        %v640 = vld [vmem:[%s632 + $0x38] sm:$0xff]
        %v641 = vmul.f32 %v506, %v633
        %v642 = vmul.f32 %v506, %v634
        %v643 = vmul.f32 %v506, %v635
        %v644 = vmul.f32 %v506, %v636
        %v645 = vmul.f32 %v506, %v637
        %v646 = vmul.f32 %v506, %v638
        %v647 = vmul.f32 %v506, %v639
        %v648 = vmul.f32 %v506, %v640
        %v649 = vadd.f32 %v624, %v641
        %v650 = vadd.f32 %v625, %v642
        %v651 = vadd.f32 %v626, %v643
        %v652 = vadd.f32 %v627, %v644
        %v653 = vadd.f32 %v628, %v645
        %v654 = vadd.f32 %v629, %v646
        %v655 = vadd.f32 %v630, %v647
        %v656 = vadd.f32 %v631, %v648
        %s657 = scalar_lea.vmem [#allocation11], 576
        %v658 = vld [vmem:[%s657] sm:$0xff]
        %v659 = vld [vmem:[%s657 + $0x8] sm:$0xff]
        %v660 = vld [vmem:[%s657 + $0x10] sm:$0xff]
        %v661 = vld [vmem:[%s657 + $0x18] sm:$0xff]
        %v662 = vld [vmem:[%s657 + $0x20] sm:$0xff]
        %v663 = vld [vmem:[%s657 + $0x28] sm:$0xff]
        %v664 = vld [vmem:[%s657 + $0x30] sm:$0xff]
        %v665 = vld [vmem:[%s657 + $0x38] sm:$0xff]
        %v666 = vmul.f32 %v532, %v658
        %v667 = vmul.f32 %v532, %v659
        %v668 = vmul.f32 %v532, %v660
        %v669 = vmul.f32 %v532, %v661
        %v670 = vmul.f32 %v532, %v662
        %v671 = vmul.f32 %v532, %v663
        %v672 = vmul.f32 %v532, %v664
        %v673 = vmul.f32 %v532, %v665
        %v674 = vadd.f32 %v649, %v666
        %v675 = vadd.f32 %v650, %v667
        %v676 = vadd.f32 %v651, %v668
        %v677 = vadd.f32 %v652, %v669
        %v678 = vadd.f32 %v653, %v670
        %v679 = vadd.f32 %v654, %v671
        %v680 = vadd.f32 %v655, %v672
        %v681 = vadd.f32 %v656, %v673
        %v682 = vld [vmem:[#allocation2 + $0x1] sm:$0xff]
        %v683 = vld [vmem:[#allocation2 + $0x11] sm:$0xff]
        %v684 = vld [vmem:[#allocation2 + $0x21] sm:$0xff]
        %v685 = vld [vmem:[#allocation2 + $0x31] sm:$0xff]
        %v686 = vld [vmem:[#allocation2 + $0x41] sm:$0xff]
        %v687 = vld [vmem:[#allocation2 + $0x51] sm:$0xff]
        %v688 = vld [vmem:[#allocation2 + $0x61] sm:$0xff]
        %v689 = vld [vmem:[#allocation2 + $0x71] sm:$0xff]
        %v690 = vpack.c.bf16 %v683, %v682
        %v691 = vpack.c.bf16 %v685, %v684
        %v692 = vpack.c.bf16 %v687, %v686
        %v693 = vpack.c.bf16 %v689, %v688
        %v694 = vpack.c.bf16 %v675, %v674
        %v695 = vpack.c.bf16 %v677, %v676
        %v696 = vpack.c.bf16 %v679, %v678
        %v697 = vpack.c.bf16 %v681, %v680
        %v699 = vsel %vm397, %v690, 0
        %v702 = vsel %vm397, %v691, 0
        %v705 = vsel %vm397, %v692, 0
        %v708 = vsel %vm397, %v693, 0
        %710 = vmatpush.bf16.msra.mxu0 0
        %711 = vmatpush.bf16.msra.mxu0 0
        %712 = vmatpush.bf16.msra.mxu0 0
        %713 = vmatpush.bf16.msra.mxu0 0
        %714 = vmatpush.bf16.msra.mxu0 %v697
        %715 = vmatpush.bf16.msra.mxu0 %v696
        %716 = vmatpush.bf16.msra.mxu0 %v695
        %717 = vmatpush.bf16.msra.mxu0 %v694
        %718 = vmatmul.bf16.gmra.mxu0 %v699
        %v719 = vpop.f32.mrf.mxu0
        %v720 = vadd.f32 0.0, %v719
        %v721 = vpop.f32.mrf.mxu0
        %v722 = vadd.f32 0.0, %v721
        %723 = vmatmul.bf16.gmra.mxu0 %v702
        %v724 = vpop.f32.mrf.mxu0
        %v725 = vadd.f32 0.0, %v724
        %v726 = vpop.f32.mrf.mxu0
        %v727 = vadd.f32 0.0, %v726
        %728 = vmatmul.bf16.gmra.mxu0 %v705
        %v729 = vpop.f32.mrf.mxu0
        %v730 = vadd.f32 0.0, %v729
        %v731 = vpop.f32.mrf.mxu0
        %v732 = vadd.f32 0.0, %v731
        %733 = vmatmul.bf16.gmra.mxu0 %v708
        %v734 = vpop.f32.mrf.mxu0
        %v735 = vadd.f32 0.0, %v734
        %v736 = vpop.f32.mrf.mxu0
        %v737 = vadd.f32 0.0, %v736
        %738 = vdwg.mxu0
        %v740 = vsel %vm397, %v557, 0
        %v743 = vsel %vm397, %v558, 0
        %v746 = vsel %vm397, %v559, 0
        %v749 = vsel %vm397, %v560, 0
        %751 = vmatpush.bf16.msra.mxu0 0
        %752 = vmatpush.bf16.msra.mxu0 0
        %753 = vmatpush.bf16.msra.mxu0 0
        %754 = vmatpush.bf16.msra.mxu0 0
        %755 = vmatpush.bf16.msra.mxu0 %v564
        %756 = vmatpush.bf16.msra.mxu0 %v563
        %757 = vmatpush.bf16.msra.mxu0 %v562
        %758 = vmatpush.bf16.msra.mxu0 %v561
        %759 = vmatmul.bf16.gmra.mxu0 %v740
        %v760 = vpop.f32.mrf.mxu0
        %v761 = vadd.f32 %v720, %v760
        %v762 = vpop.f32.mrf.mxu0
        %v763 = vadd.f32 %v722, %v762
        %764 = vmatmul.bf16.gmra.mxu0 %v743
        %v765 = vpop.f32.mrf.mxu0
        %v766 = vadd.f32 %v725, %v765
        %v767 = vpop.f32.mrf.mxu0
        %v768 = vadd.f32 %v727, %v767
        %769 = vmatmul.bf16.gmra.mxu0 %v746
        %v770 = vpop.f32.mrf.mxu0
        %v771 = vadd.f32 %v730, %v770
        %v772 = vpop.f32.mrf.mxu0
        %v773 = vadd.f32 %v732, %v772
        %774 = vmatmul.bf16.gmra.mxu0 %v749
        %v775 = vpop.f32.mrf.mxu0
        %v776 = vadd.f32 %v735, %v775
        %v777 = vpop.f32.mrf.mxu0
        %v778 = vadd.f32 %v737, %v777
        %779 = vdwg.mxu0
        %s780 = scalar_lea.vmem [#allocation11], 640
        %v781 = vld [vmem:[%s780] sm:$0xff]
        %v782 = vld [vmem:[%s780 + $0x8] sm:$0xff]
        %v783 = vld [vmem:[%s780 + $0x10] sm:$0xff]
        %v784 = vld [vmem:[%s780 + $0x18] sm:$0xff]
        %v785 = vld [vmem:[%s780 + $0x20] sm:$0xff]
        %v786 = vld [vmem:[%s780 + $0x28] sm:$0xff]
        %v787 = vld [vmem:[%s780 + $0x30] sm:$0xff]
        %v788 = vld [vmem:[%s780 + $0x38] sm:$0xff]
        %v789 = vmul.f32 %v436, %v781
        %v790 = vmul.f32 %v436, %v782
        %v791 = vmul.f32 %v436, %v783
        %v792 = vmul.f32 %v436, %v784
        %v793 = vmul.f32 %v436, %v785
        %v794 = vmul.f32 %v436, %v786
        %v795 = vmul.f32 %v436, %v787
        %v796 = vmul.f32 %v436, %v788
        %s797 = scalar_lea.vmem [#allocation11], 704
        %v798 = vld [vmem:[%s797] sm:$0xff]
        %v799 = vld [vmem:[%s797 + $0x8] sm:$0xff]
        %v800 = vld [vmem:[%s797 + $0x10] sm:$0xff]
        %v801 = vld [vmem:[%s797 + $0x18] sm:$0xff]
        %v802 = vld [vmem:[%s797 + $0x20] sm:$0xff]
        %v803 = vld [vmem:[%s797 + $0x28] sm:$0xff]
        %v804 = vld [vmem:[%s797 + $0x30] sm:$0xff]
        %v805 = vld [vmem:[%s797 + $0x38] sm:$0xff]
        %v806 = vmul.f32 %v454, %v798
        %v807 = vmul.f32 %v454, %v799
        %v808 = vmul.f32 %v454, %v800
        %v809 = vmul.f32 %v454, %v801
        %v810 = vmul.f32 %v454, %v802
        %v811 = vmul.f32 %v454, %v803
        %v812 = vmul.f32 %v454, %v804
        %v813 = vmul.f32 %v454, %v805
        %v814 = vadd.f32 %v789, %v806
        %v815 = vadd.f32 %v790, %v807
        %v816 = vadd.f32 %v791, %v808
        %v817 = vadd.f32 %v792, %v809
        %v818 = vadd.f32 %v793, %v810
        %v819 = vadd.f32 %v794, %v811
        %v820 = vadd.f32 %v795, %v812
        %v821 = vadd.f32 %v796, %v813
        %s822 = scalar_lea.vmem [#allocation11], 768
        %v823 = vld [vmem:[%s822] sm:$0xff]
        %v824 = vld [vmem:[%s822 + $0x8] sm:$0xff]
        %v825 = vld [vmem:[%s822 + $0x10] sm:$0xff]
        %v826 = vld [vmem:[%s822 + $0x18] sm:$0xff]
        %v827 = vld [vmem:[%s822 + $0x20] sm:$0xff]
        %v828 = vld [vmem:[%s822 + $0x28] sm:$0xff]
        %v829 = vld [vmem:[%s822 + $0x30] sm:$0xff]
        %v830 = vld [vmem:[%s822 + $0x38] sm:$0xff]
        %v831 = vmul.f32 %v480, %v823
        %v832 = vmul.f32 %v480, %v824
        %v833 = vmul.f32 %v480, %v825
        %v834 = vmul.f32 %v480, %v826
        %v835 = vmul.f32 %v480, %v827
        %v836 = vmul.f32 %v480, %v828
        %v837 = vmul.f32 %v480, %v829
        %v838 = vmul.f32 %v480, %v830
        %v839 = vadd.f32 %v814, %v831
        %v840 = vadd.f32 %v815, %v832
        %v841 = vadd.f32 %v816, %v833
        %v842 = vadd.f32 %v817, %v834
        %v843 = vadd.f32 %v818, %v835
        %v844 = vadd.f32 %v819, %v836
        %v845 = vadd.f32 %v820, %v837
        %v846 = vadd.f32 %v821, %v838
        %s847 = scalar_lea.vmem [#allocation11], 832
        %v848 = vld [vmem:[%s847] sm:$0xff]
        %v849 = vld [vmem:[%s847 + $0x8] sm:$0xff]
        %v850 = vld [vmem:[%s847 + $0x10] sm:$0xff]
        %v851 = vld [vmem:[%s847 + $0x18] sm:$0xff]
        %v852 = vld [vmem:[%s847 + $0x20] sm:$0xff]
        %v853 = vld [vmem:[%s847 + $0x28] sm:$0xff]
        %v854 = vld [vmem:[%s847 + $0x30] sm:$0xff]
        %v855 = vld [vmem:[%s847 + $0x38] sm:$0xff]
        %v856 = vmul.f32 %v506, %v848
        %v857 = vmul.f32 %v506, %v849
        %v858 = vmul.f32 %v506, %v850
        %v859 = vmul.f32 %v506, %v851
        %v860 = vmul.f32 %v506, %v852
        %v861 = vmul.f32 %v506, %v853
        %v862 = vmul.f32 %v506, %v854
        %v863 = vmul.f32 %v506, %v855
        %v864 = vadd.f32 %v839, %v856
        %v865 = vadd.f32 %v840, %v857
        %v866 = vadd.f32 %v841, %v858
        %v867 = vadd.f32 %v842, %v859
        %v868 = vadd.f32 %v843, %v860
        %v869 = vadd.f32 %v844, %v861
        %v870 = vadd.f32 %v845, %v862
        %v871 = vadd.f32 %v846, %v863
        %s872 = scalar_lea.vmem [#allocation11], 896
        %v873 = vld [vmem:[%s872] sm:$0xff]
        %v874 = vld [vmem:[%s872 + $0x8] sm:$0xff]
        %v875 = vld [vmem:[%s872 + $0x10] sm:$0xff]
        %v876 = vld [vmem:[%s872 + $0x18] sm:$0xff]
        %v877 = vld [vmem:[%s872 + $0x20] sm:$0xff]
        %v878 = vld [vmem:[%s872 + $0x28] sm:$0xff]
        %v879 = vld [vmem:[%s872 + $0x30] sm:$0xff]
        %v880 = vld [vmem:[%s872 + $0x38] sm:$0xff]
        %v881 = vmul.f32 %v532, %v873
        %v882 = vmul.f32 %v532, %v874
        %v883 = vmul.f32 %v532, %v875
        %v884 = vmul.f32 %v532, %v876
        %v885 = vmul.f32 %v532, %v877
        %v886 = vmul.f32 %v532, %v878
        %v887 = vmul.f32 %v532, %v879
        %v888 = vmul.f32 %v532, %v880
        %v889 = vadd.f32 %v864, %v881
        %v890 = vadd.f32 %v865, %v882
        %v891 = vadd.f32 %v866, %v883
        %v892 = vadd.f32 %v867, %v884
        %v893 = vadd.f32 %v868, %v885
        %v894 = vadd.f32 %v869, %v886
        %v895 = vadd.f32 %v870, %v887
        %v896 = vadd.f32 %v871, %v888
        %v897 = vld [vmem:[#allocation2 + $0x2] sm:$0xff]
        %v898 = vld [vmem:[#allocation2 + $0x12] sm:$0xff]
        %v899 = vld [vmem:[#allocation2 + $0x22] sm:$0xff]
        %v900 = vld [vmem:[#allocation2 + $0x32] sm:$0xff]
        %v901 = vld [vmem:[#allocation2 + $0x42] sm:$0xff]
        %v902 = vld [vmem:[#allocation2 + $0x52] sm:$0xff]
        %v903 = vld [vmem:[#allocation2 + $0x62] sm:$0xff]
        %v904 = vld [vmem:[#allocation2 + $0x72] sm:$0xff]
        %v905 = vpack.c.bf16 %v898, %v897
        %v906 = vpack.c.bf16 %v900, %v899
        %v907 = vpack.c.bf16 %v902, %v901
        %v908 = vpack.c.bf16 %v904, %v903
        %v909 = vpack.c.bf16 %v890, %v889
        %v910 = vpack.c.bf16 %v892, %v891
        %v911 = vpack.c.bf16 %v894, %v893
        %v912 = vpack.c.bf16 %v896, %v895
        %v914 = vsel %vm397, %v905, 0
        %v917 = vsel %vm397, %v906, 0
        %v920 = vsel %vm397, %v907, 0
        %v923 = vsel %vm397, %v908, 0
        %925 = vmatpush.bf16.msra.mxu0 0
        %926 = vmatpush.bf16.msra.mxu0 0
        %927 = vmatpush.bf16.msra.mxu0 0
        %928 = vmatpush.bf16.msra.mxu0 0
        %929 = vmatpush.bf16.msra.mxu0 %v912
        %930 = vmatpush.bf16.msra.mxu0 %v911
        %931 = vmatpush.bf16.msra.mxu0 %v910
        %932 = vmatpush.bf16.msra.mxu0 %v909
        %933 = vmatmul.bf16.gmra.mxu0 %v914
        %v934 = vpop.f32.mrf.mxu0
        %v935 = vadd.f32 0.0, %v934
        %v936 = vpop.f32.mrf.mxu0
        %v937 = vadd.f32 0.0, %v936
        %938 = vmatmul.bf16.gmra.mxu0 %v917
        %v939 = vpop.f32.mrf.mxu0
        %v940 = vadd.f32 0.0, %v939
        %v941 = vpop.f32.mrf.mxu0
        %v942 = vadd.f32 0.0, %v941
        %943 = vmatmul.bf16.gmra.mxu0 %v920
        %v944 = vpop.f32.mrf.mxu0
        %v945 = vadd.f32 0.0, %v944
        %v946 = vpop.f32.mrf.mxu0
        %v947 = vadd.f32 0.0, %v946
        %948 = vmatmul.bf16.gmra.mxu0 %v923
        %v949 = vpop.f32.mrf.mxu0
        %v950 = vadd.f32 0.0, %v949
        %v951 = vpop.f32.mrf.mxu0
        %v952 = vadd.f32 0.0, %v951
        %953 = vdwg.mxu0
        %v954 = vadd.f32 %v761, %v935
        %v955 = vadd.f32 %v763, %v937
        %v956 = vadd.f32 %v766, %v940
        %v957 = vadd.f32 %v768, %v942
        %v958 = vadd.f32 %v771, %v945
        %v959 = vadd.f32 %v773, %v947
        %v960 = vadd.f32 %v776, %v950
        %v961 = vadd.f32 %v778, %v952
        %s962 = scalar_lea.vmem [#allocation11], 960
        %v963 = vld [vmem:[%s962] sm:$0xff]
        %v964 = vld [vmem:[%s962 + $0x8] sm:$0xff]
        %v965 = vld [vmem:[%s962 + $0x10] sm:$0xff]
        %v966 = vld [vmem:[%s962 + $0x18] sm:$0xff]
        %v967 = vld [vmem:[%s962 + $0x20] sm:$0xff]
        %v968 = vld [vmem:[%s962 + $0x28] sm:$0xff]
        %v969 = vld [vmem:[%s962 + $0x30] sm:$0xff]
        %v970 = vld [vmem:[%s962 + $0x38] sm:$0xff]
        %v971 = vmul.f32 %v436, %v963
        %v972 = vmul.f32 %v436, %v964
        %v973 = vmul.f32 %v436, %v965
        %v974 = vmul.f32 %v436, %v966
        %v975 = vmul.f32 %v436, %v967
        %v976 = vmul.f32 %v436, %v968
        %v977 = vmul.f32 %v436, %v969
        %v978 = vmul.f32 %v436, %v970
        %s979 = scalar_lea.vmem [#allocation11], 1024
        %v980 = vld [vmem:[%s979] sm:$0xff]
        %v981 = vld [vmem:[%s979 + $0x8] sm:$0xff]
        %v982 = vld [vmem:[%s979 + $0x10] sm:$0xff]
        %v983 = vld [vmem:[%s979 + $0x18] sm:$0xff]
        %v984 = vld [vmem:[%s979 + $0x20] sm:$0xff]
        %v985 = vld [vmem:[%s979 + $0x28] sm:$0xff]
        %v986 = vld [vmem:[%s979 + $0x30] sm:$0xff]
        %v987 = vld [vmem:[%s979 + $0x38] sm:$0xff]
        %v988 = vmul.f32 %v454, %v980
        %v989 = vmul.f32 %v454, %v981
        %v990 = vmul.f32 %v454, %v982
        %v991 = vmul.f32 %v454, %v983
        %v992 = vmul.f32 %v454, %v984
        %v993 = vmul.f32 %v454, %v985
        %v994 = vmul.f32 %v454, %v986
        %v995 = vmul.f32 %v454, %v987
        %v996 = vadd.f32 %v971, %v988
        %v997 = vadd.f32 %v972, %v989
        %v998 = vadd.f32 %v973, %v990
        %v999 = vadd.f32 %v974, %v991
        %v1000 = vadd.f32 %v975, %v992
        %v1001 = vadd.f32 %v976, %v993
        %v1002 = vadd.f32 %v977, %v994
        %v1003 = vadd.f32 %v978, %v995
        %s1004 = scalar_lea.vmem [#allocation11], 1088
        %v1005 = vld [vmem:[%s1004] sm:$0xff]
        %v1006 = vld [vmem:[%s1004 + $0x8] sm:$0xff]
        %v1007 = vld [vmem:[%s1004 + $0x10] sm:$0xff]
        %v1008 = vld [vmem:[%s1004 + $0x18] sm:$0xff]
        %v1009 = vld [vmem:[%s1004 + $0x20] sm:$0xff]
        %v1010 = vld [vmem:[%s1004 + $0x28] sm:$0xff]
        %v1011 = vld [vmem:[%s1004 + $0x30] sm:$0xff]
        %v1012 = vld [vmem:[%s1004 + $0x38] sm:$0xff]
        %v1013 = vmul.f32 %v480, %v1005
        %v1014 = vmul.f32 %v480, %v1006
        %v1015 = vmul.f32 %v480, %v1007
        %v1016 = vmul.f32 %v480, %v1008
        %v1017 = vmul.f32 %v480, %v1009
        %v1018 = vmul.f32 %v480, %v1010
        %v1019 = vmul.f32 %v480, %v1011
        %v1020 = vmul.f32 %v480, %v1012
        %v1021 = vadd.f32 %v996, %v1013
        %v1022 = vadd.f32 %v997, %v1014
        %v1023 = vadd.f32 %v998, %v1015
        %v1024 = vadd.f32 %v999, %v1016
        %v1025 = vadd.f32 %v1000, %v1017
        %v1026 = vadd.f32 %v1001, %v1018
        %v1027 = vadd.f32 %v1002, %v1019
        %v1028 = vadd.f32 %v1003, %v1020
        %s1029 = scalar_lea.vmem [#allocation11], 1152
        %v1030 = vld [vmem:[%s1029] sm:$0xff]
        %v1031 = vld [vmem:[%s1029 + $0x8] sm:$0xff]
        %v1032 = vld [vmem:[%s1029 + $0x10] sm:$0xff]
        %v1033 = vld [vmem:[%s1029 + $0x18] sm:$0xff]
        %v1034 = vld [vmem:[%s1029 + $0x20] sm:$0xff]
        %v1035 = vld [vmem:[%s1029 + $0x28] sm:$0xff]
        %v1036 = vld [vmem:[%s1029 + $0x30] sm:$0xff]
        %v1037 = vld [vmem:[%s1029 + $0x38] sm:$0xff]
        %v1038 = vmul.f32 %v506, %v1030
        %v1039 = vmul.f32 %v506, %v1031
        %v1040 = vmul.f32 %v506, %v1032
        %v1041 = vmul.f32 %v506, %v1033
        %v1042 = vmul.f32 %v506, %v1034
        %v1043 = vmul.f32 %v506, %v1035
        %v1044 = vmul.f32 %v506, %v1036
        %v1045 = vmul.f32 %v506, %v1037
        %v1046 = vadd.f32 %v1021, %v1038
        %v1047 = vadd.f32 %v1022, %v1039
        %v1048 = vadd.f32 %v1023, %v1040
        %v1049 = vadd.f32 %v1024, %v1041
        %v1050 = vadd.f32 %v1025, %v1042
        %v1051 = vadd.f32 %v1026, %v1043
        %v1052 = vadd.f32 %v1027, %v1044
        %v1053 = vadd.f32 %v1028, %v1045
        %s1054 = scalar_lea.vmem [#allocation11], 1216
        %v1055 = vld [vmem:[%s1054] sm:$0xff]
        %v1056 = vld [vmem:[%s1054 + $0x8] sm:$0xff]
        %v1057 = vld [vmem:[%s1054 + $0x10] sm:$0xff]
        %v1058 = vld [vmem:[%s1054 + $0x18] sm:$0xff]
        %v1059 = vld [vmem:[%s1054 + $0x20] sm:$0xff]
        %v1060 = vld [vmem:[%s1054 + $0x28] sm:$0xff]
        %v1061 = vld [vmem:[%s1054 + $0x30] sm:$0xff]
        %v1062 = vld [vmem:[%s1054 + $0x38] sm:$0xff]
        %v1063 = vmul.f32 %v532, %v1055
        %v1064 = vmul.f32 %v532, %v1056
        %v1065 = vmul.f32 %v532, %v1057
        %v1066 = vmul.f32 %v532, %v1058
        %v1067 = vmul.f32 %v532, %v1059
        %v1068 = vmul.f32 %v532, %v1060
        %v1069 = vmul.f32 %v532, %v1061
        %v1070 = vmul.f32 %v532, %v1062
        %v1071 = vadd.f32 %v1046, %v1063
        %v1072 = vadd.f32 %v1047, %v1064
        %v1073 = vadd.f32 %v1048, %v1065
        %v1074 = vadd.f32 %v1049, %v1066
        %v1075 = vadd.f32 %v1050, %v1067
        %v1076 = vadd.f32 %v1051, %v1068
        %v1077 = vadd.f32 %v1052, %v1069
        %v1078 = vadd.f32 %v1053, %v1070
        %v1079 = vld [vmem:[%s419] sm:$0xff]
        %v1080 = vld [vmem:[%s419 + $0x10] sm:$0xff]
        %v1081 = vld [vmem:[%s419 + $0x20] sm:$0xff]
        %v1082 = vld [vmem:[%s419 + $0x30] sm:$0xff]
        %v1083 = vld [vmem:[%s419 + $0x40] sm:$0xff]
        %v1084 = vld [vmem:[%s419 + $0x50] sm:$0xff]
        %v1085 = vld [vmem:[%s419 + $0x60] sm:$0xff]
        %v1086 = vld [vmem:[%s419 + $0x70] sm:$0xff]
        %v1087 = vpack.c.bf16 %v1080, %v1079
        %v1088 = vpack.c.bf16 %v1082, %v1081
        %v1089 = vpack.c.bf16 %v1084, %v1083
        %v1090 = vpack.c.bf16 %v1086, %v1085
        %v1091 = vpack.c.bf16 %v1072, %v1071
        %v1092 = vpack.c.bf16 %v1074, %v1073
        %v1093 = vpack.c.bf16 %v1076, %v1075
        %v1094 = vpack.c.bf16 %v1078, %v1077
        %v1096 = vsel %vm397, %v1087, 0
        %v1099 = vsel %vm397, %v1088, 0
        %v1102 = vsel %vm397, %v1089, 0
        %v1105 = vsel %vm397, %v1090, 0
        %1107 = vmatpush.bf16.msra.mxu0 0
        %1108 = vmatpush.bf16.msra.mxu0 0
        %1109 = vmatpush.bf16.msra.mxu0 0
        %1110 = vmatpush.bf16.msra.mxu0 0
        %1111 = vmatpush.bf16.msra.mxu0 %v1094
        %1112 = vmatpush.bf16.msra.mxu0 %v1093
        %1113 = vmatpush.bf16.msra.mxu0 %v1092
        %1114 = vmatpush.bf16.msra.mxu0 %v1091
        %1115 = vmatmul.bf16.gmra.mxu0 %v1096
        %v1116 = vpop.f32.mrf.mxu0
        %v1117 = vadd.f32 0.0, %v1116
        %v1118 = vpop.f32.mrf.mxu0
        %v1119 = vadd.f32 0.0, %v1118
        %1120 = vmatmul.bf16.gmra.mxu0 %v1099
        %v1121 = vpop.f32.mrf.mxu0
        %v1122 = vadd.f32 0.0, %v1121
        %v1123 = vpop.f32.mrf.mxu0
        %v1124 = vadd.f32 0.0, %v1123
        %1125 = vmatmul.bf16.gmra.mxu0 %v1102
        %v1126 = vpop.f32.mrf.mxu0
        %v1127 = vadd.f32 0.0, %v1126
        %v1128 = vpop.f32.mrf.mxu0
        %v1129 = vadd.f32 0.0, %v1128
        %1130 = vmatmul.bf16.gmra.mxu0 %v1105
        %v1131 = vpop.f32.mrf.mxu0
        %v1132 = vadd.f32 0.0, %v1131
        %v1133 = vpop.f32.mrf.mxu0
        %v1134 = vadd.f32 0.0, %v1133
        %1135 = vdwg.mxu0
        %v1136 = vadd.f32 %v954, %v1117
        %v1137 = vadd.f32 %v955, %v1119
        %v1138 = vadd.f32 %v956, %v1122
        %v1139 = vadd.f32 %v957, %v1124
        %v1140 = vadd.f32 %v958, %v1127
        %v1141 = vadd.f32 %v959, %v1129
        %v1142 = vadd.f32 %v960, %v1132
        %v1143 = vadd.f32 %v961, %v1134
        %s1144 = scalar_lea.vmem [#allocation11], 1280
        %v1145 = vld [vmem:[%s1144] sm:$0xff]
        %v1146 = vld [vmem:[%s1144 + $0x8] sm:$0xff]
        %v1147 = vld [vmem:[%s1144 + $0x10] sm:$0xff]
        %v1148 = vld [vmem:[%s1144 + $0x18] sm:$0xff]
        %v1149 = vld [vmem:[%s1144 + $0x20] sm:$0xff]
        %v1150 = vld [vmem:[%s1144 + $0x28] sm:$0xff]
        %v1151 = vld [vmem:[%s1144 + $0x30] sm:$0xff]
        %v1152 = vld [vmem:[%s1144 + $0x38] sm:$0xff]
        %v1153 = vmul.f32 %v436, %v1145
        %v1154 = vmul.f32 %v436, %v1146
        %v1155 = vmul.f32 %v436, %v1147
        %v1156 = vmul.f32 %v436, %v1148
        %v1157 = vmul.f32 %v436, %v1149
        %v1158 = vmul.f32 %v436, %v1150
        %v1159 = vmul.f32 %v436, %v1151
        %v1160 = vmul.f32 %v436, %v1152
        %s1161 = scalar_lea.vmem [#allocation11], 1344
        %v1162 = vld [vmem:[%s1161] sm:$0xff]
        %v1163 = vld [vmem:[%s1161 + $0x8] sm:$0xff]
        %v1164 = vld [vmem:[%s1161 + $0x10] sm:$0xff]
        %v1165 = vld [vmem:[%s1161 + $0x18] sm:$0xff]
        %v1166 = vld [vmem:[%s1161 + $0x20] sm:$0xff]
        %v1167 = vld [vmem:[%s1161 + $0x28] sm:$0xff]
        %v1168 = vld [vmem:[%s1161 + $0x30] sm:$0xff]
        %v1169 = vld [vmem:[%s1161 + $0x38] sm:$0xff]
        %v1170 = vmul.f32 %v454, %v1162
        %v1171 = vmul.f32 %v454, %v1163
        %v1172 = vmul.f32 %v454, %v1164
        %v1173 = vmul.f32 %v454, %v1165
        %v1174 = vmul.f32 %v454, %v1166
        %v1175 = vmul.f32 %v454, %v1167
        %v1176 = vmul.f32 %v454, %v1168
        %v1177 = vmul.f32 %v454, %v1169
        %v1178 = vadd.f32 %v1153, %v1170
        %v1179 = vadd.f32 %v1154, %v1171
        %v1180 = vadd.f32 %v1155, %v1172
        %v1181 = vadd.f32 %v1156, %v1173
        %v1182 = vadd.f32 %v1157, %v1174
        %v1183 = vadd.f32 %v1158, %v1175
        %v1184 = vadd.f32 %v1159, %v1176
        %v1185 = vadd.f32 %v1160, %v1177
        %s1186 = scalar_lea.vmem [#allocation11], 1408
        %v1187 = vld [vmem:[%s1186] sm:$0xff]
        %v1188 = vld [vmem:[%s1186 + $0x8] sm:$0xff]
        %v1189 = vld [vmem:[%s1186 + $0x10] sm:$0xff]
        %v1190 = vld [vmem:[%s1186 + $0x18] sm:$0xff]
        %v1191 = vld [vmem:[%s1186 + $0x20] sm:$0xff]
        %v1192 = vld [vmem:[%s1186 + $0x28] sm:$0xff]
        %v1193 = vld [vmem:[%s1186 + $0x30] sm:$0xff]
        %v1194 = vld [vmem:[%s1186 + $0x38] sm:$0xff]
        %v1195 = vmul.f32 %v480, %v1187
        %v1196 = vmul.f32 %v480, %v1188
        %v1197 = vmul.f32 %v480, %v1189
        %v1198 = vmul.f32 %v480, %v1190
        %v1199 = vmul.f32 %v480, %v1191
        %v1200 = vmul.f32 %v480, %v1192
        %v1201 = vmul.f32 %v480, %v1193
        %v1202 = vmul.f32 %v480, %v1194
        %v1203 = vadd.f32 %v1178, %v1195
        %v1204 = vadd.f32 %v1179, %v1196
        %v1205 = vadd.f32 %v1180, %v1197
        %v1206 = vadd.f32 %v1181, %v1198
        %v1207 = vadd.f32 %v1182, %v1199
        %v1208 = vadd.f32 %v1183, %v1200
        %v1209 = vadd.f32 %v1184, %v1201
        %v1210 = vadd.f32 %v1185, %v1202
        %s1211 = scalar_lea.vmem [#allocation11], 1472
        %v1212 = vld [vmem:[%s1211] sm:$0xff]
        %v1213 = vld [vmem:[%s1211 + $0x8] sm:$0xff]
        %v1214 = vld [vmem:[%s1211 + $0x10] sm:$0xff]
        %v1215 = vld [vmem:[%s1211 + $0x18] sm:$0xff]
        %v1216 = vld [vmem:[%s1211 + $0x20] sm:$0xff]
        %v1217 = vld [vmem:[%s1211 + $0x28] sm:$0xff]
        %v1218 = vld [vmem:[%s1211 + $0x30] sm:$0xff]
        %v1219 = vld [vmem:[%s1211 + $0x38] sm:$0xff]
        %v1220 = vmul.f32 %v506, %v1212
        %v1221 = vmul.f32 %v506, %v1213
        %v1222 = vmul.f32 %v506, %v1214
        %v1223 = vmul.f32 %v506, %v1215
        %v1224 = vmul.f32 %v506, %v1216
        %v1225 = vmul.f32 %v506, %v1217
        %v1226 = vmul.f32 %v506, %v1218
        %v1227 = vmul.f32 %v506, %v1219
        %v1228 = vadd.f32 %v1203, %v1220
        %v1229 = vadd.f32 %v1204, %v1221
        %v1230 = vadd.f32 %v1205, %v1222
        %v1231 = vadd.f32 %v1206, %v1223
        %v1232 = vadd.f32 %v1207, %v1224
        %v1233 = vadd.f32 %v1208, %v1225
        %v1234 = vadd.f32 %v1209, %v1226
        %v1235 = vadd.f32 %v1210, %v1227
        %s1236 = scalar_lea.vmem [#allocation11], 1536
        %v1237 = vld [vmem:[%s1236] sm:$0xff]
        %v1238 = vld [vmem:[%s1236 + $0x8] sm:$0xff]
        %v1239 = vld [vmem:[%s1236 + $0x10] sm:$0xff]
        %v1240 = vld [vmem:[%s1236 + $0x18] sm:$0xff]
        %v1241 = vld [vmem:[%s1236 + $0x20] sm:$0xff]
        %v1242 = vld [vmem:[%s1236 + $0x28] sm:$0xff]
        %v1243 = vld [vmem:[%s1236 + $0x30] sm:$0xff]
        %v1244 = vld [vmem:[%s1236 + $0x38] sm:$0xff]
        %v1245 = vmul.f32 %v532, %v1237
        %v1246 = vmul.f32 %v532, %v1238
        %v1247 = vmul.f32 %v532, %v1239
        %v1248 = vmul.f32 %v532, %v1240
        %v1249 = vmul.f32 %v532, %v1241
        %v1250 = vmul.f32 %v532, %v1242
        %v1251 = vmul.f32 %v532, %v1243
        %v1252 = vmul.f32 %v532, %v1244
        %v1253 = vadd.f32 %v1228, %v1245
        %v1254 = vadd.f32 %v1229, %v1246
        %v1255 = vadd.f32 %v1230, %v1247
        %v1256 = vadd.f32 %v1231, %v1248
        %v1257 = vadd.f32 %v1232, %v1249
        %v1258 = vadd.f32 %v1233, %v1250
        %v1259 = vadd.f32 %v1234, %v1251
        %v1260 = vadd.f32 %v1235, %v1252
        %v1261 = vld [vmem:[%s419 + $0x1] sm:$0xff]
        %v1262 = vld [vmem:[%s419 + $0x11] sm:$0xff]
        %v1263 = vld [vmem:[%s419 + $0x21] sm:$0xff]
        %v1264 = vld [vmem:[%s419 + $0x31] sm:$0xff]
        %v1265 = vld [vmem:[%s419 + $0x41] sm:$0xff]
        %v1266 = vld [vmem:[%s419 + $0x51] sm:$0xff]
        %v1267 = vld [vmem:[%s419 + $0x61] sm:$0xff]
        %v1268 = vld [vmem:[%s419 + $0x71] sm:$0xff]
        %v1269 = vpack.c.bf16 %v1262, %v1261
        %v1270 = vpack.c.bf16 %v1264, %v1263
        %v1271 = vpack.c.bf16 %v1266, %v1265
        %v1272 = vpack.c.bf16 %v1268, %v1267
        %v1273 = vpack.c.bf16 %v1254, %v1253
        %v1274 = vpack.c.bf16 %v1256, %v1255
        %v1275 = vpack.c.bf16 %v1258, %v1257
        %v1276 = vpack.c.bf16 %v1260, %v1259
        %v1278 = vsel %vm397, %v1269, 0
        %v1281 = vsel %vm397, %v1270, 0
        %v1284 = vsel %vm397, %v1271, 0
        %v1287 = vsel %vm397, %v1272, 0
        %1289 = vmatpush.bf16.msra.mxu0 0
        %1290 = vmatpush.bf16.msra.mxu0 0
        %1291 = vmatpush.bf16.msra.mxu0 0
        %1292 = vmatpush.bf16.msra.mxu0 0
        %1293 = vmatpush.bf16.msra.mxu0 %v1276
        %1294 = vmatpush.bf16.msra.mxu0 %v1275
        %1295 = vmatpush.bf16.msra.mxu0 %v1274
        %1296 = vmatpush.bf16.msra.mxu0 %v1273
        %1297 = vmatmul.bf16.gmra.mxu0 %v1278
        %v1298 = vpop.f32.mrf.mxu0
        %v1299 = vadd.f32 0.0, %v1298
        %v1300 = vpop.f32.mrf.mxu0
        %v1301 = vadd.f32 0.0, %v1300
        %1302 = vmatmul.bf16.gmra.mxu0 %v1281
        %v1303 = vpop.f32.mrf.mxu0
        %v1304 = vadd.f32 0.0, %v1303
        %v1305 = vpop.f32.mrf.mxu0
        %v1306 = vadd.f32 0.0, %v1305
        %1307 = vmatmul.bf16.gmra.mxu0 %v1284
        %v1308 = vpop.f32.mrf.mxu0
        %v1309 = vadd.f32 0.0, %v1308
        %v1310 = vpop.f32.mrf.mxu0
        %v1311 = vadd.f32 0.0, %v1310
        %1312 = vmatmul.bf16.gmra.mxu0 %v1287
        %v1313 = vpop.f32.mrf.mxu0
        %v1314 = vadd.f32 0.0, %v1313
        %v1315 = vpop.f32.mrf.mxu0
        %v1316 = vadd.f32 0.0, %v1315
        %1317 = vdwg.mxu0
        %v1318 = vadd.f32 %v1136, %v1299
        %v1319 = vadd.f32 %v1137, %v1301
        %v1320 = vadd.f32 %v1138, %v1304
        %v1321 = vadd.f32 %v1139, %v1306
        %v1322 = vadd.f32 %v1140, %v1309
        %v1323 = vadd.f32 %v1141, %v1311
        %v1324 = vadd.f32 %v1142, %v1314
        %v1325 = vadd.f32 %v1143, %v1316
        %s1326 = scalar_lea.vmem [#allocation11], 1600
        %v1327 = vld [vmem:[%s1326] sm:$0xff]
        %v1328 = vld [vmem:[%s1326 + $0x8] sm:$0xff]
        %v1329 = vld [vmem:[%s1326 + $0x10] sm:$0xff]
        %v1330 = vld [vmem:[%s1326 + $0x18] sm:$0xff]
        %v1331 = vld [vmem:[%s1326 + $0x20] sm:$0xff]
        %v1332 = vld [vmem:[%s1326 + $0x28] sm:$0xff]
        %v1333 = vld [vmem:[%s1326 + $0x30] sm:$0xff]
        %v1334 = vld [vmem:[%s1326 + $0x38] sm:$0xff]
        %v1335 = vmul.f32 %v436, %v1327
        %v1336 = vmul.f32 %v436, %v1328
        %v1337 = vmul.f32 %v436, %v1329
        %v1338 = vmul.f32 %v436, %v1330
        %v1339 = vmul.f32 %v436, %v1331
        %v1340 = vmul.f32 %v436, %v1332
        %v1341 = vmul.f32 %v436, %v1333
        %v1342 = vmul.f32 %v436, %v1334
        %s1343 = scalar_lea.vmem [#allocation11], 1664
        %v1344 = vld [vmem:[%s1343] sm:$0xff]
        %v1345 = vld [vmem:[%s1343 + $0x8] sm:$0xff]
        %v1346 = vld [vmem:[%s1343 + $0x10] sm:$0xff]
        %v1347 = vld [vmem:[%s1343 + $0x18] sm:$0xff]
        %v1348 = vld [vmem:[%s1343 + $0x20] sm:$0xff]
        %v1349 = vld [vmem:[%s1343 + $0x28] sm:$0xff]
        %v1350 = vld [vmem:[%s1343 + $0x30] sm:$0xff]
        %v1351 = vld [vmem:[%s1343 + $0x38] sm:$0xff]
        %v1352 = vmul.f32 %v454, %v1344
        %v1353 = vmul.f32 %v454, %v1345
        %v1354 = vmul.f32 %v454, %v1346
        %v1355 = vmul.f32 %v454, %v1347
        %v1356 = vmul.f32 %v454, %v1348
        %v1357 = vmul.f32 %v454, %v1349
        %v1358 = vmul.f32 %v454, %v1350
        %v1359 = vmul.f32 %v454, %v1351
        %v1360 = vadd.f32 %v1335, %v1352
        %v1361 = vadd.f32 %v1336, %v1353
        %v1362 = vadd.f32 %v1337, %v1354
        %v1363 = vadd.f32 %v1338, %v1355
        %v1364 = vadd.f32 %v1339, %v1356
        %v1365 = vadd.f32 %v1340, %v1357
        %v1366 = vadd.f32 %v1341, %v1358
        %v1367 = vadd.f32 %v1342, %v1359
        %s1368 = scalar_lea.vmem [#allocation11], 1728
        %v1369 = vld [vmem:[%s1368] sm:$0xff]
        %v1370 = vld [vmem:[%s1368 + $0x8] sm:$0xff]
        %v1371 = vld [vmem:[%s1368 + $0x10] sm:$0xff]
        %v1372 = vld [vmem:[%s1368 + $0x18] sm:$0xff]
        %v1373 = vld [vmem:[%s1368 + $0x20] sm:$0xff]
        %v1374 = vld [vmem:[%s1368 + $0x28] sm:$0xff]
        %v1375 = vld [vmem:[%s1368 + $0x30] sm:$0xff]
        %v1376 = vld [vmem:[%s1368 + $0x38] sm:$0xff]
        %v1377 = vmul.f32 %v480, %v1369
        %v1378 = vmul.f32 %v480, %v1370
        %v1379 = vmul.f32 %v480, %v1371
        %v1380 = vmul.f32 %v480, %v1372
        %v1381 = vmul.f32 %v480, %v1373
        %v1382 = vmul.f32 %v480, %v1374
        %v1383 = vmul.f32 %v480, %v1375
        %v1384 = vmul.f32 %v480, %v1376
        %v1385 = vadd.f32 %v1360, %v1377
        %v1386 = vadd.f32 %v1361, %v1378
        %v1387 = vadd.f32 %v1362, %v1379
        %v1388 = vadd.f32 %v1363, %v1380
        %v1389 = vadd.f32 %v1364, %v1381
        %v1390 = vadd.f32 %v1365, %v1382
        %v1391 = vadd.f32 %v1366, %v1383
        %v1392 = vadd.f32 %v1367, %v1384
        %s1393 = scalar_lea.vmem [#allocation11], 1792
        %v1394 = vld [vmem:[%s1393] sm:$0xff]
        %v1395 = vld [vmem:[%s1393 + $0x8] sm:$0xff]
        %v1396 = vld [vmem:[%s1393 + $0x10] sm:$0xff]
        %v1397 = vld [vmem:[%s1393 + $0x18] sm:$0xff]
        %v1398 = vld [vmem:[%s1393 + $0x20] sm:$0xff]
        %v1399 = vld [vmem:[%s1393 + $0x28] sm:$0xff]
        %v1400 = vld [vmem:[%s1393 + $0x30] sm:$0xff]
        %v1401 = vld [vmem:[%s1393 + $0x38] sm:$0xff]
        %v1402 = vmul.f32 %v506, %v1394
        %v1403 = vmul.f32 %v506, %v1395
        %v1404 = vmul.f32 %v506, %v1396
        %v1405 = vmul.f32 %v506, %v1397
        %v1406 = vmul.f32 %v506, %v1398
        %v1407 = vmul.f32 %v506, %v1399
        %v1408 = vmul.f32 %v506, %v1400
        %v1409 = vmul.f32 %v506, %v1401
        %v1410 = vadd.f32 %v1385, %v1402
        %v1411 = vadd.f32 %v1386, %v1403
        %v1412 = vadd.f32 %v1387, %v1404
        %v1413 = vadd.f32 %v1388, %v1405
        %v1414 = vadd.f32 %v1389, %v1406
        %v1415 = vadd.f32 %v1390, %v1407
        %v1416 = vadd.f32 %v1391, %v1408
        %v1417 = vadd.f32 %v1392, %v1409
        %s1418 = scalar_lea.vmem [#allocation11], 1856
        %v1419 = vld [vmem:[%s1418] sm:$0xff]
        %v1420 = vld [vmem:[%s1418 + $0x8] sm:$0xff]
        %v1421 = vld [vmem:[%s1418 + $0x10] sm:$0xff]
        %v1422 = vld [vmem:[%s1418 + $0x18] sm:$0xff]
        %v1423 = vld [vmem:[%s1418 + $0x20] sm:$0xff]
        %v1424 = vld [vmem:[%s1418 + $0x28] sm:$0xff]
        %v1425 = vld [vmem:[%s1418 + $0x30] sm:$0xff]
        %v1426 = vld [vmem:[%s1418 + $0x38] sm:$0xff]
        %v1427 = vmul.f32 %v532, %v1419
        %v1428 = vmul.f32 %v532, %v1420
        %v1429 = vmul.f32 %v532, %v1421
        %v1430 = vmul.f32 %v532, %v1422
        %v1431 = vmul.f32 %v532, %v1423
        %v1432 = vmul.f32 %v532, %v1424
        %v1433 = vmul.f32 %v532, %v1425
        %v1434 = vmul.f32 %v532, %v1426
        %v1435 = vadd.f32 %v1410, %v1427
        %v1436 = vadd.f32 %v1411, %v1428
        %v1437 = vadd.f32 %v1412, %v1429
        %v1438 = vadd.f32 %v1413, %v1430
        %v1439 = vadd.f32 %v1414, %v1431
        %v1440 = vadd.f32 %v1415, %v1432
        %v1441 = vadd.f32 %v1416, %v1433
        %v1442 = vadd.f32 %v1417, %v1434
        %v1443 = vld [vmem:[%s419 + $0x2] sm:$0xff]
        %v1444 = vld [vmem:[%s419 + $0x12] sm:$0xff]
        %v1445 = vld [vmem:[%s419 + $0x22] sm:$0xff]
        %v1446 = vld [vmem:[%s419 + $0x32] sm:$0xff]
        %v1447 = vld [vmem:[%s419 + $0x42] sm:$0xff]
        %v1448 = vld [vmem:[%s419 + $0x52] sm:$0xff]
        %v1449 = vld [vmem:[%s419 + $0x62] sm:$0xff]
        %v1450 = vld [vmem:[%s419 + $0x72] sm:$0xff]
        %v1451 = vpack.c.bf16 %v1444, %v1443
        %v1452 = vpack.c.bf16 %v1446, %v1445
        %v1453 = vpack.c.bf16 %v1448, %v1447
        %v1454 = vpack.c.bf16 %v1450, %v1449
        %v1455 = vpack.c.bf16 %v1436, %v1435
        %v1456 = vpack.c.bf16 %v1438, %v1437
        %v1457 = vpack.c.bf16 %v1440, %v1439
        %v1458 = vpack.c.bf16 %v1442, %v1441
        %v1460 = vsel %vm397, %v1451, 0
        %v1463 = vsel %vm397, %v1452, 0
        %v1466 = vsel %vm397, %v1453, 0
        %v1469 = vsel %vm397, %v1454, 0
        %1471 = vmatpush.bf16.msra.mxu0 0
        %1472 = vmatpush.bf16.msra.mxu0 0
        %1473 = vmatpush.bf16.msra.mxu0 0
        %1474 = vmatpush.bf16.msra.mxu0 0
        %1475 = vmatpush.bf16.msra.mxu0 %v1458
        %1476 = vmatpush.bf16.msra.mxu0 %v1457
        %1477 = vmatpush.bf16.msra.mxu0 %v1456
        %1478 = vmatpush.bf16.msra.mxu0 %v1455
        %1479 = vmatmul.bf16.gmra.mxu0 %v1460
        %v1480 = vpop.f32.mrf.mxu0
        %v1481 = vadd.f32 0.0, %v1480
        %v1482 = vpop.f32.mrf.mxu0
        %v1483 = vadd.f32 0.0, %v1482
        %1484 = vmatmul.bf16.gmra.mxu0 %v1463
        %v1485 = vpop.f32.mrf.mxu0
        %v1486 = vadd.f32 0.0, %v1485
        %v1487 = vpop.f32.mrf.mxu0
        %v1488 = vadd.f32 0.0, %v1487
        %1489 = vmatmul.bf16.gmra.mxu0 %v1466
        %v1490 = vpop.f32.mrf.mxu0
        %v1491 = vadd.f32 0.0, %v1490
        %v1492 = vpop.f32.mrf.mxu0
        %v1493 = vadd.f32 0.0, %v1492
        %1494 = vmatmul.bf16.gmra.mxu0 %v1469
        %v1495 = vpop.f32.mrf.mxu0
        %v1496 = vadd.f32 0.0, %v1495
        %v1497 = vpop.f32.mrf.mxu0
        %v1498 = vadd.f32 0.0, %v1497
        %1499 = vdwg.mxu0
        %v1500 = vadd.f32 %v1318, %v1481
        %v1501 = vadd.f32 %v1319, %v1483
        %v1502 = vadd.f32 %v1320, %v1486
        %v1503 = vadd.f32 %v1321, %v1488
        %v1504 = vadd.f32 %v1322, %v1491
        %v1505 = vadd.f32 %v1323, %v1493
        %v1506 = vadd.f32 %v1324, %v1496
        %v1507 = vadd.f32 %v1325, %v1498
        %s1508 = scalar_lea.vmem [#allocation11], 1920
        %v1509 = vld [vmem:[%s1508] sm:$0xff]
        %v1510 = vld [vmem:[%s1508 + $0x8] sm:$0xff]
        %v1511 = vld [vmem:[%s1508 + $0x10] sm:$0xff]
        %v1512 = vld [vmem:[%s1508 + $0x18] sm:$0xff]
        %v1513 = vld [vmem:[%s1508 + $0x20] sm:$0xff]
        %v1514 = vld [vmem:[%s1508 + $0x28] sm:$0xff]
        %v1515 = vld [vmem:[%s1508 + $0x30] sm:$0xff]
        %v1516 = vld [vmem:[%s1508 + $0x38] sm:$0xff]
        %v1517 = vmul.f32 %v436, %v1509
        %v1518 = vmul.f32 %v436, %v1510
        %v1519 = vmul.f32 %v436, %v1511
        %v1520 = vmul.f32 %v436, %v1512
        %v1521 = vmul.f32 %v436, %v1513
        %v1522 = vmul.f32 %v436, %v1514
        %v1523 = vmul.f32 %v436, %v1515
        %v1524 = vmul.f32 %v436, %v1516
        %s1525 = scalar_lea.vmem [#allocation11], 1984
        %v1526 = vld [vmem:[%s1525] sm:$0xff]
        %v1527 = vld [vmem:[%s1525 + $0x8] sm:$0xff]
        %v1528 = vld [vmem:[%s1525 + $0x10] sm:$0xff]
        %v1529 = vld [vmem:[%s1525 + $0x18] sm:$0xff]
        %v1530 = vld [vmem:[%s1525 + $0x20] sm:$0xff]
        %v1531 = vld [vmem:[%s1525 + $0x28] sm:$0xff]
        %v1532 = vld [vmem:[%s1525 + $0x30] sm:$0xff]
        %v1533 = vld [vmem:[%s1525 + $0x38] sm:$0xff]
        %v1534 = vmul.f32 %v454, %v1526
        %v1535 = vmul.f32 %v454, %v1527
        %v1536 = vmul.f32 %v454, %v1528
        %v1537 = vmul.f32 %v454, %v1529
        %v1538 = vmul.f32 %v454, %v1530
        %v1539 = vmul.f32 %v454, %v1531
        %v1540 = vmul.f32 %v454, %v1532
        %v1541 = vmul.f32 %v454, %v1533
        %v1542 = vadd.f32 %v1517, %v1534
        %v1543 = vadd.f32 %v1518, %v1535
        %v1544 = vadd.f32 %v1519, %v1536
        %v1545 = vadd.f32 %v1520, %v1537
        %v1546 = vadd.f32 %v1521, %v1538
        %v1547 = vadd.f32 %v1522, %v1539
        %v1548 = vadd.f32 %v1523, %v1540
        %v1549 = vadd.f32 %v1524, %v1541
        %s1550 = scalar_lea.vmem [#allocation11], 2048
        %v1551 = vld [vmem:[%s1550] sm:$0xff]
        %v1552 = vld [vmem:[%s1550 + $0x8] sm:$0xff]
        %v1553 = vld [vmem:[%s1550 + $0x10] sm:$0xff]
        %v1554 = vld [vmem:[%s1550 + $0x18] sm:$0xff]
        %v1555 = vld [vmem:[%s1550 + $0x20] sm:$0xff]
        %v1556 = vld [vmem:[%s1550 + $0x28] sm:$0xff]
        %v1557 = vld [vmem:[%s1550 + $0x30] sm:$0xff]
        %v1558 = vld [vmem:[%s1550 + $0x38] sm:$0xff]
        %v1559 = vmul.f32 %v480, %v1551
        %v1560 = vmul.f32 %v480, %v1552
        %v1561 = vmul.f32 %v480, %v1553
        %v1562 = vmul.f32 %v480, %v1554
        %v1563 = vmul.f32 %v480, %v1555
        %v1564 = vmul.f32 %v480, %v1556
        %v1565 = vmul.f32 %v480, %v1557
        %v1566 = vmul.f32 %v480, %v1558
        %v1567 = vadd.f32 %v1542, %v1559
        %v1568 = vadd.f32 %v1543, %v1560
        %v1569 = vadd.f32 %v1544, %v1561
        %v1570 = vadd.f32 %v1545, %v1562
        %v1571 = vadd.f32 %v1546, %v1563
        %v1572 = vadd.f32 %v1547, %v1564
        %v1573 = vadd.f32 %v1548, %v1565
        %v1574 = vadd.f32 %v1549, %v1566
        %s1575 = scalar_lea.vmem [#allocation11], 2112
        %v1576 = vld [vmem:[%s1575] sm:$0xff]
        %v1577 = vld [vmem:[%s1575 + $0x8] sm:$0xff]
        %v1578 = vld [vmem:[%s1575 + $0x10] sm:$0xff]
        %v1579 = vld [vmem:[%s1575 + $0x18] sm:$0xff]
        %v1580 = vld [vmem:[%s1575 + $0x20] sm:$0xff]
        %v1581 = vld [vmem:[%s1575 + $0x28] sm:$0xff]
        %v1582 = vld [vmem:[%s1575 + $0x30] sm:$0xff]
        %v1583 = vld [vmem:[%s1575 + $0x38] sm:$0xff]
        %v1584 = vmul.f32 %v506, %v1576
        %v1585 = vmul.f32 %v506, %v1577
        %v1586 = vmul.f32 %v506, %v1578
        %v1587 = vmul.f32 %v506, %v1579
        %v1588 = vmul.f32 %v506, %v1580
        %v1589 = vmul.f32 %v506, %v1581
        %v1590 = vmul.f32 %v506, %v1582
        %v1591 = vmul.f32 %v506, %v1583
        %v1592 = vadd.f32 %v1567, %v1584
        %v1593 = vadd.f32 %v1568, %v1585
        %v1594 = vadd.f32 %v1569, %v1586
        %v1595 = vadd.f32 %v1570, %v1587
        %v1596 = vadd.f32 %v1571, %v1588
        %v1597 = vadd.f32 %v1572, %v1589
        %v1598 = vadd.f32 %v1573, %v1590
        %v1599 = vadd.f32 %v1574, %v1591
        %s1600 = scalar_lea.vmem [#allocation11], 2176
        %v1601 = vld [vmem:[%s1600] sm:$0xff]
        %v1602 = vld [vmem:[%s1600 + $0x8] sm:$0xff]
        %v1603 = vld [vmem:[%s1600 + $0x10] sm:$0xff]
        %v1604 = vld [vmem:[%s1600 + $0x18] sm:$0xff]
        %v1605 = vld [vmem:[%s1600 + $0x20] sm:$0xff]
        %v1606 = vld [vmem:[%s1600 + $0x28] sm:$0xff]
        %v1607 = vld [vmem:[%s1600 + $0x30] sm:$0xff]
        %v1608 = vld [vmem:[%s1600 + $0x38] sm:$0xff]
        %v1609 = vmul.f32 %v532, %v1601
        %v1610 = vmul.f32 %v532, %v1602
        %v1611 = vmul.f32 %v532, %v1603
        %v1612 = vmul.f32 %v532, %v1604
        %v1613 = vmul.f32 %v532, %v1605
        %v1614 = vmul.f32 %v532, %v1606
        %v1615 = vmul.f32 %v532, %v1607
        %v1616 = vmul.f32 %v532, %v1608
        %v1617 = vadd.f32 %v1592, %v1609
        %v1618 = vadd.f32 %v1593, %v1610
        %v1619 = vadd.f32 %v1594, %v1611
        %v1620 = vadd.f32 %v1595, %v1612
        %v1621 = vadd.f32 %v1596, %v1613
        %v1622 = vadd.f32 %v1597, %v1614
        %v1623 = vadd.f32 %v1598, %v1615
        %v1624 = vadd.f32 %v1599, %v1616
        %s1625 = scalar_lea.vmem [#allocation2], 32
        %v1626 = vld [vmem:[%s1625] sm:$0xff]
        %v1627 = vld [vmem:[%s1625 + $0x10] sm:$0xff]
        %v1628 = vld [vmem:[%s1625 + $0x20] sm:$0xff]
        %v1629 = vld [vmem:[%s1625 + $0x30] sm:$0xff]
        %v1630 = vld [vmem:[%s1625 + $0x40] sm:$0xff]
        %v1631 = vld [vmem:[%s1625 + $0x50] sm:$0xff]
        %v1632 = vld [vmem:[%s1625 + $0x60] sm:$0xff]
        %v1633 = vld [vmem:[%s1625 + $0x70] sm:$0xff]
        %v1634 = vpack.c.bf16 %v1627, %v1626
        %v1635 = vpack.c.bf16 %v1629, %v1628
        %v1636 = vpack.c.bf16 %v1631, %v1630
        %v1637 = vpack.c.bf16 %v1633, %v1632
        %v1638 = vpack.c.bf16 %v1618, %v1617
        %v1639 = vpack.c.bf16 %v1620, %v1619
        %v1640 = vpack.c.bf16 %v1622, %v1621
        %v1641 = vpack.c.bf16 %v1624, %v1623
        %v1643 = vsel %vm397, %v1634, 0
        %v1646 = vsel %vm397, %v1635, 0
        %v1649 = vsel %vm397, %v1636, 0
        %v1652 = vsel %vm397, %v1637, 0
        %1654 = vmatpush.bf16.msra.mxu0 0
        %1655 = vmatpush.bf16.msra.mxu0 0
        %1656 = vmatpush.bf16.msra.mxu0 0
        %1657 = vmatpush.bf16.msra.mxu0 0
        %1658 = vmatpush.bf16.msra.mxu0 %v1641
        %1659 = vmatpush.bf16.msra.mxu0 %v1640
        %1660 = vmatpush.bf16.msra.mxu0 %v1639
        %1661 = vmatpush.bf16.msra.mxu0 %v1638
        %1662 = vmatmul.bf16.gmra.mxu0 %v1643
        %v1663 = vpop.f32.mrf.mxu0
        %v1664 = vadd.f32 0.0, %v1663
        %v1665 = vpop.f32.mrf.mxu0
        %v1666 = vadd.f32 0.0, %v1665
        %1667 = vmatmul.bf16.gmra.mxu0 %v1646
        %v1668 = vpop.f32.mrf.mxu0
        %v1669 = vadd.f32 0.0, %v1668
        %v1670 = vpop.f32.mrf.mxu0
        %v1671 = vadd.f32 0.0, %v1670
        %1672 = vmatmul.bf16.gmra.mxu0 %v1649
        %v1673 = vpop.f32.mrf.mxu0
        %v1674 = vadd.f32 0.0, %v1673
        %v1675 = vpop.f32.mrf.mxu0
        %v1676 = vadd.f32 0.0, %v1675
        %1677 = vmatmul.bf16.gmra.mxu0 %v1652
        %v1678 = vpop.f32.mrf.mxu0
        %v1679 = vadd.f32 0.0, %v1678
        %v1680 = vpop.f32.mrf.mxu0
        %v1681 = vadd.f32 0.0, %v1680
        %1682 = vdwg.mxu0
        %v1683 = vadd.f32 %v1500, %v1664
        %v1684 = vadd.f32 %v1501, %v1666
        %v1685 = vadd.f32 %v1502, %v1669
        %v1686 = vadd.f32 %v1503, %v1671
        %v1687 = vadd.f32 %v1504, %v1674
        %v1688 = vadd.f32 %v1505, %v1676
        %v1689 = vadd.f32 %v1506, %v1679
        %v1690 = vadd.f32 %v1507, %v1681
        %s1691 = scalar_lea.vmem [#allocation11], 2240
        %v1692 = vld [vmem:[%s1691] sm:$0xff]
        %v1693 = vld [vmem:[%s1691 + $0x8] sm:$0xff]
        %v1694 = vld [vmem:[%s1691 + $0x10] sm:$0xff]
        %v1695 = vld [vmem:[%s1691 + $0x18] sm:$0xff]
        %v1696 = vld [vmem:[%s1691 + $0x20] sm:$0xff]
        %v1697 = vld [vmem:[%s1691 + $0x28] sm:$0xff]
        %v1698 = vld [vmem:[%s1691 + $0x30] sm:$0xff]
        %v1699 = vld [vmem:[%s1691 + $0x38] sm:$0xff]
        %v1700 = vmul.f32 %v436, %v1692
        %v1701 = vmul.f32 %v436, %v1693
        %v1702 = vmul.f32 %v436, %v1694
        %v1703 = vmul.f32 %v436, %v1695
        %v1704 = vmul.f32 %v436, %v1696
        %v1705 = vmul.f32 %v436, %v1697
        %v1706 = vmul.f32 %v436, %v1698
        %v1707 = vmul.f32 %v436, %v1699
        %s1708 = scalar_lea.vmem [#allocation11], 2304
        %v1709 = vld [vmem:[%s1708] sm:$0xff]
        %v1710 = vld [vmem:[%s1708 + $0x8] sm:$0xff]
        %v1711 = vld [vmem:[%s1708 + $0x10] sm:$0xff]
        %v1712 = vld [vmem:[%s1708 + $0x18] sm:$0xff]
        %v1713 = vld [vmem:[%s1708 + $0x20] sm:$0xff]
        %v1714 = vld [vmem:[%s1708 + $0x28] sm:$0xff]
        %v1715 = vld [vmem:[%s1708 + $0x30] sm:$0xff]
        %v1716 = vld [vmem:[%s1708 + $0x38] sm:$0xff]
        %v1717 = vmul.f32 %v454, %v1709
        %v1718 = vmul.f32 %v454, %v1710
        %v1719 = vmul.f32 %v454, %v1711
        %v1720 = vmul.f32 %v454, %v1712
        %v1721 = vmul.f32 %v454, %v1713
        %v1722 = vmul.f32 %v454, %v1714
        %v1723 = vmul.f32 %v454, %v1715
        %v1724 = vmul.f32 %v454, %v1716
        %v1725 = vadd.f32 %v1700, %v1717
        %v1726 = vadd.f32 %v1701, %v1718
        %v1727 = vadd.f32 %v1702, %v1719
        %v1728 = vadd.f32 %v1703, %v1720
        %v1729 = vadd.f32 %v1704, %v1721
        %v1730 = vadd.f32 %v1705, %v1722
        %v1731 = vadd.f32 %v1706, %v1723
        %v1732 = vadd.f32 %v1707, %v1724
        %s1733 = scalar_lea.vmem [#allocation11], 2368
        %v1734 = vld [vmem:[%s1733] sm:$0xff]
        %v1735 = vld [vmem:[%s1733 + $0x8] sm:$0xff]
        %v1736 = vld [vmem:[%s1733 + $0x10] sm:$0xff]
        %v1737 = vld [vmem:[%s1733 + $0x18] sm:$0xff]
        %v1738 = vld [vmem:[%s1733 + $0x20] sm:$0xff]
        %v1739 = vld [vmem:[%s1733 + $0x28] sm:$0xff]
        %v1740 = vld [vmem:[%s1733 + $0x30] sm:$0xff]
        %v1741 = vld [vmem:[%s1733 + $0x38] sm:$0xff]
        %v1742 = vmul.f32 %v480, %v1734
        %v1743 = vmul.f32 %v480, %v1735
        %v1744 = vmul.f32 %v480, %v1736
        %v1745 = vmul.f32 %v480, %v1737
        %v1746 = vmul.f32 %v480, %v1738
        %v1747 = vmul.f32 %v480, %v1739
        %v1748 = vmul.f32 %v480, %v1740
        %v1749 = vmul.f32 %v480, %v1741
        %v1750 = vadd.f32 %v1725, %v1742
        %v1751 = vadd.f32 %v1726, %v1743
        %v1752 = vadd.f32 %v1727, %v1744
        %v1753 = vadd.f32 %v1728, %v1745
        %v1754 = vadd.f32 %v1729, %v1746
        %v1755 = vadd.f32 %v1730, %v1747
        %v1756 = vadd.f32 %v1731, %v1748
        %v1757 = vadd.f32 %v1732, %v1749
        %s1758 = scalar_lea.vmem [#allocation11], 2432
        %v1759 = vld [vmem:[%s1758] sm:$0xff]
        %v1760 = vld [vmem:[%s1758 + $0x8] sm:$0xff]
        %v1761 = vld [vmem:[%s1758 + $0x10] sm:$0xff]
        %v1762 = vld [vmem:[%s1758 + $0x18] sm:$0xff]
        %v1763 = vld [vmem:[%s1758 + $0x20] sm:$0xff]
        %v1764 = vld [vmem:[%s1758 + $0x28] sm:$0xff]
        %v1765 = vld [vmem:[%s1758 + $0x30] sm:$0xff]
        %v1766 = vld [vmem:[%s1758 + $0x38] sm:$0xff]
        %v1767 = vmul.f32 %v506, %v1759
        %v1768 = vmul.f32 %v506, %v1760
        %v1769 = vmul.f32 %v506, %v1761
        %v1770 = vmul.f32 %v506, %v1762
        %v1771 = vmul.f32 %v506, %v1763
        %v1772 = vmul.f32 %v506, %v1764
        %v1773 = vmul.f32 %v506, %v1765
        %v1774 = vmul.f32 %v506, %v1766
        %v1775 = vadd.f32 %v1750, %v1767
        %v1776 = vadd.f32 %v1751, %v1768
        %v1777 = vadd.f32 %v1752, %v1769
        %v1778 = vadd.f32 %v1753, %v1770
        %v1779 = vadd.f32 %v1754, %v1771
        %v1780 = vadd.f32 %v1755, %v1772
        %v1781 = vadd.f32 %v1756, %v1773
        %v1782 = vadd.f32 %v1757, %v1774
        %s1783 = scalar_lea.vmem [#allocation11], 2496
        %v1784 = vld [vmem:[%s1783] sm:$0xff]
        %v1785 = vld [vmem:[%s1783 + $0x8] sm:$0xff]
        %v1786 = vld [vmem:[%s1783 + $0x10] sm:$0xff]
        %v1787 = vld [vmem:[%s1783 + $0x18] sm:$0xff]
        %v1788 = vld [vmem:[%s1783 + $0x20] sm:$0xff]
        %v1789 = vld [vmem:[%s1783 + $0x28] sm:$0xff]
        %v1790 = vld [vmem:[%s1783 + $0x30] sm:$0xff]
        %v1791 = vld [vmem:[%s1783 + $0x38] sm:$0xff]
        %v1792 = vmul.f32 %v532, %v1784
        %v1793 = vmul.f32 %v532, %v1785
        %v1794 = vmul.f32 %v532, %v1786
        %v1795 = vmul.f32 %v532, %v1787
        %v1796 = vmul.f32 %v532, %v1788
        %v1797 = vmul.f32 %v532, %v1789
        %v1798 = vmul.f32 %v532, %v1790
        %v1799 = vmul.f32 %v532, %v1791
        %v1800 = vadd.f32 %v1775, %v1792
        %v1801 = vadd.f32 %v1776, %v1793
        %v1802 = vadd.f32 %v1777, %v1794
        %v1803 = vadd.f32 %v1778, %v1795
        %v1804 = vadd.f32 %v1779, %v1796
        %v1805 = vadd.f32 %v1780, %v1797
        %v1806 = vadd.f32 %v1781, %v1798
        %v1807 = vadd.f32 %v1782, %v1799
        %v1808 = vld [vmem:[%s1625 + $0x1] sm:$0xff]
        %v1809 = vld [vmem:[%s1625 + $0x11] sm:$0xff]
        %v1810 = vld [vmem:[%s1625 + $0x21] sm:$0xff]
        %v1811 = vld [vmem:[%s1625 + $0x31] sm:$0xff]
        %v1812 = vld [vmem:[%s1625 + $0x41] sm:$0xff]
        %v1813 = vld [vmem:[%s1625 + $0x51] sm:$0xff]
        %v1814 = vld [vmem:[%s1625 + $0x61] sm:$0xff]
        %v1815 = vld [vmem:[%s1625 + $0x71] sm:$0xff]
        %v1816 = vpack.c.bf16 %v1809, %v1808
        %v1817 = vpack.c.bf16 %v1811, %v1810
        %v1818 = vpack.c.bf16 %v1813, %v1812
        %v1819 = vpack.c.bf16 %v1815, %v1814
        %v1820 = vpack.c.bf16 %v1801, %v1800
        %v1821 = vpack.c.bf16 %v1803, %v1802
        %v1822 = vpack.c.bf16 %v1805, %v1804
        %v1823 = vpack.c.bf16 %v1807, %v1806
        %v1825 = vsel %vm397, %v1816, 0
        %v1828 = vsel %vm397, %v1817, 0
        %v1831 = vsel %vm397, %v1818, 0
        %v1834 = vsel %vm397, %v1819, 0
        %1836 = vmatpush.bf16.msra.mxu0 0
        %1837 = vmatpush.bf16.msra.mxu0 0
        %1838 = vmatpush.bf16.msra.mxu0 0
        %1839 = vmatpush.bf16.msra.mxu0 0
        %1840 = vmatpush.bf16.msra.mxu0 %v1823
        %1841 = vmatpush.bf16.msra.mxu0 %v1822
        %1842 = vmatpush.bf16.msra.mxu0 %v1821
        %1843 = vmatpush.bf16.msra.mxu0 %v1820
        %1844 = vmatmul.bf16.gmra.mxu0 %v1825
        %v1845 = vpop.f32.mrf.mxu0
        %v1846 = vadd.f32 0.0, %v1845
        %v1847 = vpop.f32.mrf.mxu0
        %v1848 = vadd.f32 0.0, %v1847
        %1849 = vmatmul.bf16.gmra.mxu0 %v1828
        %v1850 = vpop.f32.mrf.mxu0
        %v1851 = vadd.f32 0.0, %v1850
        %v1852 = vpop.f32.mrf.mxu0
        %v1853 = vadd.f32 0.0, %v1852
        %1854 = vmatmul.bf16.gmra.mxu0 %v1831
        %v1855 = vpop.f32.mrf.mxu0
        %v1856 = vadd.f32 0.0, %v1855
        %v1857 = vpop.f32.mrf.mxu0
        %v1858 = vadd.f32 0.0, %v1857
        %1859 = vmatmul.bf16.gmra.mxu0 %v1834
        %v1860 = vpop.f32.mrf.mxu0
        %v1861 = vadd.f32 0.0, %v1860
        %v1862 = vpop.f32.mrf.mxu0
        %v1863 = vadd.f32 0.0, %v1862
        %1864 = vdwg.mxu0
        %v1865 = vadd.f32 %v1683, %v1846
        %v1866 = vadd.f32 %v1684, %v1848
        %v1867 = vadd.f32 %v1685, %v1851
        %v1868 = vadd.f32 %v1686, %v1853
        %v1869 = vadd.f32 %v1687, %v1856
        %v1870 = vadd.f32 %v1688, %v1858
        %v1871 = vadd.f32 %v1689, %v1861
        %v1872 = vadd.f32 %v1690, %v1863
        %s1873 = scalar_lea.vmem [#allocation11], 2560
        %v1874 = vld [vmem:[%s1873] sm:$0xff]
        %v1875 = vld [vmem:[%s1873 + $0x8] sm:$0xff]
        %v1876 = vld [vmem:[%s1873 + $0x10] sm:$0xff]
        %v1877 = vld [vmem:[%s1873 + $0x18] sm:$0xff]
        %v1878 = vld [vmem:[%s1873 + $0x20] sm:$0xff]
        %v1879 = vld [vmem:[%s1873 + $0x28] sm:$0xff]
        %v1880 = vld [vmem:[%s1873 + $0x30] sm:$0xff]
        %v1881 = vld [vmem:[%s1873 + $0x38] sm:$0xff]
        %v1882 = vmul.f32 %v436, %v1874
        %v1883 = vmul.f32 %v436, %v1875
        %v1884 = vmul.f32 %v436, %v1876
        %v1885 = vmul.f32 %v436, %v1877
        %v1886 = vmul.f32 %v436, %v1878
        %v1887 = vmul.f32 %v436, %v1879
        %v1888 = vmul.f32 %v436, %v1880
        %v1889 = vmul.f32 %v436, %v1881
        %s1890 = scalar_lea.vmem [#allocation11], 2624
        %v1891 = vld [vmem:[%s1890] sm:$0xff]
        %v1892 = vld [vmem:[%s1890 + $0x8] sm:$0xff]
        %v1893 = vld [vmem:[%s1890 + $0x10] sm:$0xff]
        %v1894 = vld [vmem:[%s1890 + $0x18] sm:$0xff]
        %v1895 = vld [vmem:[%s1890 + $0x20] sm:$0xff]
        %v1896 = vld [vmem:[%s1890 + $0x28] sm:$0xff]
        %v1897 = vld [vmem:[%s1890 + $0x30] sm:$0xff]
        %v1898 = vld [vmem:[%s1890 + $0x38] sm:$0xff]
        %v1899 = vmul.f32 %v454, %v1891
        %v1900 = vmul.f32 %v454, %v1892
        %v1901 = vmul.f32 %v454, %v1893
        %v1902 = vmul.f32 %v454, %v1894
        %v1903 = vmul.f32 %v454, %v1895
        %v1904 = vmul.f32 %v454, %v1896
        %v1905 = vmul.f32 %v454, %v1897
        %v1906 = vmul.f32 %v454, %v1898
        %v1907 = vadd.f32 %v1882, %v1899
        %v1908 = vadd.f32 %v1883, %v1900
        %v1909 = vadd.f32 %v1884, %v1901
        %v1910 = vadd.f32 %v1885, %v1902
        %v1911 = vadd.f32 %v1886, %v1903
        %v1912 = vadd.f32 %v1887, %v1904
        %v1913 = vadd.f32 %v1888, %v1905
        %v1914 = vadd.f32 %v1889, %v1906
        %s1915 = scalar_lea.vmem [#allocation11], 2688
        %v1916 = vld [vmem:[%s1915] sm:$0xff]
        %v1917 = vld [vmem:[%s1915 + $0x8] sm:$0xff]
        %v1918 = vld [vmem:[%s1915 + $0x10] sm:$0xff]
        %v1919 = vld [vmem:[%s1915 + $0x18] sm:$0xff]
        %v1920 = vld [vmem:[%s1915 + $0x20] sm:$0xff]
        %v1921 = vld [vmem:[%s1915 + $0x28] sm:$0xff]
        %v1922 = vld [vmem:[%s1915 + $0x30] sm:$0xff]
        %v1923 = vld [vmem:[%s1915 + $0x38] sm:$0xff]
        %v1924 = vmul.f32 %v480, %v1916
        %v1925 = vmul.f32 %v480, %v1917
        %v1926 = vmul.f32 %v480, %v1918
        %v1927 = vmul.f32 %v480, %v1919
        %v1928 = vmul.f32 %v480, %v1920
        %v1929 = vmul.f32 %v480, %v1921
        %v1930 = vmul.f32 %v480, %v1922
        %v1931 = vmul.f32 %v480, %v1923
        %v1932 = vadd.f32 %v1907, %v1924
        %v1933 = vadd.f32 %v1908, %v1925
        %v1934 = vadd.f32 %v1909, %v1926
        %v1935 = vadd.f32 %v1910, %v1927
        %v1936 = vadd.f32 %v1911, %v1928
        %v1937 = vadd.f32 %v1912, %v1929
        %v1938 = vadd.f32 %v1913, %v1930
        %v1939 = vadd.f32 %v1914, %v1931
        %s1940 = scalar_lea.vmem [#allocation11], 2752
        %v1941 = vld [vmem:[%s1940] sm:$0xff]
        %v1942 = vld [vmem:[%s1940 + $0x8] sm:$0xff]
        %v1943 = vld [vmem:[%s1940 + $0x10] sm:$0xff]
        %v1944 = vld [vmem:[%s1940 + $0x18] sm:$0xff]
        %v1945 = vld [vmem:[%s1940 + $0x20] sm:$0xff]
        %v1946 = vld [vmem:[%s1940 + $0x28] sm:$0xff]
        %v1947 = vld [vmem:[%s1940 + $0x30] sm:$0xff]
        %v1948 = vld [vmem:[%s1940 + $0x38] sm:$0xff]
        %v1949 = vmul.f32 %v506, %v1941
        %v1950 = vmul.f32 %v506, %v1942
        %v1951 = vmul.f32 %v506, %v1943
        %v1952 = vmul.f32 %v506, %v1944
        %v1953 = vmul.f32 %v506, %v1945
        %v1954 = vmul.f32 %v506, %v1946
        %v1955 = vmul.f32 %v506, %v1947
        %v1956 = vmul.f32 %v506, %v1948
        %v1957 = vadd.f32 %v1932, %v1949
        %v1958 = vadd.f32 %v1933, %v1950
        %v1959 = vadd.f32 %v1934, %v1951
        %v1960 = vadd.f32 %v1935, %v1952
        %v1961 = vadd.f32 %v1936, %v1953
        %v1962 = vadd.f32 %v1937, %v1954
        %v1963 = vadd.f32 %v1938, %v1955
        %v1964 = vadd.f32 %v1939, %v1956
        %s1965 = scalar_lea.vmem [#allocation11], 2816
        %v1966 = vld [vmem:[%s1965] sm:$0xff]
        %v1967 = vld [vmem:[%s1965 + $0x8] sm:$0xff]
        %v1968 = vld [vmem:[%s1965 + $0x10] sm:$0xff]
        %v1969 = vld [vmem:[%s1965 + $0x18] sm:$0xff]
        %v1970 = vld [vmem:[%s1965 + $0x20] sm:$0xff]
        %v1971 = vld [vmem:[%s1965 + $0x28] sm:$0xff]
        %v1972 = vld [vmem:[%s1965 + $0x30] sm:$0xff]
        %v1973 = vld [vmem:[%s1965 + $0x38] sm:$0xff]
        %v1974 = vmul.f32 %v532, %v1966
        %v1975 = vmul.f32 %v532, %v1967
        %v1976 = vmul.f32 %v532, %v1968
        %v1977 = vmul.f32 %v532, %v1969
        %v1978 = vmul.f32 %v532, %v1970
        %v1979 = vmul.f32 %v532, %v1971
        %v1980 = vmul.f32 %v532, %v1972
        %v1981 = vmul.f32 %v532, %v1973
        %v1982 = vadd.f32 %v1957, %v1974
        %v1983 = vadd.f32 %v1958, %v1975
        %v1984 = vadd.f32 %v1959, %v1976
        %v1985 = vadd.f32 %v1960, %v1977
        %v1986 = vadd.f32 %v1961, %v1978
        %v1987 = vadd.f32 %v1962, %v1979
        %v1988 = vadd.f32 %v1963, %v1980
        %v1989 = vadd.f32 %v1964, %v1981
        %v1990 = vld [vmem:[%s1625 + $0x2] sm:$0xff]
        %v1991 = vld [vmem:[%s1625 + $0x12] sm:$0xff]
        %v1992 = vld [vmem:[%s1625 + $0x22] sm:$0xff]
        %v1993 = vld [vmem:[%s1625 + $0x32] sm:$0xff]
        %v1994 = vld [vmem:[%s1625 + $0x42] sm:$0xff]
        %v1995 = vld [vmem:[%s1625 + $0x52] sm:$0xff]
        %v1996 = vld [vmem:[%s1625 + $0x62] sm:$0xff]
        %v1997 = vld [vmem:[%s1625 + $0x72] sm:$0xff]
        %v1998 = vpack.c.bf16 %v1991, %v1990
        %v1999 = vpack.c.bf16 %v1993, %v1992
        %v2000 = vpack.c.bf16 %v1995, %v1994
        %v2001 = vpack.c.bf16 %v1997, %v1996
        %v2002 = vpack.c.bf16 %v1983, %v1982
        %v2003 = vpack.c.bf16 %v1985, %v1984
        %v2004 = vpack.c.bf16 %v1987, %v1986
        %v2005 = vpack.c.bf16 %v1989, %v1988
        %v2007 = vsel %vm397, %v1998, 0
        %v2010 = vsel %vm397, %v1999, 0
        %v2013 = vsel %vm397, %v2000, 0
        %v2016 = vsel %vm397, %v2001, 0
        %2018 = vmatpush.bf16.msra.mxu0 0
        %2019 = vmatpush.bf16.msra.mxu0 0
        %2020 = vmatpush.bf16.msra.mxu0 0
        %2021 = vmatpush.bf16.msra.mxu0 0
        %2022 = vmatpush.bf16.msra.mxu0 %v2005
        %2023 = vmatpush.bf16.msra.mxu0 %v2004
        %2024 = vmatpush.bf16.msra.mxu0 %v2003
        %2025 = vmatpush.bf16.msra.mxu0 %v2002
        %2026 = vmatmul.bf16.gmra.mxu0 %v2007
        %v2027 = vpop.f32.mrf.mxu0
        %v2028 = vadd.f32 0.0, %v2027
        %v2029 = vpop.f32.mrf.mxu0
        %v2030 = vadd.f32 0.0, %v2029
        %2031 = vmatmul.bf16.gmra.mxu0 %v2010
        %v2032 = vpop.f32.mrf.mxu0
        %v2033 = vadd.f32 0.0, %v2032
        %v2034 = vpop.f32.mrf.mxu0
        %v2035 = vadd.f32 0.0, %v2034
        %2036 = vmatmul.bf16.gmra.mxu0 %v2013
        %v2037 = vpop.f32.mrf.mxu0
        %v2038 = vadd.f32 0.0, %v2037
        %v2039 = vpop.f32.mrf.mxu0
        %v2040 = vadd.f32 0.0, %v2039
        %2041 = vmatmul.bf16.gmra.mxu0 %v2016
        %v2042 = vpop.f32.mrf.mxu0
        %v2043 = vadd.f32 0.0, %v2042
        %v2044 = vpop.f32.mrf.mxu0
        %v2045 = vadd.f32 0.0, %v2044
        %2046 = vdwg.mxu0
        %v2047 = vadd.f32 %v1865, %v2028
        %v2048 = vadd.f32 %v1866, %v2030
        %v2049 = vadd.f32 %v1867, %v2033
        %v2050 = vadd.f32 %v1868, %v2035
        %v2051 = vadd.f32 %v1869, %v2038
        %v2052 = vadd.f32 %v1870, %v2040
        %v2053 = vadd.f32 %v1871, %v2043
        %v2054 = vadd.f32 %v1872, %v2045
        %2055 = vst [vmem:[#allocation3] sm:$0xff] 0.0
        %2056 = vst [vmem:[#allocation3 + $0x8] sm:$0x3] 0.0
        %2057 = vst [vmem:[#allocation3 + $0x10] sm:$0xff] 0.0
        %2058 = vst [vmem:[#allocation3 + $0x18] sm:$0x3] 0.0
        %2059 = vst [vmem:[#allocation3 + $0x20] sm:$0xff] 0.0
        %2060 = vst [vmem:[#allocation3 + $0x28] sm:$0x3] 0.0
        %2061 = vst [vmem:[#allocation3 + $0x30] sm:$0xff] 0.0
        %2062 = vst [vmem:[#allocation3 + $0x38] sm:$0x3] 0.0
        %2063 = vst [vmem:[#allocation3 + $0x40] sm:$0xff] 0.0
        %2064 = vst [vmem:[#allocation3 + $0x48] sm:$0x3] 0.0
        %2065 = vst [vmem:[#allocation3 + $0x50] sm:$0xff] 0.0
        %2066 = vst [vmem:[#allocation3 + $0x58] sm:$0x3] 0.0
        %2067 = vst [vmem:[#allocation3 + $0x60] sm:$0xff] 0.0
        %2068 = vst [vmem:[#allocation3 + $0x68] sm:$0x3] 0.0
        %2069 = vst [vmem:[#allocation3 + $0x70] sm:$0xff] 0.0
        %2070 = vst [vmem:[#allocation3 + $0x78] sm:$0x3] 0.0
        %2071 = vst [vmem:[#allocation3 + $0x80] sm:$0xff] 0.0
        %2072 = vst [vmem:[#allocation3 + $0x88] sm:$0x3] 0.0
        %2073 = vst [vmem:[#allocation3 + $0x90] sm:$0xff] 0.0
        %2074 = vst [vmem:[#allocation3 + $0x98] sm:$0x3] 0.0
        %s2075 = scalar_lea.vmem [#allocation3], 16
        %2076 = vst [vmem:[%s2075 + $0x1] sm:$0xff] %v2047
        %2077 = vst [vmem:[%s2075 + $0x11] sm:$0xff] %v2048
        %2078 = vst [vmem:[%s2075 + $0x21] sm:$0xff] %v2049
        %2079 = vst [vmem:[%s2075 + $0x31] sm:$0xff] %v2050
        %2080 = vst [vmem:[%s2075 + $0x41] sm:$0xff] %v2051
        %2081 = vst [vmem:[%s2075 + $0x51] sm:$0xff] %v2052
        %2082 = vst [vmem:[%s2075 + $0x61] sm:$0xff] %v2053
        %2083 = vst [vmem:[%s2075 + $0x71] sm:$0xff] %v2054
        %v2084 = vld [vmem:[#allocation3] sm:$0xff]
        %v2085 = vld [vmem:[#allocation3 + $0x10] sm:$0xff]
        %v2086 = vld [vmem:[#allocation3 + $0x20] sm:$0xff]
        %v2087 = vld [vmem:[#allocation3 + $0x30] sm:$0xff]
        %v2088 = vld [vmem:[#allocation3 + $0x40] sm:$0xff]
        %v2089 = vld [vmem:[#allocation3 + $0x50] sm:$0xff]
        %v2090 = vld [vmem:[#allocation3 + $0x60] sm:$0xff]
        %v2091 = vld [vmem:[#allocation3 + $0x70] sm:$0xff]
        %v2092 = vld [vmem:[#allocation13] sm:$0x1]
        %v2094 = vperm.slane %v2092, 0
        %v2096 = vmul.f32 %v2084, %v2094
        %v2097 = vmul.f32 %v2085, %v2094
        %v2098 = vmul.f32 %v2086, %v2094
        %v2099 = vmul.f32 %v2087, %v2094
        %v2100 = vmul.f32 %v2088, %v2094
        %v2101 = vmul.f32 %v2089, %v2094
        %v2102 = vmul.f32 %v2090, %v2094
        %v2103 = vmul.f32 %v2091, %v2094
        %2104 = vadd.xlane.f32.xlu0 %v2096
        %v2105 = vpop.xlane.xlu0 %2104
        %2106 = vadd.xlane.f32.xlu0 %v2097
        %v2107 = vpop.xlane.xlu0 %2106
        %2108 = vadd.xlane.f32.xlu0 %v2098
        %v2109 = vpop.xlane.xlu0 %2108
        %2110 = vadd.xlane.f32.xlu0 %v2099
        %v2111 = vpop.xlane.xlu0 %2110
        %2112 = vadd.xlane.f32.xlu0 %v2100
        %v2113 = vpop.xlane.xlu0 %2112
        %2114 = vadd.xlane.f32.xlu0 %v2101
        %v2115 = vpop.xlane.xlu0 %2114
        %2116 = vadd.xlane.f32.xlu0 %v2102
        %v2117 = vpop.xlane.xlu0 %2116
        %2118 = vadd.xlane.f32.xlu0 %v2103
        %v2119 = vpop.xlane.xlu0 %2118
        %v2120 = vadd.f32 %v2105, 0.0
        %v2121 = vadd.f32 %v2107, 0.0
        %v2122 = vadd.f32 %v2109, 0.0
        %v2123 = vadd.f32 %v2111, 0.0
        %v2124 = vadd.f32 %v2113, 0.0
        %v2125 = vadd.f32 %v2115, 0.0
        %v2126 = vadd.f32 %v2117, 0.0
        %v2127 = vadd.f32 %v2119, 0.0
        %v2128 = vld [vmem:[#allocation3 + $0x1] sm:$0xff]
        %v2129 = vld [vmem:[#allocation3 + $0x11] sm:$0xff]
        %v2130 = vld [vmem:[#allocation3 + $0x21] sm:$0xff]
        %v2131 = vld [vmem:[#allocation3 + $0x31] sm:$0xff]
        %v2132 = vld [vmem:[#allocation3 + $0x41] sm:$0xff]
        %v2133 = vld [vmem:[#allocation3 + $0x51] sm:$0xff]
        %v2134 = vld [vmem:[#allocation3 + $0x61] sm:$0xff]
        %v2135 = vld [vmem:[#allocation3 + $0x71] sm:$0xff]
        %s2136 = scalar_lea.vmem [#allocation13], 1
        %v2137 = vld [vmem:[%s2136] sm:$0x1]
        %v2139 = vperm.slane %v2137, 0
        %v2141 = vmul.f32 %v2128, %v2139
        %v2142 = vmul.f32 %v2129, %v2139
        %v2143 = vmul.f32 %v2130, %v2139
        %v2144 = vmul.f32 %v2131, %v2139
        %v2145 = vmul.f32 %v2132, %v2139
        %v2146 = vmul.f32 %v2133, %v2139
        %v2147 = vmul.f32 %v2134, %v2139
        %v2148 = vmul.f32 %v2135, %v2139
        %2149 = vadd.xlane.f32.xlu0 %v2141
        %v2150 = vpop.xlane.xlu0 %2149
        %2151 = vadd.xlane.f32.xlu0 %v2142
        %v2152 = vpop.xlane.xlu0 %2151
        %2153 = vadd.xlane.f32.xlu0 %v2143
        %v2154 = vpop.xlane.xlu0 %2153
        %2155 = vadd.xlane.f32.xlu0 %v2144
        %v2156 = vpop.xlane.xlu0 %2155
        %2157 = vadd.xlane.f32.xlu0 %v2145
        %v2158 = vpop.xlane.xlu0 %2157
        %2159 = vadd.xlane.f32.xlu0 %v2146
        %v2160 = vpop.xlane.xlu0 %2159
        %2161 = vadd.xlane.f32.xlu0 %v2147
        %v2162 = vpop.xlane.xlu0 %2161
        %2163 = vadd.xlane.f32.xlu0 %v2148
        %v2164 = vpop.xlane.xlu0 %2163
        %v2165 = vadd.f32 %v2120, %v2150
        %v2166 = vadd.f32 %v2121, %v2152
        %v2167 = vadd.f32 %v2122, %v2154
        %v2168 = vadd.f32 %v2123, %v2156
        %v2169 = vadd.f32 %v2124, %v2158
        %v2170 = vadd.f32 %v2125, %v2160
        %v2171 = vadd.f32 %v2126, %v2162
        %v2172 = vadd.f32 %v2127, %v2164
        %v2173 = vld [vmem:[#allocation3 + $0x2] sm:$0xff]
        %v2174 = vld [vmem:[#allocation3 + $0x12] sm:$0xff]
        %v2175 = vld [vmem:[#allocation3 + $0x22] sm:$0xff]
        %v2176 = vld [vmem:[#allocation3 + $0x32] sm:$0xff]
        %v2177 = vld [vmem:[#allocation3 + $0x42] sm:$0xff]
        %v2178 = vld [vmem:[#allocation3 + $0x52] sm:$0xff]
        %v2179 = vld [vmem:[#allocation3 + $0x62] sm:$0xff]
        %v2180 = vld [vmem:[#allocation3 + $0x72] sm:$0xff]
        %s2181 = scalar_lea.vmem [#allocation13], 2
        %v2182 = vld [vmem:[%s2181] sm:$0x1]
        %v2184 = vperm.slane %v2182, 0
        %v2186 = vmul.f32 %v2173, %v2184
        %v2187 = vmul.f32 %v2174, %v2184
        %v2188 = vmul.f32 %v2175, %v2184
        %v2189 = vmul.f32 %v2176, %v2184
        %v2190 = vmul.f32 %v2177, %v2184
        %v2191 = vmul.f32 %v2178, %v2184
        %v2192 = vmul.f32 %v2179, %v2184
        %v2193 = vmul.f32 %v2180, %v2184
        %2194 = vadd.xlane.f32.xlu0 %v2186
        %v2195 = vpop.xlane.xlu0 %2194
        %2196 = vadd.xlane.f32.xlu0 %v2187
        %v2197 = vpop.xlane.xlu0 %2196
        %2198 = vadd.xlane.f32.xlu0 %v2188
        %v2199 = vpop.xlane.xlu0 %2198
        %2200 = vadd.xlane.f32.xlu0 %v2189
        %v2201 = vpop.xlane.xlu0 %2200
        %2202 = vadd.xlane.f32.xlu0 %v2190
        %v2203 = vpop.xlane.xlu0 %2202
        %2204 = vadd.xlane.f32.xlu0 %v2191
        %v2205 = vpop.xlane.xlu0 %2204
        %2206 = vadd.xlane.f32.xlu0 %v2192
        %v2207 = vpop.xlane.xlu0 %2206
        %2208 = vadd.xlane.f32.xlu0 %v2193
        %v2209 = vpop.xlane.xlu0 %2208
        %v2210 = vadd.f32 %v2165, %v2195
        %v2211 = vadd.f32 %v2166, %v2197
        %v2212 = vadd.f32 %v2167, %v2199
        %v2213 = vadd.f32 %v2168, %v2201
        %v2214 = vadd.f32 %v2169, %v2203
        %v2215 = vadd.f32 %v2170, %v2205
        %v2216 = vadd.f32 %v2171, %v2207
        %v2217 = vadd.f32 %v2172, %v2209
        %v2218 = vld [vmem:[%s2075] sm:$0xff]
        %v2219 = vld [vmem:[%s2075 + $0x10] sm:$0xff]
        %v2220 = vld [vmem:[%s2075 + $0x20] sm:$0xff]
        %v2221 = vld [vmem:[%s2075 + $0x30] sm:$0xff]
        %v2222 = vld [vmem:[%s2075 + $0x40] sm:$0xff]
        %v2223 = vld [vmem:[%s2075 + $0x50] sm:$0xff]
        %v2224 = vld [vmem:[%s2075 + $0x60] sm:$0xff]
        %v2225 = vld [vmem:[%s2075 + $0x70] sm:$0xff]
        %s2226 = scalar_lea.vmem [#allocation13], 3
        %v2227 = vld [vmem:[%s2226] sm:$0x1]
        %v2229 = vperm.slane %v2227, 0
        %v2231 = vmul.f32 %v2218, %v2229
        %v2232 = vmul.f32 %v2219, %v2229
        %v2233 = vmul.f32 %v2220, %v2229
        %v2234 = vmul.f32 %v2221, %v2229
        %v2235 = vmul.f32 %v2222, %v2229
        %v2236 = vmul.f32 %v2223, %v2229
        %v2237 = vmul.f32 %v2224, %v2229
        %v2238 = vmul.f32 %v2225, %v2229
        %2239 = vadd.xlane.f32.xlu0 %v2231
        %v2240 = vpop.xlane.xlu0 %2239
        %2241 = vadd.xlane.f32.xlu0 %v2232
        %v2242 = vpop.xlane.xlu0 %2241
        %2243 = vadd.xlane.f32.xlu0 %v2233
        %v2244 = vpop.xlane.xlu0 %2243
        %2245 = vadd.xlane.f32.xlu0 %v2234
        %v2246 = vpop.xlane.xlu0 %2245
        %2247 = vadd.xlane.f32.xlu0 %v2235
        %v2248 = vpop.xlane.xlu0 %2247
        %2249 = vadd.xlane.f32.xlu0 %v2236
        %v2250 = vpop.xlane.xlu0 %2249
        %2251 = vadd.xlane.f32.xlu0 %v2237
        %v2252 = vpop.xlane.xlu0 %2251
        %2253 = vadd.xlane.f32.xlu0 %v2238
        %v2254 = vpop.xlane.xlu0 %2253
        %v2255 = vadd.f32 %v2210, %v2240
        %v2256 = vadd.f32 %v2211, %v2242
        %v2257 = vadd.f32 %v2212, %v2244
        %v2258 = vadd.f32 %v2213, %v2246
        %v2259 = vadd.f32 %v2214, %v2248
        %v2260 = vadd.f32 %v2215, %v2250
        %v2261 = vadd.f32 %v2216, %v2252
        %v2262 = vadd.f32 %v2217, %v2254
        %v2263 = vld [vmem:[%s2075 + $0x1] sm:$0xff]
        %v2264 = vld [vmem:[%s2075 + $0x11] sm:$0xff]
        %v2265 = vld [vmem:[%s2075 + $0x21] sm:$0xff]
        %v2266 = vld [vmem:[%s2075 + $0x31] sm:$0xff]
        %v2267 = vld [vmem:[%s2075 + $0x41] sm:$0xff]
        %v2268 = vld [vmem:[%s2075 + $0x51] sm:$0xff]
        %v2269 = vld [vmem:[%s2075 + $0x61] sm:$0xff]
        %v2270 = vld [vmem:[%s2075 + $0x71] sm:$0xff]
        %s2271 = scalar_lea.vmem [#allocation13], 4
        %v2272 = vld [vmem:[%s2271] sm:$0x1]
        %v2274 = vperm.slane %v2272, 0
        %v2276 = vmul.f32 %v2263, %v2274
        %v2277 = vmul.f32 %v2264, %v2274
        %v2278 = vmul.f32 %v2265, %v2274
        %v2279 = vmul.f32 %v2266, %v2274
        %v2280 = vmul.f32 %v2267, %v2274
        %v2281 = vmul.f32 %v2268, %v2274
        %v2282 = vmul.f32 %v2269, %v2274
        %v2283 = vmul.f32 %v2270, %v2274
        %2284 = vadd.xlane.f32.xlu0 %v2276
        %v2285 = vpop.xlane.xlu0 %2284
        %2286 = vadd.xlane.f32.xlu0 %v2277
        %v2287 = vpop.xlane.xlu0 %2286
        %2288 = vadd.xlane.f32.xlu0 %v2278
        %v2289 = vpop.xlane.xlu0 %2288
        %2290 = vadd.xlane.f32.xlu0 %v2279
        %v2291 = vpop.xlane.xlu0 %2290
        %2292 = vadd.xlane.f32.xlu0 %v2280
        %v2293 = vpop.xlane.xlu0 %2292
        %2294 = vadd.xlane.f32.xlu0 %v2281
        %v2295 = vpop.xlane.xlu0 %2294
        %2296 = vadd.xlane.f32.xlu0 %v2282
        %v2297 = vpop.xlane.xlu0 %2296
        %2298 = vadd.xlane.f32.xlu0 %v2283
        %v2299 = vpop.xlane.xlu0 %2298
        %v2300 = vadd.f32 %v2255, %v2285
        %v2301 = vadd.f32 %v2256, %v2287
        %v2302 = vadd.f32 %v2257, %v2289
        %v2303 = vadd.f32 %v2258, %v2291
        %v2304 = vadd.f32 %v2259, %v2293
        %v2305 = vadd.f32 %v2260, %v2295
        %v2306 = vadd.f32 %v2261, %v2297
        %v2307 = vadd.f32 %v2262, %v2299
        %v2308 = vld [vmem:[%s2075 + $0x2] sm:$0xff]
        %v2309 = vld [vmem:[%s2075 + $0x12] sm:$0xff]
        %v2310 = vld [vmem:[%s2075 + $0x22] sm:$0xff]
        %v2311 = vld [vmem:[%s2075 + $0x32] sm:$0xff]
        %v2312 = vld [vmem:[%s2075 + $0x42] sm:$0xff]
        %v2313 = vld [vmem:[%s2075 + $0x52] sm:$0xff]
        %v2314 = vld [vmem:[%s2075 + $0x62] sm:$0xff]
        %v2315 = vld [vmem:[%s2075 + $0x72] sm:$0xff]
        %s2316 = scalar_lea.vmem [#allocation13], 5
        %v2317 = vld [vmem:[%s2316] sm:$0x1]
        %v2319 = vperm.slane %v2317, 0
        %v2321 = vmul.f32 %v2308, %v2319
        %v2322 = vmul.f32 %v2309, %v2319
        %v2323 = vmul.f32 %v2310, %v2319
        %v2324 = vmul.f32 %v2311, %v2319
        %v2325 = vmul.f32 %v2312, %v2319
        %v2326 = vmul.f32 %v2313, %v2319
        %v2327 = vmul.f32 %v2314, %v2319
        %v2328 = vmul.f32 %v2315, %v2319
        %2329 = vadd.xlane.f32.xlu0 %v2321
        %v2330 = vpop.xlane.xlu0 %2329
        %2331 = vadd.xlane.f32.xlu0 %v2322
        %v2332 = vpop.xlane.xlu0 %2331
        %2333 = vadd.xlane.f32.xlu0 %v2323
        %v2334 = vpop.xlane.xlu0 %2333
        %2335 = vadd.xlane.f32.xlu0 %v2324
        %v2336 = vpop.xlane.xlu0 %2335
        %2337 = vadd.xlane.f32.xlu0 %v2325
        %v2338 = vpop.xlane.xlu0 %2337
        %2339 = vadd.xlane.f32.xlu0 %v2326
        %v2340 = vpop.xlane.xlu0 %2339
        %2341 = vadd.xlane.f32.xlu0 %v2327
        %v2342 = vpop.xlane.xlu0 %2341
        %2343 = vadd.xlane.f32.xlu0 %v2328
        %v2344 = vpop.xlane.xlu0 %2343
        %v2345 = vadd.f32 %v2300, %v2330
        %v2346 = vadd.f32 %v2301, %v2332
        %v2347 = vadd.f32 %v2302, %v2334
        %v2348 = vadd.f32 %v2303, %v2336
        %v2349 = vadd.f32 %v2304, %v2338
        %v2350 = vadd.f32 %v2305, %v2340
        %v2351 = vadd.f32 %v2306, %v2342
        %v2352 = vadd.f32 %v2307, %v2344
        %s2353 = scalar_lea.vmem [#allocation3], 32
        %v2354 = vld [vmem:[%s2353] sm:$0xff]
        %v2355 = vld [vmem:[%s2353 + $0x10] sm:$0xff]
        %v2356 = vld [vmem:[%s2353 + $0x20] sm:$0xff]
        %v2357 = vld [vmem:[%s2353 + $0x30] sm:$0xff]
        %v2358 = vld [vmem:[%s2353 + $0x40] sm:$0xff]
        %v2359 = vld [vmem:[%s2353 + $0x50] sm:$0xff]
        %v2360 = vld [vmem:[%s2353 + $0x60] sm:$0xff]
        %v2361 = vld [vmem:[%s2353 + $0x70] sm:$0xff]
        %s2362 = scalar_lea.vmem [#allocation13], 6
        %v2363 = vld [vmem:[%s2362] sm:$0x1]
        %v2365 = vperm.slane %v2363, 0
        %v2367 = vmul.f32 %v2354, %v2365
        %v2368 = vmul.f32 %v2355, %v2365
        %v2369 = vmul.f32 %v2356, %v2365
        %v2370 = vmul.f32 %v2357, %v2365
        %v2371 = vmul.f32 %v2358, %v2365
        %v2372 = vmul.f32 %v2359, %v2365
        %v2373 = vmul.f32 %v2360, %v2365
        %v2374 = vmul.f32 %v2361, %v2365
        %2375 = vadd.xlane.f32.xlu0 %v2367
        %v2376 = vpop.xlane.xlu0 %2375
        %2377 = vadd.xlane.f32.xlu0 %v2368
        %v2378 = vpop.xlane.xlu0 %2377
        %2379 = vadd.xlane.f32.xlu0 %v2369
        %v2380 = vpop.xlane.xlu0 %2379
        %2381 = vadd.xlane.f32.xlu0 %v2370
        %v2382 = vpop.xlane.xlu0 %2381
        %2383 = vadd.xlane.f32.xlu0 %v2371
        %v2384 = vpop.xlane.xlu0 %2383
        %2385 = vadd.xlane.f32.xlu0 %v2372
        %v2386 = vpop.xlane.xlu0 %2385
        %2387 = vadd.xlane.f32.xlu0 %v2373
        %v2388 = vpop.xlane.xlu0 %2387
        %2389 = vadd.xlane.f32.xlu0 %v2374
        %v2390 = vpop.xlane.xlu0 %2389
        %v2391 = vadd.f32 %v2345, %v2376
        %v2392 = vadd.f32 %v2346, %v2378
        %v2393 = vadd.f32 %v2347, %v2380
        %v2394 = vadd.f32 %v2348, %v2382
        %v2395 = vadd.f32 %v2349, %v2384
        %v2396 = vadd.f32 %v2350, %v2386
        %v2397 = vadd.f32 %v2351, %v2388
        %v2398 = vadd.f32 %v2352, %v2390
        %v2399 = vld [vmem:[%s2353 + $0x1] sm:$0xff]
        %v2400 = vld [vmem:[%s2353 + $0x11] sm:$0xff]
        %v2401 = vld [vmem:[%s2353 + $0x21] sm:$0xff]
        %v2402 = vld [vmem:[%s2353 + $0x31] sm:$0xff]
        %v2403 = vld [vmem:[%s2353 + $0x41] sm:$0xff]
        %v2404 = vld [vmem:[%s2353 + $0x51] sm:$0xff]
        %v2405 = vld [vmem:[%s2353 + $0x61] sm:$0xff]
        %v2406 = vld [vmem:[%s2353 + $0x71] sm:$0xff]
        %s2407 = scalar_lea.vmem [#allocation13], 7
        %v2408 = vld [vmem:[%s2407] sm:$0x1]
        %v2410 = vperm.slane %v2408, 0
        %v2412 = vmul.f32 %v2399, %v2410
        %v2413 = vmul.f32 %v2400, %v2410
        %v2414 = vmul.f32 %v2401, %v2410
        %v2415 = vmul.f32 %v2402, %v2410
        %v2416 = vmul.f32 %v2403, %v2410
        %v2417 = vmul.f32 %v2404, %v2410
        %v2418 = vmul.f32 %v2405, %v2410
        %v2419 = vmul.f32 %v2406, %v2410
        %2420 = vadd.xlane.f32.xlu0 %v2412
        %v2421 = vpop.xlane.xlu0 %2420
        %2422 = vadd.xlane.f32.xlu0 %v2413
        %v2423 = vpop.xlane.xlu0 %2422
        %2424 = vadd.xlane.f32.xlu0 %v2414
        %v2425 = vpop.xlane.xlu0 %2424
        %2426 = vadd.xlane.f32.xlu0 %v2415
        %v2427 = vpop.xlane.xlu0 %2426
        %2428 = vadd.xlane.f32.xlu0 %v2416
        %v2429 = vpop.xlane.xlu0 %2428
        %2430 = vadd.xlane.f32.xlu0 %v2417
        %v2431 = vpop.xlane.xlu0 %2430
        %2432 = vadd.xlane.f32.xlu0 %v2418
        %v2433 = vpop.xlane.xlu0 %2432
        %2434 = vadd.xlane.f32.xlu0 %v2419
        %v2435 = vpop.xlane.xlu0 %2434
        %v2436 = vadd.f32 %v2391, %v2421
        %v2437 = vadd.f32 %v2392, %v2423
        %v2438 = vadd.f32 %v2393, %v2425
        %v2439 = vadd.f32 %v2394, %v2427
        %v2440 = vadd.f32 %v2395, %v2429
        %v2441 = vadd.f32 %v2396, %v2431
        %v2442 = vadd.f32 %v2397, %v2433
        %v2443 = vadd.f32 %v2398, %v2435
        %v2444 = vld [vmem:[%s2353 + $0x2] sm:$0xff]
        %v2445 = vld [vmem:[%s2353 + $0x12] sm:$0xff]
        %v2446 = vld [vmem:[%s2353 + $0x22] sm:$0xff]
        %v2447 = vld [vmem:[%s2353 + $0x32] sm:$0xff]
        %v2448 = vld [vmem:[%s2353 + $0x42] sm:$0xff]
        %v2449 = vld [vmem:[%s2353 + $0x52] sm:$0xff]
        %v2450 = vld [vmem:[%s2353 + $0x62] sm:$0xff]
        %v2451 = vld [vmem:[%s2353 + $0x72] sm:$0xff]
        %s2452 = scalar_lea.vmem [#allocation13], 8
        %v2453 = vld [vmem:[%s2452] sm:$0x1]
        %v2455 = vperm.slane %v2453, 0
        %v2457 = vmul.f32 %v2444, %v2455
        %v2458 = vmul.f32 %v2445, %v2455
        %v2459 = vmul.f32 %v2446, %v2455
        %v2460 = vmul.f32 %v2447, %v2455
        %v2461 = vmul.f32 %v2448, %v2455
        %v2462 = vmul.f32 %v2449, %v2455
        %v2463 = vmul.f32 %v2450, %v2455
        %v2464 = vmul.f32 %v2451, %v2455
        %2465 = vadd.xlane.f32.xlu0 %v2457
        %v2466 = vpop.xlane.xlu0 %2465
        %2467 = vadd.xlane.f32.xlu0 %v2458
        %v2468 = vpop.xlane.xlu0 %2467
        %2469 = vadd.xlane.f32.xlu0 %v2459
        %v2470 = vpop.xlane.xlu0 %2469
        %2471 = vadd.xlane.f32.xlu0 %v2460
        %v2472 = vpop.xlane.xlu0 %2471
        %2473 = vadd.xlane.f32.xlu0 %v2461
        %v2474 = vpop.xlane.xlu0 %2473
        %2475 = vadd.xlane.f32.xlu0 %v2462
        %v2476 = vpop.xlane.xlu0 %2475
        %2477 = vadd.xlane.f32.xlu0 %v2463
        %v2478 = vpop.xlane.xlu0 %2477
        %2479 = vadd.xlane.f32.xlu0 %v2464
        %v2480 = vpop.xlane.xlu0 %2479
        %v2481 = vadd.f32 %v2436, %v2466
        %v2482 = vadd.f32 %v2437, %v2468
        %v2483 = vadd.f32 %v2438, %v2470
        %v2484 = vadd.f32 %v2439, %v2472
        %v2485 = vadd.f32 %v2440, %v2474
        %v2486 = vadd.f32 %v2441, %v2476
        %v2487 = vadd.f32 %v2442, %v2478
        %v2488 = vadd.f32 %v2443, %v2480
        %v2489 = vadd.f32 %v389, %v2481
        %v2490 = vadd.f32 %v390, %v2482
        %v2491 = vadd.f32 %v391, %v2483
        %v2492 = vadd.f32 %v392, %v2484
        %v2493 = vadd.f32 %v393, %v2485
        %v2494 = vadd.f32 %v394, %v2486
        %v2495 = vadd.f32 %v395, %v2487
        %v2496 = vadd.f32 %v396, %v2488
        %2497 = vst.msk [vmem:[%s308] sm:$0xff] %vm397, %v2489
        %2498 = vst.msk [vmem:[%s308 + $0x8] sm:$0xff] %vm397, %v2490
        %2499 = vst.msk [vmem:[%s308 + $0x10] sm:$0xff] %vm397, %v2491
        %2500 = vst.msk [vmem:[%s308 + $0x18] sm:$0xff] %vm397, %v2492
        %2501 = vst.msk [vmem:[%s308 + $0x20] sm:$0xff] %vm397, %v2493
        %2502 = vst.msk [vmem:[%s308 + $0x28] sm:$0xff] %vm397, %v2494
        %2503 = vst.msk [vmem:[%s308 + $0x30] sm:$0xff] %vm397, %v2495
        %2504 = vst.msk [vmem:[%s308 + $0x38] sm:$0xff] %vm397, %v2496
        %s2505 = sand.u32 %s143, 1
        %s2506 = scalar_lea.sflag [#allocation6], %s2505
        %s2507 = sand.u32 %s143, 1
        %s2508 = smul.addr %s2507, 64
        %s2509 = scalar_lea.vmem [#allocation14], %s2508
        // Predicated region
        $region61: #{tpu_custom_call.1} parent=39 // pred_check
          %p2510 = pneg %p153
        $region62: #{tpu_custom_call.1} parent=39 // pred_check_branch
          %2512 = sbr.rel (%p2510) target = $region64
        $region63: #{tpu_custom_call.1} parent=39 // pred_region
          %2514 = vsyncadd %s2506, 0
          %s2515 = smul.addr %s25, 8
          %s2516 = smul.addr %s2515, 8
          %s2517 = scalar_lea.hbm %s5, %s2516
          %s2518 = sshll.u32 %s2509, 4
          %s2519 = int_to_ptr.vmem [resolvable:$true] %s2518
          %s2520 = sshll.u32 %s2517, 4
          %s2521 = int_to_ptr.hbm [resolvable:$true] %s2520
          %2526 = dma.vmem_to_hbm [thread:$0]  %s2519, 1024, %s2521, %s2506, 128, 128, 8
        $region64: #{tpu_custom_call.1} parent=39 // pred_fallthru
          _
      $region40: #{tpu_custom_call.1} parent=5 // pred_fallthru
        _
      %p2527 = scmp.le.s32.totalorder 2, %s20
      // Predicated region
      $region65: #{tpu_custom_call.1} parent=5 // pred_check
        %p2528 = pneg %p2527
      $region66: #{tpu_custom_call.1} parent=5 // pred_check_branch
        %2530 = sbr.rel (%p2528) target = $region68
      $region67: #{tpu_custom_call.1} parent=5 // pred_region
        %s2531 = ssub.s32 %s20, 2
        // Predicated region
        $region69: #{tpu_custom_call.1} parent=67 // pred_check
          %p2532 = pneg %p159
        $region70: #{tpu_custom_call.1} parent=67 // pred_check_branch
          %2534 = sbr.rel (%p2532) target = $region72
        $region71: #{tpu_custom_call.1} parent=67 // pred_region
          %s2535 = sand.u32 %s144, 1
          %s2536 = scalar_lea.sflag [#allocation6], %s2535
          %s2537 = sand.u32 %s144, 1
          %s2538 = smul.addr %s2537, 64
          %s2539 = scalar_lea.vmem [#allocation14], %s2538
          %2541 = dma.done %s2536, 1024
        $region72: #{tpu_custom_call.1} parent=67 // pred_fallthru
          _
      $region68: #{tpu_custom_call.1} parent=5 // pred_fallthru
        _
    $region6: #{tpu_custom_call.1} parent=1 // loop_footer
      %s24 = sadd.s32 1, %s20
    $region7: #{tpu_custom_call.1} parent=1 // loop_footer_branch
      %19 = sbr.rel target = $region3
    $region8: #{tpu_custom_call.1} parent=1 // loop_exit
      _
    %2542 = vsyncpa [#allocation5], 1
    %s2543 = scalar_lea.sflag [#allocation5], 1
    %2544 = vsyncpa %s2543, 1
    %2545 = vsyncpa [#allocation12], 1
    %2546 = vsyncpa [#allocation6], 1
    %s2547 = scalar_lea.sflag [#allocation6], 1
    %2548 = vsyncpa %s2547, 1
    %2549 = vsyncpa [#allocation7], 1
    %s2550 = scalar_lea.sflag [#allocation7], 1
    %2551 = vsyncpa %s2550, 1
    %2552 = vsyncpa [#allocation9], 1

</llo_original>
